<compile_context>
chip_gen: v5e
topology: v5e:2x2
jax: 0.10.0
libtpu: 0.0.40
codegen_flags: <defaults>
</compile_context>

<pallas_src>
import math
import numpy as np
import jax
import jax.numpy as jnp
from jax import lax
from jax.experimental import pallas as pl
from jax.experimental.pallas import tpu as pltpu


# ----------------------------------------------------------------------------
# align_corners=True bilinear resize is linear & separable -> interpolation matrices
# ----------------------------------------------------------------------------
def _interp_matrix(out_s, in_s):
    m = np.zeros((out_s, in_s), np.float32)
    if out_s == 1:
        m[0, 0] = 1.0
        return m
    pos = np.arange(out_s, dtype=np.float64) * (in_s - 1) / (out_s - 1)
    lo = np.clip(np.floor(pos).astype(np.int64), 0, in_s - 1)
    hi = np.minimum(lo + 1, in_s - 1)
    frac = (pos - lo).astype(np.float32)
    m[np.arange(out_s), lo] += 1.0 - frac
    m[np.arange(out_s), hi] += frac
    return m


def _shift1d(n, d):
    """1-D zero-padded shift matrix: (S x)[i] = x[i+d] if in bounds else 0."""
    s = np.zeros((n, n), np.float32)
    for i in range(n):
        j = i + d
        if 0 <= j < n:
            s[i, j] = 1.0
    return s


# ----------------------------------------------------------------------------
# Fused Pallas kernel (one batch element per grid step)
# ----------------------------------------------------------------------------
def _make_fused_kernel(H, W, C, hw, Lkv, left, chunk):
    HW = H * W
    n_chunks = HW // chunk
    f32 = jnp.float32

    def kernel(lr_ref,     # (C, hw)        lr_feat, channel-major flattened
               ut_ref,     # (hw, HW)       bilinear-upsample matrix^T
               vk_ref,     # (hw, 10*Lkv)   [value map | 9 key tap maps]
               m_ref,      # (2, HW)        column-wrap masks for kw=0 / kw=2 taps
               cc_ref,     # (C, 22)        [q taps 0:9 | k taps 9:18 | bqc,bkc,bv,bo]
               wp_ref,     # (4C+16, C)     [Wq*s; Wk^T; Wv; Wo; bq*s @4C; bk @4C+8]
               o_ref,      # (C, HW)        result (NCHW-flattened)
               xpad_ref):  # (C, left+HW+left) VMEM scratch, zero lane halo
        lr = lr_ref[...]                                         # (C, hw)

        # ---- zero only the two halo strips; the center is fully overwritten below.
        zero_strip = jnp.zeros((C, left), f32)
        xpad_ref[:, 0:left] = zero_strip
        xpad_ref[:, left + HW:left + HW + left] = zero_strip

        # ---- stage 1: upsample lr -> lr_up straight into the haloed scratch (chunked).
        for ci in range(n_chunks):
            s0 = ci * chunk
            xpad_ref[:, left + s0:left + s0 + chunk] = jnp.dot(
                lr, ut_ref[:, s0:s0 + chunk], preferred_element_type=f32)

        # ---- stage 2: folded value / key paths (one tiny MXU matmul for both).
        vk = jnp.dot(lr, vk_ref[...], preferred_element_type=f32)   # (C, 10*Lkv)
        val_ds = vk[:, 0:Lkv]                                       # (C, Lkv)
        kd = jnp.zeros((C, Lkv), f32)
        for t in range(9):                                          # per-channel tap sum
            kd = kd + vk[:, Lkv * (t + 1):Lkv * (t + 2)] * cc_ref[:, 9 + t:10 + t]
        key_ds = kd + cc_ref[:, 19:20]                              # + k-conv bias (C, Lkv)

        wqs = wp_ref[0:C, :]                        # Wq * (1/sqrt(C))
        wkT = wp_ref[C:2 * C, :]                    # Wk^T
        wv = wp_ref[2 * C:3 * C, :]                 # Wv
        wo = wp_ref[3 * C:4 * C, :]                 # Wo
        bqs = wp_ref[4 * C:4 * C + 1, :]            # (1, C)  bq * scale
        bkr = wp_ref[4 * C + 8:4 * C + 9, :]        # (1, C)  bk
        bqc = cc_ref[:, 18:19]                      # (C, 1)  q-conv bias
        bv = cc_ref[:, 20:21]                       # (C, 1)
        bo = cc_ref[:, 21:22]                       # (C, 1)
        wq9 = cc_ref[:, 0:9]                        # (C, 9)  q-conv taps

        v_cm = jnp.dot(wv, val_ds, preferred_element_type=f32) + bv    # (C, Lkv)
        b_mat = jnp.dot(wo, v_cm, preferred_element_type=f32)          # (C, Lkv) = Wo @ V^T
        k_rm = lax.dot_general(key_ds, wkT, (((0,), (0,)), ((), ())),
                               preferred_element_type=f32) + bkr       # (Lkv, C) = K rows
        a_mat = jnp.dot(k_rm, wqs, preferred_element_type=f32)         # (Lkv, C) = K @ (Wq*s)
        c0 = jnp.sum(k_rm * bqs, axis=1, keepdims=True)                # (Lkv, 1) = K @ (bq*s)

        # ---- stage 3: q depthwise conv + attention + out-proj + residual, per HW chunk.
        for ci in range(n_chunks):
            s0 = ci * chunk
            acc = jnp.zeros((C, chunk), f32)
            for kw in range(3):
                part = jnp.zeros((C, chunk), f32)
                for kh in range(3):
                    tap = kh * 3 + kw
                    off = left + (kh - 1) * W + (kw - 1) + s0
                    part = part + xpad_ref[:, off:off + chunk] * wq9[:, tap:tap + 1]
                if kw == 0:
                    part = part * m_ref[0:1, s0:s0 + chunk]     # kill wrapped x-1 reads
                elif kw == 2:
                    part = part * m_ref[1:2, s0:s0 + chunk]     # kill wrapped x+1 reads
                acc = acc + part
            q_chunk = acc + bqc                                             # (C, chunk)

            s_t = jnp.dot(a_mat, q_chunk, preferred_element_type=f32) + c0  # (Lkv, chunk)
            mmax = jnp.max(s_t, axis=0, keepdims=True)
            e = jnp.exp(s_t - mmax)
            den = jnp.sum(e, axis=0, keepdims=True)
            p = e * (1.0 / den)                                             # (Lkv, chunk)

            out = jnp.dot(b_mat, p, preferred_element_type=f32) + bo        # (C, chunk)
            o_ref[:, s0:s0 + chunk] = xpad_ref[:, left + s0:left + s0 + chunk] + out

    return kernel


# ----------------------------------------------------------------------------
# Pallas wrapper: MyAttentionSelf.forward, NCHW in / NCHW out
# ----------------------------------------------------------------------------
def my_attention_self_forward(hr_feat, lr_feat, params):
    N, C, H, W = hr_feat.shape            # hr_feat contributes only its shape (as in the module)
    _, _, h, w = lr_feat.shape
    Ho, Wo = H // 16, W // 16
    HW, hw, Lkv = H * W, h * w, Ho * Wo
    scale = 1.0 / math.sqrt(C)

    # host-side constants: all resampling maps folded into matrices
    Uy, Ux = _interp_matrix(H, h), _interp_matrix(W, w)            # upsample
    Dy, Dx = _interp_matrix(Ho, H), _interp_matrix(Wo, W)          # downsample
    UT = np.kron(Uy, Ux).T.astype(np.float32)                      # (hw, HW)
    cols = [np.kron(Dy @ Uy, Dx @ Ux).T]                           # value path: (D·U)^T
    for kh in range(3):
        ay = Dy @ _shift1d(H, kh - 1) @ Uy                         # (Ho, h)
        for kw in range(3):
            ax = Dx @ _shift1d(W, kw - 1) @ Ux                     # (Wo, w)
            cols.append(np.kron(ay, ax).T)                         # key path: (D·S_tap·U)^T
    vkM = np.concatenate(cols, axis=1).astype(np.float32)          # (hw, 10*Lkv)
    xcol = np.arange(HW) % W
    masks = np.stack([(xcol != 0), (xcol != W - 1)]).astype(np.float32)   # (2, HW)

    # runtime parameters, packed into two operands (fewer DMA descriptors / buffers)
    ccol = jnp.concatenate(
        [params["q_conv_w"].reshape(C, 9), params["k_conv_w"].reshape(C, 9),
         params["q_conv_b"].reshape(C, 1), params["k_conv_b"].reshape(C, 1),
         params["bv"].reshape(C, 1), params["bo"].reshape(C, 1)],
        axis=1).astype(jnp.float32)                                # (C, 22)
    zrow = jnp.zeros((7, C), jnp.float32)
    wpack = jnp.concatenate(
        [params["Wq"] * scale, params["Wk"].T, params["Wv"], params["Wo"],
         (params["bq"] * scale).reshape(1, C), zrow,
         params["bk"].reshape(1, C), zrow],
        axis=0).astype(jnp.float32)                                # (4C+16, C)

    lr_flat = lr_feat.reshape(N, C, hw)                            # free NCHW view

    left = ((W + 1 + 127) // 128) * 128          # aligned zero halo, >= W+1 each side
    chunk = 256 if HW % 256 == 0 else (128 if HW % 128 == 0 else HW)
    kernel = _make_fused_kernel(H, W, C, hw, Lkv, left, chunk)
    rep = lambda b: (0, 0)                       # constants: same block every grid step

    out = pl.pallas_call(
        kernel,
        out_shape=jax.ShapeDtypeStruct((N, C, HW), jnp.float32),
        grid=(N,),
        in_specs=[
            pl.BlockSpec((None, C, hw), lambda b: (b, 0, 0)),   # lr_feat (channel-major)
            pl.BlockSpec((hw, HW), rep),                        # upsample matrix^T
            pl.BlockSpec((hw, 10 * Lkv), rep),                  # folded value/key maps
            pl.BlockSpec((2, HW), rep),                         # column-wrap masks
            pl.BlockSpec((C, 22), rep),                         # conv taps + small biases
            pl.BlockSpec((4 * C + 16, C), rep),                 # packed projection weights
        ],
        out_specs=pl.BlockSpec((None, C, HW), lambda b: (b, 0, 0)),
        scratch_shapes=[pltpu.VMEM((C, 2 * left + HW), jnp.float32)],
        compiler_params=pltpu.CompilerParams(
            dimension_semantics=("parallel",),
            vmem_limit_bytes=32 * 1024 * 1024),
    )(lr_flat, jnp.asarray(UT), jnp.asarray(vkM), jnp.asarray(masks), ccol, wpack)
    return out.reshape(N, C, H, W)


# ----------------------------------------------------------------------------
# Pure-JAX reference (independent implementation, for validation)
# ----------------------------------------------------------------------------
def bilinear_ac(x, out_h, out_w):
    """F.interpolate(mode='bilinear', align_corners=True) on NHWC tensors."""
    N, H, W, C = x.shape

    def coords(out_s, in_s):
        if out_s == 1:
            return jnp.zeros((1,), jnp.float32)
        return jnp.arange(out_s, dtype=jnp.float32) * ((in_s - 1) / (out_s - 1))

    ys = coords(out_h, H)
    xs = coords(out_w, W)
    y0 = jnp.floor(ys).astype(jnp.int32)
    x0 = jnp.floor(xs).astype(jnp.int32)
    y1 = jnp.clip(y0 + 1, 0, H - 1)
    x1 = jnp.clip(x0 + 1, 0, W - 1)
    fy = (ys - y0.astype(jnp.float32))[:, None, None]
    fx = (xs - x0.astype(jnp.float32))[None, :, None]

    g = lambda yi, xi: x[:, yi][:, :, xi]
    top = g(y0, x0) * (1.0 - fx) + g(y0, x1) * fx
    bot = g(y1, x0) * (1.0 - fx) + g(y1, x1) * fx
    return top * (1.0 - fy) + bot * fy


def forward_ref(hr_feat, lr_feat, params):
    N, C, H, W = hr_feat.shape
    lr = jnp.transpose(lr_feat, (0, 2, 3, 1))
    lr_up = bilinear_ac(lr, H, W)

    def dwconv(x, wc33, b):                       # wc33: (C,3,3), b: (C,)
        rhs = jnp.transpose(wc33, (1, 2, 0))[:, :, None, :]   # (3,3,1,C) HWIO
        y = jax.lax.conv_general_dilated(
            x, rhs, window_strides=(1, 1), padding=((1, 1), (1, 1)),
            dimension_numbers=("NHWC", "HWIO", "NHWC"), feature_group_count=C)
        return y + b

    lr_value = bilinear_ac(lr_up, H // 16, W // 16).reshape(N, -1, C)
    lr_key = bilinear_ac(dwconv(lr_up, params["k_conv_w"], params["k_conv_b"]),
                         H // 16, W // 16).reshape(N, -1, C)
    lr_query = dwconv(lr_up, params["q_conv_w"], params["q_conv_b"]).reshape(N, -1, C)

    scale = 1.0 / math.sqrt(C)
    Q = lr_query @ params["Wq"].T + params["bq"]
    K = lr_key @ params["Wk"].T + params["bk"]
    V = lr_value @ params["Wv"].T + params["bv"]
    scores = jnp.einsum("nqc,nkc->nqk", Q, K) * scale
    p = jax.nn.softmax(scores, axis=-1)
    attn = jnp.einsum("nqk,nkc->nqc", p, V)
    out = attn @ params["Wo"].T + params["bo"]
    res = lr_up + out.reshape(N, H, W, C)
    return jnp.transpose(res, (0, 3, 1, 2))


# ----------------------------------------------------------------------------
if __name__ == "__main__":
    N, C, H, W = 2, 32, 32, 32     # hr_feat
    h, w = 16, 16                  # lr_feat spatial (upsampled to H,W inside)

    key = jax.random.PRNGKey(0)
    ks = jax.random.split(key, 12)
    hr_feat = jax.random.normal(ks[0], (N, C, H, W), jnp.float32)
    lr_feat = jax.random.normal(ks[1], (N, C, h, w), jnp.float32)

    # Deterministic parameters (shapes follow MyAttentionSelf.__init__).
    # Conv weights ~ kaiming_normal_(a=1): std = 1/sqrt(fan_in) = 1/3, bias = 0.
    params = dict(
        q_conv_w=jax.random.normal(ks[2], (C, 3, 3), jnp.float32) * (1.0 / 3.0),
        q_conv_b=jnp.zeros((C,), jnp.float32),
        k_conv_w=jax.random.normal(ks[3], (C, 3, 3), jnp.float32) * (1.0 / 3.0),
        k_conv_b=jnp.zeros((C,), jnp.float32),
        Wq=jax.random.normal(ks[4], (C, C), jnp.float32) / math.sqrt(C),
        Wk=jax.random.normal(ks[5], (C, C), jnp.float32) / math.sqrt(C),
        Wv=jax.random.normal(ks[6], (C, C), jnp.float32) / math.sqrt(C),
        bq=jax.random.normal(ks[7], (C,), jnp.float32) * 0.02,
        bk=jax.random.normal(ks[8], (C,), jnp.float32) * 0.02,
        bv=jax.random.normal(ks[9], (C,), jnp.float32) * 0.02,
        Wo=jax.random.normal(ks[10], (C, C), jnp.float32) / math.sqrt(C),
        bo=jax.random.normal(ks[11], (C,), jnp.float32) * 0.02,
    )

    fwd = jax.jit(my_attention_self_forward)
    out = jax.block_until_ready(fwd(hr_feat, lr_feat, params))
    ref = jax.block_until_ready(forward_ref(hr_feat, lr_feat, params))
    np.testing.assert_allclose(np.asarray(out), np.asarray(ref), atol=2e-2, rtol=2e-2)
    print("KERNEL_OK")
</pallas_src>

<mosaic_0001>
module attributes {stable_mosaic.version = 11 : i64} {
  func.func @kernel(%arg0: i32, %arg1: memref<1x32x256xf32, #tpu.memory_space<vmem>>, %arg2: memref<256x1024xf32, #tpu.memory_space<vmem>>, %arg3: memref<256x40xf32, #tpu.memory_space<vmem>>, %arg4: memref<2x1024xf32, #tpu.memory_space<vmem>>, %arg5: memref<32x22xf32, #tpu.memory_space<vmem>>, %arg6: memref<144x32xf32, #tpu.memory_space<vmem>>, %arg7: memref<1x32x1024xf32, #tpu.memory_space<vmem>>, %arg8: memref<32x1280xf32, #tpu.memory_space<vmem>>) attributes {dimension_semantics = [#tpu.dimension_semantics<parallel>], iteration_bounds = array<i64: 2>, scalar_prefetch = 0 : i64, scratch_operands = 1 : i64, tpu.core_type = #tpu.core_type<tc>, window_params = [{transform_indices = @transform_0, window_bounds = array<i64: 1, 32, 256>}, {pipeline_mode = #tpu.pipeline_mode<synchronous>, transform_indices = @transform_1, window_bounds = array<i64: 256, 1024>}, {pipeline_mode = #tpu.pipeline_mode<synchronous>, transform_indices = @transform_2, window_bounds = array<i64: 256, 40>}, {pipeline_mode = #tpu.pipeline_mode<synchronous>, transform_indices = @transform_3, window_bounds = array<i64: 2, 1024>}, {pipeline_mode = #tpu.pipeline_mode<synchronous>, transform_indices = @transform_4, window_bounds = array<i64: 32, 22>}, {pipeline_mode = #tpu.pipeline_mode<synchronous>, transform_indices = @transform_5, window_bounds = array<i64: 144, 32>}, {transform_indices = @transform_6, window_bounds = array<i64: 1, 32, 1024>}]} {
    %c0 = arith.constant 0 : index
    %c0_0 = arith.constant 0 : index
    %c0_1 = arith.constant 0 : index
    %0 = vector.load %arg1[%c0, %c0_0, %c0_1] : memref<1x32x256xf32, #tpu.memory_space<vmem>>, vector<1x32x256xf32>
    %1 = vector.shape_cast %0 : vector<1x32x256xf32> to vector<32x256xf32>
    %cst = arith.constant 0.000000e+00 : f32
    %2 = vector.broadcast %cst : f32 to vector<32x128xf32>
    %c0_2 = arith.constant 0 : index
    %c0_3 = arith.constant 0 : index
    %3 = vector.load %arg8[%c0_2, %c0_3] : memref<32x1280xf32, #tpu.memory_space<vmem>>, vector<32x128xf32>
    tpu.vector_store %arg8[%c0_2, %c0_3], %2 {strides = array<i32>} : memref<32x1280xf32, #tpu.memory_space<vmem>>, vector<32x128xf32>,
    %c0_4 = arith.constant 0 : index
    %c1152 = arith.constant 1152 : index
    %4 = vector.load %arg8[%c0_4, %c1152] : memref<32x1280xf32, #tpu.memory_space<vmem>>, vector<32x128xf32>
    tpu.vector_store %arg8[%c0_4, %c1152], %2 {strides = array<i32>} : memref<32x1280xf32, #tpu.memory_space<vmem>>, vector<32x128xf32>,
    %c0_5 = arith.constant 0 : index
    %c0_6 = arith.constant 0 : index
    %5 = vector.load %arg2[%c0_5, %c0_6] : memref<256x1024xf32, #tpu.memory_space<vmem>>, vector<256x256xf32>
    %cst_7 = arith.constant dense<0.000000e+00> : vector<32x256xf32>
    %6 = tpu.matmul %1, %5, %cst_7 {dimension_numbers = #tpu.dot_dimension_numbers<[1], [0], [0], [1], [0, 0, 1, 1], [], []>} : vector<32x256xf32>, vector<256x256xf32>, vector<32x256xf32> -> vector<32x256xf32>
    %c0_8 = arith.constant 0 : index
    %c128 = arith.constant 128 : index
    %7 = vector.load %arg8[%c0_8, %c128] : memref<32x1280xf32, #tpu.memory_space<vmem>>, vector<32x256xf32>
    tpu.vector_store %arg8[%c0_8, %c128], %6 {strides = array<i32>} : memref<32x1280xf32, #tpu.memory_space<vmem>>, vector<32x256xf32>,
    %c0_9 = arith.constant 0 : index
    %c256 = arith.constant 256 : index
    %8 = vector.load %arg2[%c0_9, %c256] : memref<256x1024xf32, #tpu.memory_space<vmem>>, vector<256x256xf32>
    %cst_10 = arith.constant dense<0.000000e+00> : vector<32x256xf32>
    %9 = tpu.matmul %1, %8, %cst_10 {dimension_numbers = #tpu.dot_dimension_numbers<[1], [0], [0], [1], [0, 0, 1, 1], [], []>} : vector<32x256xf32>, vector<256x256xf32>, vector<32x256xf32> -> vector<32x256xf32>
    %c0_11 = arith.constant 0 : index
    %c384 = arith.constant 384 : index
    %10 = vector.load %arg8[%c0_11, %c384] : memref<32x1280xf32, #tpu.memory_space<vmem>>, vector<32x256xf32>
    tpu.vector_store %arg8[%c0_11, %c384], %9 {strides = array<i32>} : memref<32x1280xf32, #tpu.memory_space<vmem>>, vector<32x256xf32>,
    %c0_12 = arith.constant 0 : index
    %c512 = arith.constant 512 : index
    %11 = vector.load %arg2[%c0_12, %c512] : memref<256x1024xf32, #tpu.memory_space<vmem>>, vector<256x256xf32>
    %cst_13 = arith.constant dense<0.000000e+00> : vector<32x256xf32>
    %12 = tpu.matmul %1, %11, %cst_13 {dimension_numbers = #tpu.dot_dimension_numbers<[1], [0], [0], [1], [0, 0, 1, 1], [], []>} : vector<32x256xf32>, vector<256x256xf32>, vector<32x256xf32> -> vector<32x256xf32>
    %c0_14 = arith.constant 0 : index
    %c640 = arith.constant 640 : index
    %13 = vector.load %arg8[%c0_14, %c640] : memref<32x1280xf32, #tpu.memory_space<vmem>>, vector<32x256xf32>
    tpu.vector_store %arg8[%c0_14, %c640], %12 {strides = array<i32>} : memref<32x1280xf32, #tpu.memory_space<vmem>>, vector<32x256xf32>,
    %c0_15 = arith.constant 0 : index
    %c768 = arith.constant 768 : index
    %14 = vector.load %arg2[%c0_15, %c768] : memref<256x1024xf32, #tpu.memory_space<vmem>>, vector<256x256xf32>
    %cst_16 = arith.constant dense<0.000000e+00> : vector<32x256xf32>
    %15 = tpu.matmul %1, %14, %cst_16 {dimension_numbers = #tpu.dot_dimension_numbers<[1], [0], [0], [1], [0, 0, 1, 1], [], []>} : vector<32x256xf32>, vector<256x256xf32>, vector<32x256xf32> -> vector<32x256xf32>
    %c0_17 = arith.constant 0 : index
    %c896 = arith.constant 896 : index
    %16 = vector.load %arg8[%c0_17, %c896] : memref<32x1280xf32, #tpu.memory_space<vmem>>, vector<32x256xf32>
    tpu.vector_store %arg8[%c0_17, %c896], %15 {strides = array<i32>} : memref<32x1280xf32, #tpu.memory_space<vmem>>, vector<32x256xf32>,
    %c0_18 = arith.constant 0 : index
    %c0_19 = arith.constant 0 : index
    %17 = vector.load %arg3[%c0_18, %c0_19] : memref<256x40xf32, #tpu.memory_space<vmem>>, vector<256x40xf32>
    %cst_20 = arith.constant dense<0.000000e+00> : vector<32x40xf32>
    %18 = tpu.matmul %1, %17, %cst_20 {dimension_numbers = #tpu.dot_dimension_numbers<[1], [0], [0], [1], [0, 0, 1, 1], [], []>} : vector<32x256xf32>, vector<256x40xf32>, vector<32x40xf32> -> vector<32x40xf32>
    %19 = vector.extract_strided_slice %18 {offsets = [0, 0], sizes = [32, 4], strides = [1, 1]} : vector<32x40xf32> to vector<32x4xf32>
    %cst_21 = arith.constant 0.000000e+00 : f32
    %20 = vector.broadcast %cst_21 : f32 to vector<32x4xf32>
    %21 = vector.extract_strided_slice %18 {offsets = [0, 4], sizes = [32, 4], strides = [1, 1]} : vector<32x40xf32> to vector<32x4xf32>
    %c0_22 = arith.constant 0 : index
    %c9 = arith.constant 9 : index
    %22 = vector.load %arg5[%c0_22, %c9] : memref<32x22xf32, #tpu.memory_space<vmem>>, vector<32x1xf32>
    %23 = vector.broadcast %22 : vector<32x1xf32> to vector<32x4xf32>
    %24 = arith.mulf %21, %23 : vector<32x4xf32>
    %25 = arith.addf %20, %24 : vector<32x4xf32>
    %26 = vector.extract_strided_slice %18 {offsets = [0, 8], sizes = [32, 4], strides = [1, 1]} : vector<32x40xf32> to vector<32x4xf32>
    %c0_23 = arith.constant 0 : index
    %c10 = arith.constant 10 : index
    %27 = vector.load %arg5[%c0_23, %c10] : memref<32x22xf32, #tpu.memory_space<vmem>>, vector<32x1xf32>
    %28 = vector.broadcast %27 : vector<32x1xf32> to vector<32x4xf32>
    %29 = arith.mulf %26, %28 : vector<32x4xf32>
    %30 = arith.addf %25, %29 : vector<32x4xf32>
    %31 = vector.extract_strided_slice %18 {offsets = [0, 12], sizes = [32, 4], strides = [1, 1]} : vector<32x40xf32> to vector<32x4xf32>
    %c0_24 = arith.constant 0 : index
    %c11 = arith.constant 11 : index
    %32 = vector.load %arg5[%c0_24, %c11] : memref<32x22xf32, #tpu.memory_space<vmem>>, vector<32x1xf32>
    %33 = vector.broadcast %32 : vector<32x1xf32> to vector<32x4xf32>
    %34 = arith.mulf %31, %33 : vector<32x4xf32>
    %35 = arith.addf %30, %34 : vector<32x4xf32>
    %36 = vector.extract_strided_slice %18 {offsets = [0, 16], sizes = [32, 4], strides = [1, 1]} : vector<32x40xf32> to vector<32x4xf32>
    %c0_25 = arith.constant 0 : index
    %c12 = arith.constant 12 : index
    %37 = vector.load %arg5[%c0_25, %c12] : memref<32x22xf32, #tpu.memory_space<vmem>>, vector<32x1xf32>
    %38 = vector.broadcast %37 : vector<32x1xf32> to vector<32x4xf32>
    %39 = arith.mulf %36, %38 : vector<32x4xf32>
    %40 = arith.addf %35, %39 : vector<32x4xf32>
    %41 = vector.extract_strided_slice %18 {offsets = [0, 20], sizes = [32, 4], strides = [1, 1]} : vector<32x40xf32> to vector<32x4xf32>
    %c0_26 = arith.constant 0 : index
    %c13 = arith.constant 13 : index
    %42 = vector.load %arg5[%c0_26, %c13] : memref<32x22xf32, #tpu.memory_space<vmem>>, vector<32x1xf32>
    %43 = vector.broadcast %42 : vector<32x1xf32> to vector<32x4xf32>
    %44 = arith.mulf %41, %43 : vector<32x4xf32>
    %45 = arith.addf %40, %44 : vector<32x4xf32>
    %46 = vector.extract_strided_slice %18 {offsets = [0, 24], sizes = [32, 4], strides = [1, 1]} : vector<32x40xf32> to vector<32x4xf32>
    %c0_27 = arith.constant 0 : index
    %c14 = arith.constant 14 : index
    %47 = vector.load %arg5[%c0_27, %c14] : memref<32x22xf32, #tpu.memory_space<vmem>>, vector<32x1xf32>
    %48 = vector.broadcast %47 : vector<32x1xf32> to vector<32x4xf32>
    %49 = arith.mulf %46, %48 : vector<32x4xf32>
    %50 = arith.addf %45, %49 : vector<32x4xf32>
    %51 = vector.extract_strided_slice %18 {offsets = [0, 28], sizes = [32, 4], strides = [1, 1]} : vector<32x40xf32> to vector<32x4xf32>
    %c0_28 = arith.constant 0 : index
    %c15 = arith.constant 15 : index
    %52 = vector.load %arg5[%c0_28, %c15] : memref<32x22xf32, #tpu.memory_space<vmem>>, vector<32x1xf32>
    %53 = vector.broadcast %52 : vector<32x1xf32> to vector<32x4xf32>
    %54 = arith.mulf %51, %53 : vector<32x4xf32>
    %55 = arith.addf %50, %54 : vector<32x4xf32>
    %56 = vector.extract_strided_slice %18 {offsets = [0, 32], sizes = [32, 4], strides = [1, 1]} : vector<32x40xf32> to vector<32x4xf32>
    %c0_29 = arith.constant 0 : index
    %c16 = arith.constant 16 : index
    %57 = vector.load %arg5[%c0_29, %c16] : memref<32x22xf32, #tpu.memory_space<vmem>>, vector<32x1xf32>
    %58 = vector.broadcast %57 : vector<32x1xf32> to vector<32x4xf32>
    %59 = arith.mulf %56, %58 : vector<32x4xf32>
    %60 = arith.addf %55, %59 : vector<32x4xf32>
    %61 = vector.extract_strided_slice %18 {offsets = [0, 36], sizes = [32, 4], strides = [1, 1]} : vector<32x40xf32> to vector<32x4xf32>
    %c0_30 = arith.constant 0 : index
    %c17 = arith.constant 17 : index
    %62 = vector.load %arg5[%c0_30, %c17] : memref<32x22xf32, #tpu.memory_space<vmem>>, vector<32x1xf32>
    %63 = vector.broadcast %62 : vector<32x1xf32> to vector<32x4xf32>
    %64 = arith.mulf %61, %63 : vector<32x4xf32>
    %65 = arith.addf %60, %64 : vector<32x4xf32>
    %c0_31 = arith.constant 0 : index
    %c19 = arith.constant 19 : index
    %66 = vector.load %arg5[%c0_31, %c19] : memref<32x22xf32, #tpu.memory_space<vmem>>, vector<32x1xf32>
    %67 = vector.broadcast %66 : vector<32x1xf32> to vector<32x4xf32>
    %68 = arith.addf %65, %67 : vector<32x4xf32>
    %c0_32 = arith.constant 0 : index
    %c0_33 = arith.constant 0 : index
    %69 = vector.load %arg6[%c0_32, %c0_33] : memref<144x32xf32, #tpu.memory_space<vmem>>, vector<32x32xf32>
    %c32 = arith.constant 32 : index
    %c0_34 = arith.constant 0 : index
    %70 = vector.load %arg6[%c32, %c0_34] : memref<144x32xf32, #tpu.memory_space<vmem>>, vector<32x32xf32>
    %c64 = arith.constant 64 : index
    %c0_35 = arith.constant 0 : index
    %71 = vector.load %arg6[%c64, %c0_35] : memref<144x32xf32, #tpu.memory_space<vmem>>, vector<32x32xf32>
    %c96 = arith.constant 96 : index
    %c0_36 = arith.constant 0 : index
    %72 = vector.load %arg6[%c96, %c0_36] : memref<144x32xf32, #tpu.memory_space<vmem>>, vector<32x32xf32>
    %c128_37 = arith.constant 128 : index
    %c0_38 = arith.constant 0 : index
    %73 = vector.load %arg6[%c128_37, %c0_38] : memref<144x32xf32, #tpu.memory_space<vmem>>, vector<1x32xf32>
    %c136 = arith.constant 136 : index
    %c0_39 = arith.constant 0 : index
    %74 = vector.load %arg6[%c136, %c0_39] : memref<144x32xf32, #tpu.memory_space<vmem>>, vector<1x32xf32>
    %c0_40 = arith.constant 0 : index
    %c18 = arith.constant 18 : index
    %75 = vector.load %arg5[%c0_40, %c18] : memref<32x22xf32, #tpu.memory_space<vmem>>, vector<32x1xf32>
    %c0_41 = arith.constant 0 : index
    %c20 = arith.constant 20 : index
    %76 = vector.load %arg5[%c0_41, %c20] : memref<32x22xf32, #tpu.memory_space<vmem>>, vector<32x1xf32>
    %c0_42 = arith.constant 0 : index
    %c21 = arith.constant 21 : index
    %77 = vector.load %arg5[%c0_42, %c21] : memref<32x22xf32, #tpu.memory_space<vmem>>, vector<32x1xf32>
    %c0_43 = arith.constant 0 : index
    %c0_44 = arith.constant 0 : index
    %78 = vector.load %arg5[%c0_43, %c0_44] : memref<32x22xf32, #tpu.memory_space<vmem>>, vector<32x9xf32>
    %cst_45 = arith.constant dense<0.000000e+00> : vector<32x4xf32>
    %79 = tpu.matmul %71, %19, %cst_45 {dimension_numbers = #tpu.dot_dimension_numbers<[1], [0], [0], [1], [0, 0, 1, 1], [], []>} : vector<32x32xf32>, vector<32x4xf32>, vector<32x4xf32> -> vector<32x4xf32>
    %80 = vector.broadcast %76 : vector<32x1xf32> to vector<32x4xf32>
    %81 = arith.addf %79, %80 : vector<32x4xf32>
    %cst_46 = arith.constant dense<0.000000e+00> : vector<32x4xf32>
    %82 = tpu.matmul %72, %81, %cst_46 {dimension_numbers = #tpu.dot_dimension_numbers<[1], [0], [0], [1], [0, 0, 1, 1], [], []>} : vector<32x32xf32>, vector<32x4xf32>, vector<32x4xf32> -> vector<32x4xf32>
    %cst_47 = arith.constant dense<0.000000e+00> : vector<4x32xf32>
    %83 = tpu.matmul %68, %70, %cst_47 {dimension_numbers = #tpu.dot_dimension_numbers<[0], [0], [1], [1], [0, 1, 1, 1], [], []>} : vector<32x4xf32>, vector<32x32xf32>, vector<4x32xf32> -> vector<4x32xf32>
    %84 = vector.broadcast %74 : vector<1x32xf32> to vector<4x32xf32>
    %85 = arith.addf %83, %84 : vector<4x32xf32>
    %cst_48 = arith.constant dense<0.000000e+00> : vector<4x32xf32>
    %86 = tpu.matmul %85, %69, %cst_48 {dimension_numbers = #tpu.dot_dimension_numbers<[1], [0], [0], [1], [0, 0, 1, 1], [], []>} : vector<4x32xf32>, vector<32x32xf32>, vector<4x32xf32> -> vector<4x32xf32>
    %87 = vector.broadcast %73 : vector<1x32xf32> to vector<4x32xf32>
    %88 = arith.mulf %85, %87 : vector<4x32xf32>
    %cst_49 = arith.constant dense<0.000000e+00> : vector<4xf32>
    %89 = vector.multi_reduction <add>, %88, %cst_49 [1] : vector<4x32xf32> to vector<4xf32>
    %90 = vector.shape_cast %89 : vector<4xf32> to vector<4x1xf32>
    %cst_50 = arith.constant 0.000000e+00 : f32
    %91 = vector.broadcast %cst_50 : f32 to vector<32x256xf32>
    %cst_51 = arith.constant 0.000000e+00 : f32
    %92 = vector.broadcast %cst_51 : f32 to vector<32x256xf32>
    %c0_52 = arith.constant 0 : index
    %c95 = arith.constant 95 : index
    %93 = vector.load %arg8[%c0_52, %c95] : memref<32x1280xf32, #tpu.memory_space<vmem>>, vector<32x256xf32>
    %94 = vector.extract_strided_slice %78 {offsets = [0, 0], sizes = [32, 1], strides = [1, 1]} : vector<32x9xf32> to vector<32x1xf32>
    %95 = vector.broadcast %94 : vector<32x1xf32> to vector<32x256xf32>
    %96 = arith.mulf %93, %95 : vector<32x256xf32>
    %97 = arith.addf %92, %96 : vector<32x256xf32>
    %c0_53 = arith.constant 0 : index
    %c127 = arith.constant 127 : index
    %98 = vector.load %arg8[%c0_53, %c127] : memref<32x1280xf32, #tpu.memory_space<vmem>>, vector<32x256xf32>
    %99 = vector.extract_strided_slice %78 {offsets = [0, 3], sizes = [32, 1], strides = [1, 1]} : vector<32x9xf32> to vector<32x1xf32>
    %100 = vector.broadcast %99 : vector<32x1xf32> to vector<32x256xf32>
    %101 = arith.mulf %98, %100 : vector<32x256xf32>
    %102 = arith.addf %97, %101 : vector<32x256xf32>
    %c0_54 = arith.constant 0 : index
    %c159 = arith.constant 159 : index
    %103 = vector.load %arg8[%c0_54, %c159] : memref<32x1280xf32, #tpu.memory_space<vmem>>, vector<32x256xf32>
    %104 = vector.extract_strided_slice %78 {offsets = [0, 6], sizes = [32, 1], strides = [1, 1]} : vector<32x9xf32> to vector<32x1xf32>
    %105 = vector.broadcast %104 : vector<32x1xf32> to vector<32x256xf32>
    %106 = arith.mulf %103, %105 : vector<32x256xf32>
    %107 = arith.addf %102, %106 : vector<32x256xf32>
    %c0_55 = arith.constant 0 : index
    %c0_56 = arith.constant 0 : index
    %108 = vector.load %arg4[%c0_55, %c0_56] : memref<2x1024xf32, #tpu.memory_space<vmem>>, vector<1x256xf32>
    %109 = vector.broadcast %108 : vector<1x256xf32> to vector<32x256xf32>
    %110 = arith.mulf %107, %109 : vector<32x256xf32>
    %111 = arith.addf %91, %110 : vector<32x256xf32>
    %cst_57 = arith.constant 0.000000e+00 : f32
    %112 = vector.broadcast %cst_57 : f32 to vector<32x256xf32>
    %c0_58 = arith.constant 0 : index
    %c96_59 = arith.constant 96 : index
    %113 = vector.load %arg8[%c0_58, %c96_59] : memref<32x1280xf32, #tpu.memory_space<vmem>>, vector<32x256xf32>
    %114 = vector.extract_strided_slice %78 {offsets = [0, 1], sizes = [32, 1], strides = [1, 1]} : vector<32x9xf32> to vector<32x1xf32>
    %115 = vector.broadcast %114 : vector<32x1xf32> to vector<32x256xf32>
    %116 = arith.mulf %113, %115 : vector<32x256xf32>
    %117 = arith.addf %112, %116 : vector<32x256xf32>
    %c0_60 = arith.constant 0 : index
    %c128_61 = arith.constant 128 : index
    %118 = vector.load %arg8[%c0_60, %c128_61] : memref<32x1280xf32, #tpu.memory_space<vmem>>, vector<32x256xf32>
    %119 = vector.extract_strided_slice %78 {offsets = [0, 4], sizes = [32, 1], strides = [1, 1]} : vector<32x9xf32> to vector<32x1xf32>
    %120 = vector.broadcast %119 : vector<32x1xf32> to vector<32x256xf32>
    %121 = arith.mulf %118, %120 : vector<32x256xf32>
    %122 = arith.addf %117, %121 : vector<32x256xf32>
    %c0_62 = arith.constant 0 : index
    %c160 = arith.constant 160 : index
    %123 = vector.load %arg8[%c0_62, %c160] : memref<32x1280xf32, #tpu.memory_space<vmem>>, vector<32x256xf32>
    %124 = vector.extract_strided_slice %78 {offsets = [0, 7], sizes = [32, 1], strides = [1, 1]} : vector<32x9xf32> to vector<32x1xf32>
    %125 = vector.broadcast %124 : vector<32x1xf32> to vector<32x256xf32>
    %126 = arith.mulf %123, %125 : vector<32x256xf32>
    %127 = arith.addf %122, %126 : vector<32x256xf32>
    %128 = arith.addf %111, %127 : vector<32x256xf32>
    %cst_63 = arith.constant 0.000000e+00 : f32
    %129 = vector.broadcast %cst_63 : f32 to vector<32x256xf32>
    %c0_64 = arith.constant 0 : index
    %c97 = arith.constant 97 : index
    %130 = vector.load %arg8[%c0_64, %c97] : memref<32x1280xf32, #tpu.memory_space<vmem>>, vector<32x256xf32>
    %131 = vector.extract_strided_slice %78 {offsets = [0, 2], sizes = [32, 1], strides = [1, 1]} : vector<32x9xf32> to vector<32x1xf32>
    %132 = vector.broadcast %131 : vector<32x1xf32> to vector<32x256xf32>
    %133 = arith.mulf %130, %132 : vector<32x256xf32>
    %134 = arith.addf %129, %133 : vector<32x256xf32>
    %c0_65 = arith.constant 0 : index
    %c129 = arith.constant 129 : index
    %135 = vector.load %arg8[%c0_65, %c129] : memref<32x1280xf32, #tpu.memory_space<vmem>>, vector<32x256xf32>
    %136 = vector.extract_strided_slice %78 {offsets = [0, 5], sizes = [32, 1], strides = [1, 1]} : vector<32x9xf32> to vector<32x1xf32>
    %137 = vector.broadcast %136 : vector<32x1xf32> to vector<32x256xf32>
    %138 = arith.mulf %135, %137 : vector<32x256xf32>
    %139 = arith.addf %134, %138 : vector<32x256xf32>
    %c0_66 = arith.constant 0 : index
    %c161 = arith.constant 161 : index
    %140 = vector.load %arg8[%c0_66, %c161] : memref<32x1280xf32, #tpu.memory_space<vmem>>, vector<32x256xf32>
    %141 = vector.extract_strided_slice %78 {offsets = [0, 8], sizes = [32, 1], strides = [1, 1]} : vector<32x9xf32> to vector<32x1xf32>
    %142 = vector.broadcast %141 : vector<32x1xf32> to vector<32x256xf32>
    %143 = arith.mulf %140, %142 : vector<32x256xf32>
    %144 = arith.addf %139, %143 : vector<32x256xf32>
    %c1 = arith.constant 1 : index
    %c0_67 = arith.constant 0 : index
    %145 = vector.load %arg4[%c1, %c0_67] : memref<2x1024xf32, #tpu.memory_space<vmem>>, vector<1x256xf32>
    %146 = vector.broadcast %145 : vector<1x256xf32> to vector<32x256xf32>
    %147 = arith.mulf %144, %146 : vector<32x256xf32>
    %148 = arith.addf %128, %147 : vector<32x256xf32>
    %149 = vector.broadcast %75 : vector<32x1xf32> to vector<32x256xf32>
    %150 = arith.addf %148, %149 : vector<32x256xf32>
    %cst_68 = arith.constant dense<0.000000e+00> : vector<4x256xf32>
    %151 = tpu.matmul %86, %150, %cst_68 {dimension_numbers = #tpu.dot_dimension_numbers<[1], [0], [0], [1], [0, 0, 1, 1], [], []>} : vector<4x32xf32>, vector<32x256xf32>, vector<4x256xf32> -> vector<4x256xf32>
    %152 = vector.broadcast %90 : vector<4x1xf32> to vector<4x256xf32>
    %153 = arith.addf %151, %152 : vector<4x256xf32>
    %cst_69 = arith.constant dense<0xFF800000> : vector<256xf32>
    %154 = vector.multi_reduction <maximumf>, %153, %cst_69 [0] : vector<4x256xf32> to vector<256xf32>
    %155 = vector.shape_cast %154 : vector<256xf32> to vector<1x256xf32>
    %156 = vector.broadcast %155 : vector<1x256xf32> to vector<4x256xf32>
    %157 = arith.subf %153, %156 : vector<4x256xf32>
    %158 = math.exp %157 : vector<4x256xf32>
    %cst_70 = arith.constant dense<0.000000e+00> : vector<256xf32>
    %159 = vector.multi_reduction <add>, %158, %cst_70 [0] : vector<4x256xf32> to vector<256xf32>
    %160 = vector.shape_cast %159 : vector<256xf32> to vector<1x256xf32>
    %cst_71 = arith.constant 1.000000e+00 : f32
    %161 = vector.broadcast %cst_71 : f32 to vector<1x256xf32>
    %162 = arith.divf %161, %160 : vector<1x256xf32>
    %163 = vector.broadcast %162 : vector<1x256xf32> to vector<4x256xf32>
    %164 = arith.mulf %158, %163 : vector<4x256xf32>
    %cst_72 = arith.constant dense<0.000000e+00> : vector<32x256xf32>
    %165 = tpu.matmul %82, %164, %cst_72 {dimension_numbers = #tpu.dot_dimension_numbers<[1], [0], [0], [1], [0, 0, 1, 1], [], []>} : vector<32x4xf32>, vector<4x256xf32>, vector<32x256xf32> -> vector<32x256xf32>
    %166 = vector.broadcast %77 : vector<32x1xf32> to vector<32x256xf32>
    %167 = arith.addf %165, %166 : vector<32x256xf32>
    %c0_73 = arith.constant 0 : index
    %c128_74 = arith.constant 128 : index
    %168 = vector.load %arg8[%c0_73, %c128_74] : memref<32x1280xf32, #tpu.memory_space<vmem>>, vector<32x256xf32>
    %169 = arith.addf %168, %167 : vector<32x256xf32>
    %c0_75 = arith.constant 0 : index
    %c0_76 = arith.constant 0 : index
    %c0_77 = arith.constant 0 : index
    %170 = vector.load %arg7[%c0_75, %c0_76, %c0_77] : memref<1x32x1024xf32, #tpu.memory_space<vmem>>, vector<1x32x256xf32>
    %171 = vector.shape_cast %170 : vector<1x32x256xf32> to vector<32x256xf32>
    %172 = vector.shape_cast %169 : vector<32x256xf32> to vector<1x32x256xf32>
    tpu.vector_store %arg7[%c0_75, %c0_76, %c0_77], %172 {strides = array<i32>} : memref<1x32x1024xf32, #tpu.memory_space<vmem>>, vector<1x32x256xf32>,
    %cst_78 = arith.constant 0.000000e+00 : f32
    %173 = vector.broadcast %cst_78 : f32 to vector<32x256xf32>
    %cst_79 = arith.constant 0.000000e+00 : f32
    %174 = vector.broadcast %cst_79 : f32 to vector<32x256xf32>
    %c0_80 = arith.constant 0 : index
    %c351 = arith.constant 351 : index
    %175 = vector.load %arg8[%c0_80, %c351] : memref<32x1280xf32, #tpu.memory_space<vmem>>, vector<32x256xf32>
    %176 = vector.extract_strided_slice %78 {offsets = [0, 0], sizes = [32, 1], strides = [1, 1]} : vector<32x9xf32> to vector<32x1xf32>
    %177 = vector.broadcast %176 : vector<32x1xf32> to vector<32x256xf32>
    %178 = arith.mulf %175, %177 : vector<32x256xf32>
    %179 = arith.addf %174, %178 : vector<32x256xf32>
    %c0_81 = arith.constant 0 : index
    %c383 = arith.constant 383 : index
    %180 = vector.load %arg8[%c0_81, %c383] : memref<32x1280xf32, #tpu.memory_space<vmem>>, vector<32x256xf32>
    %181 = vector.extract_strided_slice %78 {offsets = [0, 3], sizes = [32, 1], strides = [1, 1]} : vector<32x9xf32> to vector<32x1xf32>
    %182 = vector.broadcast %181 : vector<32x1xf32> to vector<32x256xf32>
    %183 = arith.mulf %180, %182 : vector<32x256xf32>
    %184 = arith.addf %179, %183 : vector<32x256xf32>
    %c0_82 = arith.constant 0 : index
    %c415 = arith.constant 415 : index
    %185 = vector.load %arg8[%c0_82, %c415] : memref<32x1280xf32, #tpu.memory_space<vmem>>, vector<32x256xf32>
    %186 = vector.extract_strided_slice %78 {offsets = [0, 6], sizes = [32, 1], strides = [1, 1]} : vector<32x9xf32> to vector<32x1xf32>
    %187 = vector.broadcast %186 : vector<32x1xf32> to vector<32x256xf32>
    %188 = arith.mulf %185, %187 : vector<32x256xf32>
    %189 = arith.addf %184, %188 : vector<32x256xf32>
    %c0_83 = arith.constant 0 : index
    %c256_84 = arith.constant 256 : index
    %190 = vector.load %arg4[%c0_83, %c256_84] : memref<2x1024xf32, #tpu.memory_space<vmem>>, vector<1x256xf32>
    %191 = vector.broadcast %190 : vector<1x256xf32> to vector<32x256xf32>
    %192 = arith.mulf %189, %191 : vector<32x256xf32>
    %193 = arith.addf %173, %192 : vector<32x256xf32>
    %cst_85 = arith.constant 0.000000e+00 : f32
    %194 = vector.broadcast %cst_85 : f32 to vector<32x256xf32>
    %c0_86 = arith.constant 0 : index
    %c352 = arith.constant 352 : index
    %195 = vector.load %arg8[%c0_86, %c352] : memref<32x1280xf32, #tpu.memory_space<vmem>>, vector<32x256xf32>
    %196 = vector.extract_strided_slice %78 {offsets = [0, 1], sizes = [32, 1], strides = [1, 1]} : vector<32x9xf32> to vector<32x1xf32>
    %197 = vector.broadcast %196 : vector<32x1xf32> to vector<32x256xf32>
    %198 = arith.mulf %195, %197 : vector<32x256xf32>
    %199 = arith.addf %194, %198 : vector<32x256xf32>
    %c0_87 = arith.constant 0 : index
    %c384_88 = arith.constant 384 : index
    %200 = vector.load %arg8[%c0_87, %c384_88] : memref<32x1280xf32, #tpu.memory_space<vmem>>, vector<32x256xf32>
    %201 = vector.extract_strided_slice %78 {offsets = [0, 4], sizes = [32, 1], strides = [1, 1]} : vector<32x9xf32> to vector<32x1xf32>
    %202 = vector.broadcast %201 : vector<32x1xf32> to vector<32x256xf32>
    %203 = arith.mulf %200, %202 : vector<32x256xf32>
    %204 = arith.addf %199, %203 : vector<32x256xf32>
    %c0_89 = arith.constant 0 : index
    %c416 = arith.constant 416 : index
    %205 = vector.load %arg8[%c0_89, %c416] : memref<32x1280xf32, #tpu.memory_space<vmem>>, vector<32x256xf32>
    %206 = vector.extract_strided_slice %78 {offsets = [0, 7], sizes = [32, 1], strides = [1, 1]} : vector<32x9xf32> to vector<32x1xf32>
    %207 = vector.broadcast %206 : vector<32x1xf32> to vector<32x256xf32>
    %208 = arith.mulf %205, %207 : vector<32x256xf32>
    %209 = arith.addf %204, %208 : vector<32x256xf32>
    %210 = arith.addf %193, %209 : vector<32x256xf32>
    %cst_90 = arith.constant 0.000000e+00 : f32
    %211 = vector.broadcast %cst_90 : f32 to vector<32x256xf32>
    %c0_91 = arith.constant 0 : index
    %c353 = arith.constant 353 : index
    %212 = vector.load %arg8[%c0_91, %c353] : memref<32x1280xf32, #tpu.memory_space<vmem>>, vector<32x256xf32>
    %213 = vector.extract_strided_slice %78 {offsets = [0, 2], sizes = [32, 1], strides = [1, 1]} : vector<32x9xf32> to vector<32x1xf32>
    %214 = vector.broadcast %213 : vector<32x1xf32> to vector<32x256xf32>
    %215 = arith.mulf %212, %214 : vector<32x256xf32>
    %216 = arith.addf %211, %215 : vector<32x256xf32>
    %c0_92 = arith.constant 0 : index
    %c385 = arith.constant 385 : index
    %217 = vector.load %arg8[%c0_92, %c385] : memref<32x1280xf32, #tpu.memory_space<vmem>>, vector<32x256xf32>
    %218 = vector.extract_strided_slice %78 {offsets = [0, 5], sizes = [32, 1], strides = [1, 1]} : vector<32x9xf32> to vector<32x1xf32>
    %219 = vector.broadcast %218 : vector<32x1xf32> to vector<32x256xf32>
    %220 = arith.mulf %217, %219 : vector<32x256xf32>
    %221 = arith.addf %216, %220 : vector<32x256xf32>
    %c0_93 = arith.constant 0 : index
    %c417 = arith.constant 417 : index
    %222 = vector.load %arg8[%c0_93, %c417] : memref<32x1280xf32, #tpu.memory_space<vmem>>, vector<32x256xf32>
    %223 = vector.extract_strided_slice %78 {offsets = [0, 8], sizes = [32, 1], strides = [1, 1]} : vector<32x9xf32> to vector<32x1xf32>
    %224 = vector.broadcast %223 : vector<32x1xf32> to vector<32x256xf32>
    %225 = arith.mulf %222, %224 : vector<32x256xf32>
    %226 = arith.addf %221, %225 : vector<32x256xf32>
    %c1_94 = arith.constant 1 : index
    %c256_95 = arith.constant 256 : index
    %227 = vector.load %arg4[%c1_94, %c256_95] : memref<2x1024xf32, #tpu.memory_space<vmem>>, vector<1x256xf32>
    %228 = vector.broadcast %227 : vector<1x256xf32> to vector<32x256xf32>
    %229 = arith.mulf %226, %228 : vector<32x256xf32>
    %230 = arith.addf %210, %229 : vector<32x256xf32>
    %231 = vector.broadcast %75 : vector<32x1xf32> to vector<32x256xf32>
    %232 = arith.addf %230, %231 : vector<32x256xf32>
    %cst_96 = arith.constant dense<0.000000e+00> : vector<4x256xf32>
    %233 = tpu.matmul %86, %232, %cst_96 {dimension_numbers = #tpu.dot_dimension_numbers<[1], [0], [0], [1], [0, 0, 1, 1], [], []>} : vector<4x32xf32>, vector<32x256xf32>, vector<4x256xf32> -> vector<4x256xf32>
    %234 = vector.broadcast %90 : vector<4x1xf32> to vector<4x256xf32>
    %235 = arith.addf %233, %234 : vector<4x256xf32>
    %cst_97 = arith.constant dense<0xFF800000> : vector<256xf32>
    %236 = vector.multi_reduction <maximumf>, %235, %cst_97 [0] : vector<4x256xf32> to vector<256xf32>
    %237 = vector.shape_cast %236 : vector<256xf32> to vector<1x256xf32>
    %238 = vector.broadcast %237 : vector<1x256xf32> to vector<4x256xf32>
    %239 = arith.subf %235, %238 : vector<4x256xf32>
    %240 = math.exp %239 : vector<4x256xf32>
    %cst_98 = arith.constant dense<0.000000e+00> : vector<256xf32>
    %241 = vector.multi_reduction <add>, %240, %cst_98 [0] : vector<4x256xf32> to vector<256xf32>
    %242 = vector.shape_cast %241 : vector<256xf32> to vector<1x256xf32>
    %cst_99 = arith.constant 1.000000e+00 : f32
    %243 = vector.broadcast %cst_99 : f32 to vector<1x256xf32>
    %244 = arith.divf %243, %242 : vector<1x256xf32>
    %245 = vector.broadcast %244 : vector<1x256xf32> to vector<4x256xf32>
    %246 = arith.mulf %240, %245 : vector<4x256xf32>
    %cst_100 = arith.constant dense<0.000000e+00> : vector<32x256xf32>
    %247 = tpu.matmul %82, %246, %cst_100 {dimension_numbers = #tpu.dot_dimension_numbers<[1], [0], [0], [1], [0, 0, 1, 1], [], []>} : vector<32x4xf32>, vector<4x256xf32>, vector<32x256xf32> -> vector<32x256xf32>
    %248 = vector.broadcast %77 : vector<32x1xf32> to vector<32x256xf32>
    %249 = arith.addf %247, %248 : vector<32x256xf32>
    %c0_101 = arith.constant 0 : index
    %c384_102 = arith.constant 384 : index
    %250 = vector.load %arg8[%c0_101, %c384_102] : memref<32x1280xf32, #tpu.memory_space<vmem>>, vector<32x256xf32>
    %251 = arith.addf %250, %249 : vector<32x256xf32>
    %c0_103 = arith.constant 0 : index
    %c0_104 = arith.constant 0 : index
    %c256_105 = arith.constant 256 : index
    %252 = vector.load %arg7[%c0_103, %c0_104, %c256_105] : memref<1x32x1024xf32, #tpu.memory_space<vmem>>, vector<1x32x256xf32>
    %253 = vector.shape_cast %252 : vector<1x32x256xf32> to vector<32x256xf32>
    %254 = vector.shape_cast %251 : vector<32x256xf32> to vector<1x32x256xf32>
    tpu.vector_store %arg7[%c0_103, %c0_104, %c256_105], %254 {strides = array<i32>} : memref<1x32x1024xf32, #tpu.memory_space<vmem>>, vector<1x32x256xf32>,
    %cst_106 = arith.constant 0.000000e+00 : f32
    %255 = vector.broadcast %cst_106 : f32 to vector<32x256xf32>
    %cst_107 = arith.constant 0.000000e+00 : f32
    %256 = vector.broadcast %cst_107 : f32 to vector<32x256xf32>
    %c0_108 = arith.constant 0 : index
    %c607 = arith.constant 607 : index
    %257 = vector.load %arg8[%c0_108, %c607] : memref<32x1280xf32, #tpu.memory_space<vmem>>, vector<32x256xf32>
    %258 = vector.extract_strided_slice %78 {offsets = [0, 0], sizes = [32, 1], strides = [1, 1]} : vector<32x9xf32> to vector<32x1xf32>
    %259 = vector.broadcast %258 : vector<32x1xf32> to vector<32x256xf32>
    %260 = arith.mulf %257, %259 : vector<32x256xf32>
    %261 = arith.addf %256, %260 : vector<32x256xf32>
    %c0_109 = arith.constant 0 : index
    %c639 = arith.constant 639 : index
    %262 = vector.load %arg8[%c0_109, %c639] : memref<32x1280xf32, #tpu.memory_space<vmem>>, vector<32x256xf32>
    %263 = vector.extract_strided_slice %78 {offsets = [0, 3], sizes = [32, 1], strides = [1, 1]} : vector<32x9xf32> to vector<32x1xf32>
    %264 = vector.broadcast %263 : vector<32x1xf32> to vector<32x256xf32>
    %265 = arith.mulf %262, %264 : vector<32x256xf32>
    %266 = arith.addf %261, %265 : vector<32x256xf32>
    %c0_110 = arith.constant 0 : index
    %c671 = arith.constant 671 : index
    %267 = vector.load %arg8[%c0_110, %c671] : memref<32x1280xf32, #tpu.memory_space<vmem>>, vector<32x256xf32>
    %268 = vector.extract_strided_slice %78 {offsets = [0, 6], sizes = [32, 1], strides = [1, 1]} : vector<32x9xf32> to vector<32x1xf32>
    %269 = vector.broadcast %268 : vector<32x1xf32> to vector<32x256xf32>
    %270 = arith.mulf %267, %269 : vector<32x256xf32>
    %271 = arith.addf %266, %270 : vector<32x256xf32>
    %c0_111 = arith.constant 0 : index
    %c512_112 = arith.constant 512 : index
    %272 = vector.load %arg4[%c0_111, %c512_112] : memref<2x1024xf32, #tpu.memory_space<vmem>>, vector<1x256xf32>
    %273 = vector.broadcast %272 : vector<1x256xf32> to vector<32x256xf32>
    %274 = arith.mulf %271, %273 : vector<32x256xf32>
    %275 = arith.addf %255, %274 : vector<32x256xf32>
    %cst_113 = arith.constant 0.000000e+00 : f32
    %276 = vector.broadcast %cst_113 : f32 to vector<32x256xf32>
    %c0_114 = arith.constant 0 : index
    %c608 = arith.constant 608 : index
    %277 = vector.load %arg8[%c0_114, %c608] : memref<32x1280xf32, #tpu.memory_space<vmem>>, vector<32x256xf32>
    %278 = vector.extract_strided_slice %78 {offsets = [0, 1], sizes = [32, 1], strides = [1, 1]} : vector<32x9xf32> to vector<32x1xf32>
    %279 = vector.broadcast %278 : vector<32x1xf32> to vector<32x256xf32>
    %280 = arith.mulf %277, %279 : vector<32x256xf32>
    %281 = arith.addf %276, %280 : vector<32x256xf32>
    %c0_115 = arith.constant 0 : index
    %c640_116 = arith.constant 640 : index
    %282 = vector.load %arg8[%c0_115, %c640_116] : memref<32x1280xf32, #tpu.memory_space<vmem>>, vector<32x256xf32>
    %283 = vector.extract_strided_slice %78 {offsets = [0, 4], sizes = [32, 1], strides = [1, 1]} : vector<32x9xf32> to vector<32x1xf32>
    %284 = vector.broadcast %283 : vector<32x1xf32> to vector<32x256xf32>
    %285 = arith.mulf %282, %284 : vector<32x256xf32>
    %286 = arith.addf %281, %285 : vector<32x256xf32>
    %c0_117 = arith.constant 0 : index
    %c672 = arith.constant 672 : index
    %287 = vector.load %arg8[%c0_117, %c672] : memref<32x1280xf32, #tpu.memory_space<vmem>>, vector<32x256xf32>
    %288 = vector.extract_strided_slice %78 {offsets = [0, 7], sizes = [32, 1], strides = [1, 1]} : vector<32x9xf32> to vector<32x1xf32>
    %289 = vector.broadcast %288 : vector<32x1xf32> to vector<32x256xf32>
    %290 = arith.mulf %287, %289 : vector<32x256xf32>
    %291 = arith.addf %286, %290 : vector<32x256xf32>
    %292 = arith.addf %275, %291 : vector<32x256xf32>
    %cst_118 = arith.constant 0.000000e+00 : f32
    %293 = vector.broadcast %cst_118 : f32 to vector<32x256xf32>
    %c0_119 = arith.constant 0 : index
    %c609 = arith.constant 609 : index
    %294 = vector.load %arg8[%c0_119, %c609] : memref<32x1280xf32, #tpu.memory_space<vmem>>, vector<32x256xf32>
    %295 = vector.extract_strided_slice %78 {offsets = [0, 2], sizes = [32, 1], strides = [1, 1]} : vector<32x9xf32> to vector<32x1xf32>
    %296 = vector.broadcast %295 : vector<32x1xf32> to vector<32x256xf32>
    %297 = arith.mulf %294, %296 : vector<32x256xf32>
    %298 = arith.addf %293, %297 : vector<32x256xf32>
    %c0_120 = arith.constant 0 : index
    %c641 = arith.constant 641 : index
    %299 = vector.load %arg8[%c0_120, %c641] : memref<32x1280xf32, #tpu.memory_space<vmem>>, vector<32x256xf32>
    %300 = vector.extract_strided_slice %78 {offsets = [0, 5], sizes = [32, 1], strides = [1, 1]} : vector<32x9xf32> to vector<32x1xf32>
    %301 = vector.broadcast %300 : vector<32x1xf32> to vector<32x256xf32>
    %302 = arith.mulf %299, %301 : vector<32x256xf32>
    %303 = arith.addf %298, %302 : vector<32x256xf32>
    %c0_121 = arith.constant 0 : index
    %c673 = arith.constant 673 : index
    %304 = vector.load %arg8[%c0_121, %c673] : memref<32x1280xf32, #tpu.memory_space<vmem>>, vector<32x256xf32>
    %305 = vector.extract_strided_slice %78 {offsets = [0, 8], sizes = [32, 1], strides = [1, 1]} : vector<32x9xf32> to vector<32x1xf32>
    %306 = vector.broadcast %305 : vector<32x1xf32> to vector<32x256xf32>
    %307 = arith.mulf %304, %306 : vector<32x256xf32>
    %308 = arith.addf %303, %307 : vector<32x256xf32>
    %c1_122 = arith.constant 1 : index
    %c512_123 = arith.constant 512 : index
    %309 = vector.load %arg4[%c1_122, %c512_123] : memref<2x1024xf32, #tpu.memory_space<vmem>>, vector<1x256xf32>
    %310 = vector.broadcast %309 : vector<1x256xf32> to vector<32x256xf32>
    %311 = arith.mulf %308, %310 : vector<32x256xf32>
    %312 = arith.addf %292, %311 : vector<32x256xf32>
    %313 = vector.broadcast %75 : vector<32x1xf32> to vector<32x256xf32>
    %314 = arith.addf %312, %313 : vector<32x256xf32>
    %cst_124 = arith.constant dense<0.000000e+00> : vector<4x256xf32>
    %315 = tpu.matmul %86, %314, %cst_124 {dimension_numbers = #tpu.dot_dimension_numbers<[1], [0], [0], [1], [0, 0, 1, 1], [], []>} : vector<4x32xf32>, vector<32x256xf32>, vector<4x256xf32> -> vector<4x256xf32>
    %316 = vector.broadcast %90 : vector<4x1xf32> to vector<4x256xf32>
    %317 = arith.addf %315, %316 : vector<4x256xf32>
    %cst_125 = arith.constant dense<0xFF800000> : vector<256xf32>
    %318 = vector.multi_reduction <maximumf>, %317, %cst_125 [0] : vector<4x256xf32> to vector<256xf32>
    %319 = vector.shape_cast %318 : vector<256xf32> to vector<1x256xf32>
    %320 = vector.broadcast %319 : vector<1x256xf32> to vector<4x256xf32>
    %321 = arith.subf %317, %320 : vector<4x256xf32>
    %322 = math.exp %321 : vector<4x256xf32>
    %cst_126 = arith.constant dense<0.000000e+00> : vector<256xf32>
    %323 = vector.multi_reduction <add>, %322, %cst_126 [0] : vector<4x256xf32> to vector<256xf32>
    %324 = vector.shape_cast %323 : vector<256xf32> to vector<1x256xf32>
    %cst_127 = arith.constant 1.000000e+00 : f32
    %325 = vector.broadcast %cst_127 : f32 to vector<1x256xf32>
    %326 = arith.divf %325, %324 : vector<1x256xf32>
    %327 = vector.broadcast %326 : vector<1x256xf32> to vector<4x256xf32>
    %328 = arith.mulf %322, %327 : vector<4x256xf32>
    %cst_128 = arith.constant dense<0.000000e+00> : vector<32x256xf32>
    %329 = tpu.matmul %82, %328, %cst_128 {dimension_numbers = #tpu.dot_dimension_numbers<[1], [0], [0], [1], [0, 0, 1, 1], [], []>} : vector<32x4xf32>, vector<4x256xf32>, vector<32x256xf32> -> vector<32x256xf32>
    %330 = vector.broadcast %77 : vector<32x1xf32> to vector<32x256xf32>
    %331 = arith.addf %329, %330 : vector<32x256xf32>
    %c0_129 = arith.constant 0 : index
    %c640_130 = arith.constant 640 : index
    %332 = vector.load %arg8[%c0_129, %c640_130] : memref<32x1280xf32, #tpu.memory_space<vmem>>, vector<32x256xf32>
    %333 = arith.addf %332, %331 : vector<32x256xf32>
    %c0_131 = arith.constant 0 : index
    %c0_132 = arith.constant 0 : index
    %c512_133 = arith.constant 512 : index
    %334 = vector.load %arg7[%c0_131, %c0_132, %c512_133] : memref<1x32x1024xf32, #tpu.memory_space<vmem>>, vector<1x32x256xf32>
    %335 = vector.shape_cast %334 : vector<1x32x256xf32> to vector<32x256xf32>
    %336 = vector.shape_cast %333 : vector<32x256xf32> to vector<1x32x256xf32>
    tpu.vector_store %arg7[%c0_131, %c0_132, %c512_133], %336 {strides = array<i32>} : memref<1x32x1024xf32, #tpu.memory_space<vmem>>, vector<1x32x256xf32>,
    %cst_134 = arith.constant 0.000000e+00 : f32
    %337 = vector.broadcast %cst_134 : f32 to vector<32x256xf32>
    %cst_135 = arith.constant 0.000000e+00 : f32
    %338 = vector.broadcast %cst_135 : f32 to vector<32x256xf32>
    %c0_136 = arith.constant 0 : index
    %c863 = arith.constant 863 : index
    %339 = vector.load %arg8[%c0_136, %c863] : memref<32x1280xf32, #tpu.memory_space<vmem>>, vector<32x256xf32>
    %340 = vector.extract_strided_slice %78 {offsets = [0, 0], sizes = [32, 1], strides = [1, 1]} : vector<32x9xf32> to vector<32x1xf32>
    %341 = vector.broadcast %340 : vector<32x1xf32> to vector<32x256xf32>
    %342 = arith.mulf %339, %341 : vector<32x256xf32>
    %343 = arith.addf %338, %342 : vector<32x256xf32>
    %c0_137 = arith.constant 0 : index
    %c895 = arith.constant 895 : index
    %344 = vector.load %arg8[%c0_137, %c895] : memref<32x1280xf32, #tpu.memory_space<vmem>>, vector<32x256xf32>
    %345 = vector.extract_strided_slice %78 {offsets = [0, 3], sizes = [32, 1], strides = [1, 1]} : vector<32x9xf32> to vector<32x1xf32>
    %346 = vector.broadcast %345 : vector<32x1xf32> to vector<32x256xf32>
    %347 = arith.mulf %344, %346 : vector<32x256xf32>
    %348 = arith.addf %343, %347 : vector<32x256xf32>
    %c0_138 = arith.constant 0 : index
    %c927 = arith.constant 927 : index
    %349 = vector.load %arg8[%c0_138, %c927] : memref<32x1280xf32, #tpu.memory_space<vmem>>, vector<32x256xf32>
    %350 = vector.extract_strided_slice %78 {offsets = [0, 6], sizes = [32, 1], strides = [1, 1]} : vector<32x9xf32> to vector<32x1xf32>
    %351 = vector.broadcast %350 : vector<32x1xf32> to vector<32x256xf32>
    %352 = arith.mulf %349, %351 : vector<32x256xf32>
    %353 = arith.addf %348, %352 : vector<32x256xf32>
    %c0_139 = arith.constant 0 : index
    %c768_140 = arith.constant 768 : index
    %354 = vector.load %arg4[%c0_139, %c768_140] : memref<2x1024xf32, #tpu.memory_space<vmem>>, vector<1x256xf32>
    %355 = vector.broadcast %354 : vector<1x256xf32> to vector<32x256xf32>
    %356 = arith.mulf %353, %355 : vector<32x256xf32>
    %357 = arith.addf %337, %356 : vector<32x256xf32>
    %cst_141 = arith.constant 0.000000e+00 : f32
    %358 = vector.broadcast %cst_141 : f32 to vector<32x256xf32>
    %c0_142 = arith.constant 0 : index
    %c864 = arith.constant 864 : index
    %359 = vector.load %arg8[%c0_142, %c864] : memref<32x1280xf32, #tpu.memory_space<vmem>>, vector<32x256xf32>
    %360 = vector.extract_strided_slice %78 {offsets = [0, 1], sizes = [32, 1], strides = [1, 1]} : vector<32x9xf32> to vector<32x1xf32>
    %361 = vector.broadcast %360 : vector<32x1xf32> to vector<32x256xf32>
    %362 = arith.mulf %359, %361 : vector<32x256xf32>
    %363 = arith.addf %358, %362 : vector<32x256xf32>
    %c0_143 = arith.constant 0 : index
    %c896_144 = arith.constant 896 : index
    %364 = vector.load %arg8[%c0_143, %c896_144] : memref<32x1280xf32, #tpu.memory_space<vmem>>, vector<32x256xf32>
    %365 = vector.extract_strided_slice %78 {offsets = [0, 4], sizes = [32, 1], strides = [1, 1]} : vector<32x9xf32> to vector<32x1xf32>
    %366 = vector.broadcast %365 : vector<32x1xf32> to vector<32x256xf32>
    %367 = arith.mulf %364, %366 : vector<32x256xf32>
    %368 = arith.addf %363, %367 : vector<32x256xf32>
    %c0_145 = arith.constant 0 : index
    %c928 = arith.constant 928 : index
    %369 = vector.load %arg8[%c0_145, %c928] : memref<32x1280xf32, #tpu.memory_space<vmem>>, vector<32x256xf32>
    %370 = vector.extract_strided_slice %78 {offsets = [0, 7], sizes = [32, 1], strides = [1, 1]} : vector<32x9xf32> to vector<32x1xf32>
    %371 = vector.broadcast %370 : vector<32x1xf32> to vector<32x256xf32>
    %372 = arith.mulf %369, %371 : vector<32x256xf32>
    %373 = arith.addf %368, %372 : vector<32x256xf32>
    %374 = arith.addf %357, %373 : vector<32x256xf32>
    %cst_146 = arith.constant 0.000000e+00 : f32
    %375 = vector.broadcast %cst_146 : f32 to vector<32x256xf32>
    %c0_147 = arith.constant 0 : index
    %c865 = arith.constant 865 : index
    %376 = vector.load %arg8[%c0_147, %c865] : memref<32x1280xf32, #tpu.memory_space<vmem>>, vector<32x256xf32>
    %377 = vector.extract_strided_slice %78 {offsets = [0, 2], sizes = [32, 1], strides = [1, 1]} : vector<32x9xf32> to vector<32x1xf32>
    %378 = vector.broadcast %377 : vector<32x1xf32> to vector<32x256xf32>
    %379 = arith.mulf %376, %378 : vector<32x256xf32>
    %380 = arith.addf %375, %379 : vector<32x256xf32>
    %c0_148 = arith.constant 0 : index
    %c897 = arith.constant 897 : index
    %381 = vector.load %arg8[%c0_148, %c897] : memref<32x1280xf32, #tpu.memory_space<vmem>>, vector<32x256xf32>
    %382 = vector.extract_strided_slice %78 {offsets = [0, 5], sizes = [32, 1], strides = [1, 1]} : vector<32x9xf32> to vector<32x1xf32>
    %383 = vector.broadcast %382 : vector<32x1xf32> to vector<32x256xf32>
    %384 = arith.mulf %381, %383 : vector<32x256xf32>
    %385 = arith.addf %380, %384 : vector<32x256xf32>
    %c0_149 = arith.constant 0 : index
    %c929 = arith.constant 929 : index
    %386 = vector.load %arg8[%c0_149, %c929] : memref<32x1280xf32, #tpu.memory_space<vmem>>, vector<32x256xf32>
    %387 = vector.extract_strided_slice %78 {offsets = [0, 8], sizes = [32, 1], strides = [1, 1]} : vector<32x9xf32> to vector<32x1xf32>
    %388 = vector.broadcast %387 : vector<32x1xf32> to vector<32x256xf32>
    %389 = arith.mulf %386, %388 : vector<32x256xf32>
    %390 = arith.addf %385, %389 : vector<32x256xf32>
    %c1_150 = arith.constant 1 : index
    %c768_151 = arith.constant 768 : index
    %391 = vector.load %arg4[%c1_150, %c768_151] : memref<2x1024xf32, #tpu.memory_space<vmem>>, vector<1x256xf32>
    %392 = vector.broadcast %391 : vector<1x256xf32> to vector<32x256xf32>
    %393 = arith.mulf %390, %392 : vector<32x256xf32>
    %394 = arith.addf %374, %393 : vector<32x256xf32>
    %395 = vector.broadcast %75 : vector<32x1xf32> to vector<32x256xf32>
    %396 = arith.addf %394, %395 : vector<32x256xf32>
    %cst_152 = arith.constant dense<0.000000e+00> : vector<4x256xf32>
    %397 = tpu.matmul %86, %396, %cst_152 {dimension_numbers = #tpu.dot_dimension_numbers<[1], [0], [0], [1], [0, 0, 1, 1], [], []>} : vector<4x32xf32>, vector<32x256xf32>, vector<4x256xf32> -> vector<4x256xf32>
    %398 = vector.broadcast %90 : vector<4x1xf32> to vector<4x256xf32>
    %399 = arith.addf %397, %398 : vector<4x256xf32>
    %cst_153 = arith.constant dense<0xFF800000> : vector<256xf32>
    %400 = vector.multi_reduction <maximumf>, %399, %cst_153 [0] : vector<4x256xf32> to vector<256xf32>
    %401 = vector.shape_cast %400 : vector<256xf32> to vector<1x256xf32>
    %402 = vector.broadcast %401 : vector<1x256xf32> to vector<4x256xf32>
    %403 = arith.subf %399, %402 : vector<4x256xf32>
    %404 = math.exp %403 : vector<4x256xf32>
    %cst_154 = arith.constant dense<0.000000e+00> : vector<256xf32>
    %405 = vector.multi_reduction <add>, %404, %cst_154 [0] : vector<4x256xf32> to vector<256xf32>
    %406 = vector.shape_cast %405 : vector<256xf32> to vector<1x256xf32>
    %cst_155 = arith.constant 1.000000e+00 : f32
    %407 = vector.broadcast %cst_155 : f32 to vector<1x256xf32>
    %408 = arith.divf %407, %406 : vector<1x256xf32>
    %409 = vector.broadcast %408 : vector<1x256xf32> to vector<4x256xf32>
    %410 = arith.mulf %404, %409 : vector<4x256xf32>
    %cst_156 = arith.constant dense<0.000000e+00> : vector<32x256xf32>
    %411 = tpu.matmul %82, %410, %cst_156 {dimension_numbers = #tpu.dot_dimension_numbers<[1], [0], [0], [1], [0, 0, 1, 1], [], []>} : vector<32x4xf32>, vector<4x256xf32>, vector<32x256xf32> -> vector<32x256xf32>
    %412 = vector.broadcast %77 : vector<32x1xf32> to vector<32x256xf32>
    %413 = arith.addf %411, %412 : vector<32x256xf32>
    %c0_157 = arith.constant 0 : index
    %c896_158 = arith.constant 896 : index
    %414 = vector.load %arg8[%c0_157, %c896_158] : memref<32x1280xf32, #tpu.memory_space<vmem>>, vector<32x256xf32>
    %415 = arith.addf %414, %413 : vector<32x256xf32>
    %c0_159 = arith.constant 0 : index
    %c0_160 = arith.constant 0 : index
    %c768_161 = arith.constant 768 : index
    %416 = vector.load %arg7[%c0_159, %c0_160, %c768_161] : memref<1x32x1024xf32, #tpu.memory_space<vmem>>, vector<1x32x256xf32>
    %417 = vector.shape_cast %416 : vector<1x32x256xf32> to vector<32x256xf32>
    %418 = vector.shape_cast %415 : vector<32x256xf32> to vector<1x32x256xf32>
    tpu.vector_store %arg7[%c0_159, %c0_160, %c768_161], %418 {strides = array<i32>} : memref<1x32x1024xf32, #tpu.memory_space<vmem>>, vector<1x32x256xf32>,
    return
  }
  func.func @transform_0(%arg0: i32) -> (i32, i32, i32) {
    %c0_i32 = arith.constant 0 : i32
    %c0_i32_0 = arith.constant 0 : i32
    %c0_i32_1 = arith.constant 0 : i32
    return %arg0, %c0_i32, %c0_i32_0 : i32, i32, i32
  }
  func.func @transform_1(%arg0: i32) -> (i32, i32) {
    %c0_i32 = arith.constant 0 : i32
    %c0_i32_0 = arith.constant 0 : i32
    %c0_i32_1 = arith.constant 0 : i32
    return %c0_i32, %c0_i32_0 : i32, i32
  }
  func.func @transform_2(%arg0: i32) -> (i32, i32) {
    %c0_i32 = arith.constant 0 : i32
    %c0_i32_0 = arith.constant 0 : i32
    %c0_i32_1 = arith.constant 0 : i32
    return %c0_i32, %c0_i32_0 : i32, i32
  }
  func.func @transform_3(%arg0: i32) -> (i32, i32) {
    %c0_i32 = arith.constant 0 : i32
    %c0_i32_0 = arith.constant 0 : i32
    %c0_i32_1 = arith.constant 0 : i32
    return %c0_i32, %c0_i32_0 : i32, i32
  }
  func.func @transform_4(%arg0: i32) -> (i32, i32) {
    %c0_i32 = arith.constant 0 : i32
    %c0_i32_0 = arith.constant 0 : i32
    %c0_i32_1 = arith.constant 0 : i32
    return %c0_i32, %c0_i32_0 : i32, i32
  }
  func.func @transform_5(%arg0: i32) -> (i32, i32) {
    %c0_i32 = arith.constant 0 : i32
    %c0_i32_0 = arith.constant 0 : i32
    %c0_i32_1 = arith.constant 0 : i32
    return %c0_i32, %c0_i32_0 : i32, i32
  }
  func.func @transform_6(%arg0: i32) -> (i32, i32, i32) {
    %c0_i32 = arith.constant 0 : i32
    %c0_i32_0 = arith.constant 0 : i32
    %c0_i32_1 = arith.constant 0 : i32
    return %arg0, %c0_i32, %c0_i32_0 : i32, i32, i32
  }
}

</mosaic_0001>

<llo_original>
// kernel: my_attention_self_forward.1
$region0: #{my_attention_self_forward.1}
  #allocation0 [shape = 'u32[]', space=smem, size = 0x4, offset = 0x4, fixed_abs, tag = 'smem constant byte address 0x4 - core index']
  #allocation1 [shape = 'u32[72,128]{1,0:T(1,128)}', space=vmem, size = 0x9000, scoped, tag = 'internal scratch']
  #allocation2 [shape = 'f32[32,1280]{1,0:T(8,128)}', space=vmem, size = 0x28000, scoped, tag = 'scratch operand']
  %s0 = inlined_call_operand.vmem [shape: f32[2,32,256], index: 0, kind: input, shape index: {}]
  %s1 = inlined_call_operand.hbm [shape: f32[256,1024], index: 1, kind: input, shape index: {}]
  %s2 = inlined_call_operand.vmem [shape: f32[256,40], index: 2, kind: input, shape index: {}]
  %s3 = inlined_call_operand.vmem [shape: f32[2,1024], index: 3, kind: input, shape index: {}]
  %s4 = inlined_call_operand.vmem [shape: f32[32,22], index: 4, kind: input, shape index: {}]
  %s5 = inlined_call_operand.vmem [shape: f32[144,32], index: 5, kind: input, shape index: {}]
  %s6 = inlined_call_operand.vmem [shape: f32[2,32,1024], index: 6, kind: output, shape index: {}]
  %s7 = sld [smem:[#allocation0]]
  $region61: #{my_attention_self_forward.1} parent=0
    _
  %s9 = ssub.s32 1, %s7
  %s10 = scalar_select 0, %s9, %s7
  $region1: #{my_attention_self_forward.1} parent=0
    #allocation3 [shape = 'u8[1048576]{0}', space=vmem, size = 0x100000, scoped, tag = 'input window, operand 1, single buffered']
    #allocation4 [shape = 's32[2]{0}', space=sflag, size = 0x8, scoped, tag = 'scoped memory for my_attention_self_forward.1']
    %11 = vsyncpa [#allocation4], 0
    loop: start=0, step=1, limit=4
    $region2: #{my_attention_self_forward.1} parent=1 // loop_pre_header
      _
    $region3: #{my_attention_self_forward.1} parent=1 // loop_header
      %s13 = sphi 0, %s17
      %p14 = scmp.ge.s32.totalorder %s13, 4
      %s23 = sphi 0, %s25
      %s26 = sphi 0, %s23
      %s27 = sphi 0, %s26
      %s43 = sphi 0, %s27
      %s47 = sphi 0, %s47
      %s49 = sphi 0, %s47
      %s50 = sphi 0, %s49
      %s64 = sphi 0, %s50
      %s68 = sphi 0, %s68
      %s70 = sphi 0, %s68
      %s71 = sphi 0, %s70
      %s85 = sphi 0, %s71
      %s89 = sphi 0, %s89
      %s91 = sphi 0, %s89
      %s92 = sphi 0, %s91
      %s106 = sphi 0, %s92
      %s110 = sphi 0, %s110
      %s112 = sphi 0, %s110
      %s113 = sphi 0, %s112
      %s127 = sphi 0, %s113
      %s131 = sphi 0, %s131
      %s133 = sphi 0, %s131
      %s134 = sphi 0, %s133
      %s148 = sphi 0, %s134
      %s154 = sphi 0, %s156
      %s157 = sphi 0, %s154
      %s158 = sphi 0, %s157
      %s174 = sphi 0, %s158
    $region4: #{my_attention_self_forward.1} parent=1 // loop_header_branch
      %16 = sbr.rel (%p14) target = $region8
    $region5: #{my_attention_self_forward.1} parent=1 // loop_body
      %s18 = ssub.s32 %s13, 1
      %s19 = ssub.s32 %s13, 2
      %s20 = sadd.s32 %s13, 1
      %s21 = ssub.s32 %s13, %s20
      %p22 = scmp.eq.s32.totalorder %s21, 0
      %s24 = sadd.s32 %s23, 1
      %s25 = scalar_select %p22, %s23, %s24
      %p28 = pneg %p22
      %p29 = scmp.eq.s32.totalorder %s13, 1
      %p30 = por %p28, %p29
      %p31 = scmp.ne.s32.totalorder %s23, %s26
      %p32 = scmp.eq.s32.totalorder %s13, 0
      %p33 = por %p31, %p32
      %p34 = scmp.ne.s32.totalorder %s23, %s26
      %p35 = scmp.eq.s32.totalorder %s18, 1
      %p36 = por %p34, %p35
      %p37 = scmp.ne.s32.totalorder %s26, %s27
      %p38 = scmp.eq.s32.totalorder %s18, 0
      %p39 = por %p37, %p38
      %p40 = scmp.ne.s32.totalorder %s26, %s27
      %p41 = scmp.eq.s32.totalorder %s19, 1
      %p42 = por %p40, %p41
      %p44 = scmp.ne.s32.totalorder %s27, %s43
      %p45 = scmp.eq.s32.totalorder %s19, 0
      %p46 = por %p44, %p45
      %s48 = sadd.s32 %s47, 1
      %p51 = scmp.eq.s32.totalorder %s13, 1
      %p52 = scmp.ne.s32.totalorder %s47, %s49
      %p53 = scmp.eq.s32.totalorder %s13, 0
      %p54 = por %p52, %p53
      %p55 = scmp.ne.s32.totalorder %s47, %s49
      %p56 = scmp.eq.s32.totalorder %s18, 1
      %p57 = por %p55, %p56
      %p58 = scmp.ne.s32.totalorder %s49, %s50
      %p59 = scmp.eq.s32.totalorder %s18, 0
      %p60 = por %p58, %p59
      %p61 = scmp.ne.s32.totalorder %s49, %s50
      %p62 = scmp.eq.s32.totalorder %s19, 1
      %p63 = por %p61, %p62
      %p65 = scmp.ne.s32.totalorder %s50, %s64
      %p66 = scmp.eq.s32.totalorder %s19, 0
      %p67 = por %p65, %p66
      %s69 = sadd.s32 %s68, 1
      %p72 = scmp.eq.s32.totalorder %s13, 1
      %p73 = scmp.ne.s32.totalorder %s68, %s70
      %p74 = scmp.eq.s32.totalorder %s13, 0
      %p75 = por %p73, %p74
      %p76 = scmp.ne.s32.totalorder %s68, %s70
      %p77 = scmp.eq.s32.totalorder %s18, 1
      %p78 = por %p76, %p77
      %p79 = scmp.ne.s32.totalorder %s70, %s71
      %p80 = scmp.eq.s32.totalorder %s18, 0
      %p81 = por %p79, %p80
      %p82 = scmp.ne.s32.totalorder %s70, %s71
      %p83 = scmp.eq.s32.totalorder %s19, 1
      %p84 = por %p82, %p83
      %p86 = scmp.ne.s32.totalorder %s71, %s85
      %p87 = scmp.eq.s32.totalorder %s19, 0
      %p88 = por %p86, %p87
      %s90 = sadd.s32 %s89, 1
      %p93 = scmp.eq.s32.totalorder %s13, 1
      %p94 = scmp.ne.s32.totalorder %s89, %s91
      %p95 = scmp.eq.s32.totalorder %s13, 0
      %p96 = por %p94, %p95
      %p97 = scmp.ne.s32.totalorder %s89, %s91
      %p98 = scmp.eq.s32.totalorder %s18, 1
      %p99 = por %p97, %p98
      %p100 = scmp.ne.s32.totalorder %s91, %s92
      %p101 = scmp.eq.s32.totalorder %s18, 0
      %p102 = por %p100, %p101
      %p103 = scmp.ne.s32.totalorder %s91, %s92
      %p104 = scmp.eq.s32.totalorder %s19, 1
      %p105 = por %p103, %p104
      %p107 = scmp.ne.s32.totalorder %s92, %s106
      %p108 = scmp.eq.s32.totalorder %s19, 0
      %p109 = por %p107, %p108
      %s111 = sadd.s32 %s110, 1
      %p114 = scmp.eq.s32.totalorder %s13, 1
      %p115 = scmp.ne.s32.totalorder %s110, %s112
      %p116 = scmp.eq.s32.totalorder %s13, 0
      %p117 = por %p115, %p116
      %p118 = scmp.ne.s32.totalorder %s110, %s112
      %p119 = scmp.eq.s32.totalorder %s18, 1
      %p120 = por %p118, %p119
      %p121 = scmp.ne.s32.totalorder %s112, %s113
      %p122 = scmp.eq.s32.totalorder %s18, 0
      %p123 = por %p121, %p122
      %p124 = scmp.ne.s32.totalorder %s112, %s113
      %p125 = scmp.eq.s32.totalorder %s19, 1
      %p126 = por %p124, %p125
      %p128 = scmp.ne.s32.totalorder %s113, %s127
      %p129 = scmp.eq.s32.totalorder %s19, 0
      %p130 = por %p128, %p129
      %s132 = sadd.s32 %s131, 1
      %p135 = scmp.eq.s32.totalorder %s13, 1
      %p136 = scmp.ne.s32.totalorder %s131, %s133
      %p137 = scmp.eq.s32.totalorder %s13, 0
      %p138 = por %p136, %p137
      %p139 = scmp.ne.s32.totalorder %s131, %s133
      %p140 = scmp.eq.s32.totalorder %s18, 1
      %p141 = por %p139, %p140
      %p142 = scmp.ne.s32.totalorder %s133, %s134
      %p143 = scmp.eq.s32.totalorder %s18, 0
      %p144 = por %p142, %p143
      %p145 = scmp.ne.s32.totalorder %s133, %s134
      %p146 = scmp.eq.s32.totalorder %s19, 1
      %p147 = por %p145, %p146
      %p149 = scmp.ne.s32.totalorder %s134, %s148
      %p150 = scmp.eq.s32.totalorder %s19, 0
      %p151 = por %p149, %p150
      %s152 = ssub.s32 %s13, %s20
      %p153 = scmp.eq.s32.totalorder %s152, 0
      %s155 = sadd.s32 %s154, 1
      %s156 = scalar_select %p153, %s154, %s155
      %p159 = pneg %p153
      %p160 = scmp.eq.s32.totalorder %s13, 1
      %p161 = por %p159, %p160
      %p162 = scmp.ne.s32.totalorder %s154, %s157
      %p163 = scmp.eq.s32.totalorder %s13, 0
      %p164 = por %p162, %p163
      %p165 = scmp.ne.s32.totalorder %s154, %s157
      %p166 = scmp.eq.s32.totalorder %s18, 1
      %p167 = por %p165, %p166
      %p168 = scmp.ne.s32.totalorder %s157, %s158
      %p169 = scmp.eq.s32.totalorder %s18, 0
      %p170 = por %p168, %p169
      %p171 = scmp.ne.s32.totalorder %s157, %s158
      %p172 = scmp.eq.s32.totalorder %s19, 1
      %p173 = por %p171, %p172
      %p175 = scmp.ne.s32.totalorder %s158, %s174
      %p176 = scmp.eq.s32.totalorder %s19, 0
      %p177 = por %p175, %p176
      %p178 = scmp.le.s32.totalorder 1, %s13
      %p179 = scmp.lt.s32.totalorder %s13, 3
      %p180 = pnand %p178, %p179
      %p181 = pneg %p180
      // Predicated region
      $region9: #{my_attention_self_forward.1} parent=5 // pred_check
        _
      $region10: #{my_attention_self_forward.1} parent=5 // pred_check_branch
        %183 = sbr.rel (%p180) target = $region12
      $region11: #{my_attention_self_forward.1} parent=5 // pred_region
        %s184 = ssub.s32 %s13, 1
        // Predicated region
        $region13: #{my_attention_self_forward.1} parent=11 // pred_check
          %p185 = pneg %p60
        $region14: #{my_attention_self_forward.1} parent=11 // pred_check_branch
          %187 = sbr.rel (%p185) target = $region16
        $region15: #{my_attention_self_forward.1} parent=11 // pred_region
          %189 = vsyncadd [#allocation4], 0
          %s190 = sshll.u32 %s1, 4
          %s191 = int_to_ptr.hbm [resolvable:$true] %s190
          %s192 = sshll.u32 [#allocation3], 4
          %s193 = int_to_ptr.vmem [resolvable:$true] %s192
          %198 = dma.hbm_to_vmem [thread:$0]  %s191, 32768, %s193, [#allocation4], 1024, 1024, 64
        $region16: #{my_attention_self_forward.1} parent=11 // pred_fallthru
          _
        // Predicated region
        $region17: #{my_attention_self_forward.1} parent=11 // pred_check
          %p199 = pneg %p81
        $region18: #{my_attention_self_forward.1} parent=11 // pred_check_branch
          %201 = sbr.rel (%p199) target = $region20
        $region19: #{my_attention_self_forward.1} parent=11 // pred_region
          _
        $region20: #{my_attention_self_forward.1} parent=11 // pred_fallthru
          _
        // Predicated region
        $region21: #{my_attention_self_forward.1} parent=11 // pred_check
          %p202 = pneg %p102
        $region22: #{my_attention_self_forward.1} parent=11 // pred_check_branch
          %204 = sbr.rel (%p202) target = $region24
        $region23: #{my_attention_self_forward.1} parent=11 // pred_region
          _
        $region24: #{my_attention_self_forward.1} parent=11 // pred_fallthru
          _
        // Predicated region
        $region25: #{my_attention_self_forward.1} parent=11 // pred_check
          %p205 = pneg %p123
        $region26: #{my_attention_self_forward.1} parent=11 // pred_check_branch
          %207 = sbr.rel (%p205) target = $region28
        $region27: #{my_attention_self_forward.1} parent=11 // pred_region
          _
        $region28: #{my_attention_self_forward.1} parent=11 // pred_fallthru
          _
        // Predicated region
        $region29: #{my_attention_self_forward.1} parent=11 // pred_check
          %p208 = pneg %p144
        $region30: #{my_attention_self_forward.1} parent=11 // pred_check_branch
          %210 = sbr.rel (%p208) target = $region32
        $region31: #{my_attention_self_forward.1} parent=11 // pred_region
          _
        $region32: #{my_attention_self_forward.1} parent=11 // pred_fallthru
          _
      $region12: #{my_attention_self_forward.1} parent=5 // pred_fallthru
        _
      %p211 = scmp.lt.s32.totalorder %s13, 2
      // Predicated region
      $region33: #{my_attention_self_forward.1} parent=5 // pred_check
        %p212 = pneg %p211
      $region34: #{my_attention_self_forward.1} parent=5 // pred_check_branch
        %214 = sbr.rel (%p212) target = $region36
      $region35: #{my_attention_self_forward.1} parent=5 // pred_region
        // Predicated region
        $region37: #{my_attention_self_forward.1} parent=35 // pred_check
          %p215 = pneg %p33
        $region38: #{my_attention_self_forward.1} parent=35 // pred_check_branch
          %217 = sbr.rel (%p215) target = $region40
        $region39: #{my_attention_self_forward.1} parent=35 // pred_region
          %p218 = scmp.lt.s32.totalorder %s13, 1
          %s219 = scalar_select %p218, %s13, 1
          %s220 = smul.addr %s219, 8
          %s221 = smul.addr %s220, 8
          %s222 = scalar_lea.vmem %s0, %s221
        $region40: #{my_attention_self_forward.1} parent=35 // pred_fallthru
          _
      $region36: #{my_attention_self_forward.1} parent=5 // pred_fallthru
        _
      %p223 = scmp.le.s32.totalorder 1, %s13
      %p224 = scmp.lt.s32.totalorder %s13, 3
      %p225 = pnand %p223, %p224
      %p226 = pneg %p225
      // Predicated region
      $region41: #{my_attention_self_forward.1} parent=5 // pred_check
        _
      $region42: #{my_attention_self_forward.1} parent=5 // pred_check_branch
        %228 = sbr.rel (%p225) target = $region44
      $region43: #{my_attention_self_forward.1} parent=5 // pred_region
        %s229 = ssub.s32 %s13, 1
        // Predicated region
        $region45: #{my_attention_self_forward.1} parent=43 // pred_check
          %p230 = pneg %p60
        $region46: #{my_attention_self_forward.1} parent=43 // pred_check_branch
          %232 = sbr.rel (%p230) target = $region48
        $region47: #{my_attention_self_forward.1} parent=43 // pred_region
          %234 = dma.done [#allocation4], 32768
        $region48: #{my_attention_self_forward.1} parent=43 // pred_fallthru
          _
        %p235 = scmp.lt.s32.totalorder %s18, 1
        %s236 = scalar_select %p235, %s18, 1
        %s237 = smul.addr %s236, 8
        %s238 = smul.addr %s237, 8
        %s239 = scalar_lea.vmem %s0, %s238
        %p240 = pneg %p39
        %p241 = pneg %p36
        %p242 = pneg %p60
        %p243 = pneg %p57
        %p244 = pneg %p81
        %p245 = pneg %p78
        %p246 = pneg %p102
        %p247 = pneg %p99
        %p248 = pneg %p123
        %p249 = pneg %p120
        %p250 = pneg %p144
        %p251 = pneg %p141
        %p252 = pneg %p170
        %p253 = pneg %p167
        %p254 = scmp.lt.s32.totalorder %s18, 1
        %s255 = scalar_select %p254, %s18, 1
        %s256 = smul.addr %s255, 32
        %s257 = smul.addr %s256, 8
        %s258 = scalar_lea.vmem %s6, %s257
        %p259 = scmp.lt.s32.totalorder %s18, 1
        %s260 = scalar_select %p259, %s18, 1
        %s261 = smul.addr %s260, 8
        %s262 = smul.addr %s261, 8
        %s263 = scalar_lea.vmem %s0, %s262
        %p264 = scmp.lt.s32.totalorder %s18, 1
        %s265 = scalar_select %p264, %s18, 1
        %s266 = smul.addr %s265, 32
        %s267 = smul.addr %s266, 8
        %s268 = scalar_lea.vmem %s6, %s267
        %v269 = vld [vmem:[%s263] sm:$0xff]
        %v270 = vld [vmem:[%s263 + $0x8] sm:$0xff]
        %v271 = vld [vmem:[%s263 + $0x10] sm:$0xff]
        %v272 = vld [vmem:[%s263 + $0x18] sm:$0xff]
        %v273 = vld [vmem:[%s263 + $0x20] sm:$0xff]
        %v274 = vld [vmem:[%s263 + $0x28] sm:$0xff]
        %v275 = vld [vmem:[%s263 + $0x30] sm:$0xff]
        %v276 = vld [vmem:[%s263 + $0x38] sm:$0xff]
        %277 = vst [vmem:[#allocation2] sm:$0xff] 0.0
        %278 = vst [vmem:[#allocation2 + $0x50] sm:$0xff] 0.0
        %279 = vst [vmem:[#allocation2 + $0xa0] sm:$0xff] 0.0
        %280 = vst [vmem:[#allocation2 + $0xf0] sm:$0xff] 0.0
        %281 = vst [vmem:[#allocation2 + $0x48] sm:$0xff] 0.0
        %282 = vst [vmem:[#allocation2 + $0x98] sm:$0xff] 0.0
        %283 = vst [vmem:[#allocation2 + $0xe8] sm:$0xff] 0.0
        %284 = vst [vmem:[#allocation2 + $0x138] sm:$0xff] 0.0
        %v285 = vld [vmem:[#allocation3] sm:$0xff]
        %v286 = vld [vmem:[#allocation3 + $0x8] sm:$0xff]
        %v287 = vld [vmem:[#allocation3 + $0x40] sm:$0xff]
        %v288 = vld [vmem:[#allocation3 + $0x48] sm:$0xff]
        %v289 = vld [vmem:[#allocation3 + $0x80] sm:$0xff]
        %v290 = vld [vmem:[#allocation3 + $0x88] sm:$0xff]
        %v291 = vld [vmem:[#allocation3 + $0xc0] sm:$0xff]
        %v292 = vld [vmem:[#allocation3 + $0xc8] sm:$0xff]
        %v293 = vld [vmem:[#allocation3 + $0x100] sm:$0xff]
        %v294 = vld [vmem:[#allocation3 + $0x108] sm:$0xff]
        %v295 = vld [vmem:[#allocation3 + $0x140] sm:$0xff]
        %v296 = vld [vmem:[#allocation3 + $0x148] sm:$0xff]
        %v297 = vld [vmem:[#allocation3 + $0x180] sm:$0xff]
        %v298 = vld [vmem:[#allocation3 + $0x188] sm:$0xff]
        %v299 = vld [vmem:[#allocation3 + $0x1c0] sm:$0xff]
        %v300 = vld [vmem:[#allocation3 + $0x1c8] sm:$0xff]
        %v301 = vld [vmem:[#allocation3 + $0x200] sm:$0xff]
        %v302 = vld [vmem:[#allocation3 + $0x208] sm:$0xff]
        %v303 = vld [vmem:[#allocation3 + $0x240] sm:$0xff]
        %v304 = vld [vmem:[#allocation3 + $0x248] sm:$0xff]
        %v305 = vld [vmem:[#allocation3 + $0x280] sm:$0xff]
        %v306 = vld [vmem:[#allocation3 + $0x288] sm:$0xff]
        %v307 = vld [vmem:[#allocation3 + $0x2c0] sm:$0xff]
        %v308 = vld [vmem:[#allocation3 + $0x2c8] sm:$0xff]
        %v309 = vld [vmem:[#allocation3 + $0x300] sm:$0xff]
        %v310 = vld [vmem:[#allocation3 + $0x308] sm:$0xff]
        %v311 = vld [vmem:[#allocation3 + $0x340] sm:$0xff]
        %v312 = vld [vmem:[#allocation3 + $0x348] sm:$0xff]
        %v313 = vld [vmem:[#allocation3 + $0x380] sm:$0xff]
        %v314 = vld [vmem:[#allocation3 + $0x388] sm:$0xff]
        %v315 = vld [vmem:[#allocation3 + $0x3c0] sm:$0xff]
        %v316 = vld [vmem:[#allocation3 + $0x3c8] sm:$0xff]
        %v317 = vld [vmem:[#allocation3 + $0x400] sm:$0xff]
        %v318 = vld [vmem:[#allocation3 + $0x408] sm:$0xff]
        %v319 = vld [vmem:[#allocation3 + $0x440] sm:$0xff]
        %v320 = vld [vmem:[#allocation3 + $0x448] sm:$0xff]
        %v321 = vld [vmem:[#allocation3 + $0x480] sm:$0xff]
        %v322 = vld [vmem:[#allocation3 + $0x488] sm:$0xff]
        %v323 = vld [vmem:[#allocation3 + $0x4c0] sm:$0xff]
        %v324 = vld [vmem:[#allocation3 + $0x4c8] sm:$0xff]
        %v325 = vld [vmem:[#allocation3 + $0x500] sm:$0xff]
        %v326 = vld [vmem:[#allocation3 + $0x508] sm:$0xff]
        %v327 = vld [vmem:[#allocation3 + $0x540] sm:$0xff]
        %v328 = vld [vmem:[#allocation3 + $0x548] sm:$0xff]
        %v329 = vld [vmem:[#allocation3 + $0x580] sm:$0xff]
        %v330 = vld [vmem:[#allocation3 + $0x588] sm:$0xff]
        %v331 = vld [vmem:[#allocation3 + $0x5c0] sm:$0xff]
        %v332 = vld [vmem:[#allocation3 + $0x5c8] sm:$0xff]
        %v333 = vld [vmem:[#allocation3 + $0x600] sm:$0xff]
        %v334 = vld [vmem:[#allocation3 + $0x608] sm:$0xff]
        %v335 = vld [vmem:[#allocation3 + $0x640] sm:$0xff]
        %v336 = vld [vmem:[#allocation3 + $0x648] sm:$0xff]
        %v337 = vld [vmem:[#allocation3 + $0x680] sm:$0xff]
        %v338 = vld [vmem:[#allocation3 + $0x688] sm:$0xff]
        %v339 = vld [vmem:[#allocation3 + $0x6c0] sm:$0xff]
        %v340 = vld [vmem:[#allocation3 + $0x6c8] sm:$0xff]
        %v341 = vld [vmem:[#allocation3 + $0x700] sm:$0xff]
        %v342 = vld [vmem:[#allocation3 + $0x708] sm:$0xff]
        %v343 = vld [vmem:[#allocation3 + $0x740] sm:$0xff]
        %v344 = vld [vmem:[#allocation3 + $0x748] sm:$0xff]
        %v345 = vld [vmem:[#allocation3 + $0x780] sm:$0xff]
        %v346 = vld [vmem:[#allocation3 + $0x788] sm:$0xff]
        %v347 = vld [vmem:[#allocation3 + $0x7c0] sm:$0xff]
        %v348 = vld [vmem:[#allocation3 + $0x7c8] sm:$0xff]
        %349 = vmatpush.msra.mxu0 %v315
        %350 = vmatpush.msra.mxu0 %v313
        %351 = vmatpush.msra.mxu0 %v311
        %352 = vmatpush.msra.mxu0 %v309
        %353 = vmatpush.msra.mxu0 %v307
        %354 = vmatpush.msra.mxu0 %v305
        %355 = vmatpush.msra.mxu0 %v303
        %356 = vmatpush.msra.mxu0 %v301
        %357 = vmatpush.msra.mxu0 %v299
        %358 = vmatpush.msra.mxu0 %v297
        %359 = vmatpush.msra.mxu0 %v295
        %360 = vmatpush.msra.mxu0 %v293
        %361 = vmatpush.msra.mxu0 %v291
        %362 = vmatpush.msra.mxu0 %v289
        %363 = vmatpush.msra.mxu0 %v287
        %364 = vmatpush.msra.mxu0 %v285
        %365 = vmatmul.f32.gmra.mxu0 %v269
        %v366 = vpop.f32.mrf.mxu0
        %v367 = vadd.f32 0.0, %v366
        %368 = vmatmul.f32.gmra.mxu0 %v271
        %v369 = vpop.f32.mrf.mxu0
        %v370 = vadd.f32 0.0, %v369
        %371 = vmatmul.f32.gmra.mxu0 %v273
        %v372 = vpop.f32.mrf.mxu0
        %v373 = vadd.f32 0.0, %v372
        %374 = vmatmul.f32.gmra.mxu0 %v275
        %v375 = vpop.f32.mrf.mxu0
        %v376 = vadd.f32 0.0, %v375
        %377 = vdwg.mxu0
        %378 = vmatpush.msra.mxu0 %v347
        %379 = vmatpush.msra.mxu0 %v345
        %380 = vmatpush.msra.mxu0 %v343
        %381 = vmatpush.msra.mxu0 %v341
        %382 = vmatpush.msra.mxu0 %v339
        %383 = vmatpush.msra.mxu0 %v337
        %384 = vmatpush.msra.mxu0 %v335
        %385 = vmatpush.msra.mxu0 %v333
        %386 = vmatpush.msra.mxu0 %v331
        %387 = vmatpush.msra.mxu0 %v329
        %388 = vmatpush.msra.mxu0 %v327
        %389 = vmatpush.msra.mxu0 %v325
        %390 = vmatpush.msra.mxu0 %v323
        %391 = vmatpush.msra.mxu0 %v321
        %392 = vmatpush.msra.mxu0 %v319
        %393 = vmatpush.msra.mxu0 %v317
        %394 = vmatmul.f32.gmra.mxu0 %v270
        %v395 = vpop.f32.mrf.mxu0
        %v396 = vadd.f32 %v367, %v395
        %397 = vmatmul.f32.gmra.mxu0 %v272
        %v398 = vpop.f32.mrf.mxu0
        %v399 = vadd.f32 %v370, %v398
        %400 = vmatmul.f32.gmra.mxu0 %v274
        %v401 = vpop.f32.mrf.mxu0
        %v402 = vadd.f32 %v373, %v401
        %403 = vmatmul.f32.gmra.mxu0 %v276
        %v404 = vpop.f32.mrf.mxu0
        %v405 = vadd.f32 %v376, %v404
        %406 = vdwg.mxu0
        %407 = vmatpush.msra.mxu0 %v316
        %408 = vmatpush.msra.mxu0 %v314
        %409 = vmatpush.msra.mxu0 %v312
        %410 = vmatpush.msra.mxu0 %v310
        %411 = vmatpush.msra.mxu0 %v308
        %412 = vmatpush.msra.mxu0 %v306
        %413 = vmatpush.msra.mxu0 %v304
        %414 = vmatpush.msra.mxu0 %v302
        %415 = vmatpush.msra.mxu0 %v300
        %416 = vmatpush.msra.mxu0 %v298
        %417 = vmatpush.msra.mxu0 %v296
        %418 = vmatpush.msra.mxu0 %v294
        %419 = vmatpush.msra.mxu0 %v292
        %420 = vmatpush.msra.mxu0 %v290
        %421 = vmatpush.msra.mxu0 %v288
        %422 = vmatpush.msra.mxu0 %v286
        %423 = vmatmul.f32.gmra.mxu0 %v269
        %v424 = vpop.f32.mrf.mxu0
        %v425 = vadd.f32 0.0, %v424
        %426 = vmatmul.f32.gmra.mxu0 %v271
        %v427 = vpop.f32.mrf.mxu0
        %v428 = vadd.f32 0.0, %v427
        %429 = vmatmul.f32.gmra.mxu0 %v273
        %v430 = vpop.f32.mrf.mxu0
        %v431 = vadd.f32 0.0, %v430
        %432 = vmatmul.f32.gmra.mxu0 %v275
        %v433 = vpop.f32.mrf.mxu0
        %v434 = vadd.f32 0.0, %v433
        %435 = vdwg.mxu0
        %436 = vmatpush.msra.mxu0 %v348
        %437 = vmatpush.msra.mxu0 %v346
        %438 = vmatpush.msra.mxu0 %v344
        %439 = vmatpush.msra.mxu0 %v342
        %440 = vmatpush.msra.mxu0 %v340
        %441 = vmatpush.msra.mxu0 %v338
        %442 = vmatpush.msra.mxu0 %v336
        %443 = vmatpush.msra.mxu0 %v334
        %444 = vmatpush.msra.mxu0 %v332
        %445 = vmatpush.msra.mxu0 %v330
        %446 = vmatpush.msra.mxu0 %v328
        %447 = vmatpush.msra.mxu0 %v326
        %448 = vmatpush.msra.mxu0 %v324
        %449 = vmatpush.msra.mxu0 %v322
        %450 = vmatpush.msra.mxu0 %v320
        %451 = vmatpush.msra.mxu0 %v318
        %452 = vmatmul.f32.gmra.mxu0 %v270
        %v453 = vpop.f32.mrf.mxu0
        %v454 = vadd.f32 %v425, %v453
        %455 = vmatmul.f32.gmra.mxu0 %v272
        %v456 = vpop.f32.mrf.mxu0
        %v457 = vadd.f32 %v428, %v456
        %458 = vmatmul.f32.gmra.mxu0 %v274
        %v459 = vpop.f32.mrf.mxu0
        %v460 = vadd.f32 %v431, %v459
        %461 = vmatmul.f32.gmra.mxu0 %v276
        %v462 = vpop.f32.mrf.mxu0
        %v463 = vadd.f32 %v434, %v462
        %464 = vdwg.mxu0
        %465 = vst [vmem:[#allocation2 + $0x8] sm:$0xff] %v396
        %466 = vst [vmem:[#allocation2 + $0x10] sm:$0xff] %v454
        %467 = vst [vmem:[#allocation2 + $0x58] sm:$0xff] %v399
        %468 = vst [vmem:[#allocation2 + $0x60] sm:$0xff] %v457
        %469 = vst [vmem:[#allocation2 + $0xa8] sm:$0xff] %v402
        %470 = vst [vmem:[#allocation2 + $0xb0] sm:$0xff] %v460
        %471 = vst [vmem:[#allocation2 + $0xf8] sm:$0xff] %v405
        %472 = vst [vmem:[#allocation2 + $0x100] sm:$0xff] %v463
        %v473 = vld [vmem:[#allocation3 + $0x10] sm:$0xff]
        %v474 = vld [vmem:[#allocation3 + $0x18] sm:$0xff]
        %v475 = vld [vmem:[#allocation3 + $0x50] sm:$0xff]
        %v476 = vld [vmem:[#allocation3 + $0x58] sm:$0xff]
        %v477 = vld [vmem:[#allocation3 + $0x90] sm:$0xff]
        %v478 = vld [vmem:[#allocation3 + $0x98] sm:$0xff]
        %v479 = vld [vmem:[#allocation3 + $0xd0] sm:$0xff]
        %v480 = vld [vmem:[#allocation3 + $0xd8] sm:$0xff]
        %v481 = vld [vmem:[#allocation3 + $0x110] sm:$0xff]
        %v482 = vld [vmem:[#allocation3 + $0x118] sm:$0xff]
        %v483 = vld [vmem:[#allocation3 + $0x150] sm:$0xff]
        %v484 = vld [vmem:[#allocation3 + $0x158] sm:$0xff]
        %v485 = vld [vmem:[#allocation3 + $0x190] sm:$0xff]
        %v486 = vld [vmem:[#allocation3 + $0x198] sm:$0xff]
        %v487 = vld [vmem:[#allocation3 + $0x1d0] sm:$0xff]
        %v488 = vld [vmem:[#allocation3 + $0x1d8] sm:$0xff]
        %v489 = vld [vmem:[#allocation3 + $0x210] sm:$0xff]
        %v490 = vld [vmem:[#allocation3 + $0x218] sm:$0xff]
        %v491 = vld [vmem:[#allocation3 + $0x250] sm:$0xff]
        %v492 = vld [vmem:[#allocation3 + $0x258] sm:$0xff]
        %v493 = vld [vmem:[#allocation3 + $0x290] sm:$0xff]
        %v494 = vld [vmem:[#allocation3 + $0x298] sm:$0xff]
        %v495 = vld [vmem:[#allocation3 + $0x2d0] sm:$0xff]
        %v496 = vld [vmem:[#allocation3 + $0x2d8] sm:$0xff]
        %v497 = vld [vmem:[#allocation3 + $0x310] sm:$0xff]
        %v498 = vld [vmem:[#allocation3 + $0x318] sm:$0xff]
        %v499 = vld [vmem:[#allocation3 + $0x350] sm:$0xff]
        %v500 = vld [vmem:[#allocation3 + $0x358] sm:$0xff]
        %v501 = vld [vmem:[#allocation3 + $0x390] sm:$0xff]
        %v502 = vld [vmem:[#allocation3 + $0x398] sm:$0xff]
        %v503 = vld [vmem:[#allocation3 + $0x3d0] sm:$0xff]
        %v504 = vld [vmem:[#allocation3 + $0x3d8] sm:$0xff]
        %v505 = vld [vmem:[#allocation3 + $0x410] sm:$0xff]
        %v506 = vld [vmem:[#allocation3 + $0x418] sm:$0xff]
        %v507 = vld [vmem:[#allocation3 + $0x450] sm:$0xff]
        %v508 = vld [vmem:[#allocation3 + $0x458] sm:$0xff]
        %v509 = vld [vmem:[#allocation3 + $0x490] sm:$0xff]
        %v510 = vld [vmem:[#allocation3 + $0x498] sm:$0xff]
        %v511 = vld [vmem:[#allocation3 + $0x4d0] sm:$0xff]
        %v512 = vld [vmem:[#allocation3 + $0x4d8] sm:$0xff]
        %v513 = vld [vmem:[#allocation3 + $0x510] sm:$0xff]
        %v514 = vld [vmem:[#allocation3 + $0x518] sm:$0xff]
        %v515 = vld [vmem:[#allocation3 + $0x550] sm:$0xff]
        %v516 = vld [vmem:[#allocation3 + $0x558] sm:$0xff]
        %v517 = vld [vmem:[#allocation3 + $0x590] sm:$0xff]
        %v518 = vld [vmem:[#allocation3 + $0x598] sm:$0xff]
        %v519 = vld [vmem:[#allocation3 + $0x5d0] sm:$0xff]
        %v520 = vld [vmem:[#allocation3 + $0x5d8] sm:$0xff]
        %v521 = vld [vmem:[#allocation3 + $0x610] sm:$0xff]
        %v522 = vld [vmem:[#allocation3 + $0x618] sm:$0xff]
        %v523 = vld [vmem:[#allocation3 + $0x650] sm:$0xff]
        %v524 = vld [vmem:[#allocation3 + $0x658] sm:$0xff]
        %v525 = vld [vmem:[#allocation3 + $0x690] sm:$0xff]
        %v526 = vld [vmem:[#allocation3 + $0x698] sm:$0xff]
        %v527 = vld [vmem:[#allocation3 + $0x6d0] sm:$0xff]
        %v528 = vld [vmem:[#allocation3 + $0x6d8] sm:$0xff]
        %v529 = vld [vmem:[#allocation3 + $0x710] sm:$0xff]
        %v530 = vld [vmem:[#allocation3 + $0x718] sm:$0xff]
        %v531 = vld [vmem:[#allocation3 + $0x750] sm:$0xff]
        %v532 = vld [vmem:[#allocation3 + $0x758] sm:$0xff]
        %v533 = vld [vmem:[#allocation3 + $0x790] sm:$0xff]
        %v534 = vld [vmem:[#allocation3 + $0x798] sm:$0xff]
        %v535 = vld [vmem:[#allocation3 + $0x7d0] sm:$0xff]
        %v536 = vld [vmem:[#allocation3 + $0x7d8] sm:$0xff]
        %537 = vmatpush.msra.mxu0 %v503
        %538 = vmatpush.msra.mxu0 %v501
        %539 = vmatpush.msra.mxu0 %v499
        %540 = vmatpush.msra.mxu0 %v497
        %541 = vmatpush.msra.mxu0 %v495
        %542 = vmatpush.msra.mxu0 %v493
        %543 = vmatpush.msra.mxu0 %v491
        %544 = vmatpush.msra.mxu0 %v489
        %545 = vmatpush.msra.mxu0 %v487
        %546 = vmatpush.msra.mxu0 %v485
        %547 = vmatpush.msra.mxu0 %v483
        %548 = vmatpush.msra.mxu0 %v481
        %549 = vmatpush.msra.mxu0 %v479
        %550 = vmatpush.msra.mxu0 %v477
        %551 = vmatpush.msra.mxu0 %v475
        %552 = vmatpush.msra.mxu0 %v473
        %553 = vmatmul.f32.gmra.mxu0 %v269
        %v554 = vpop.f32.mrf.mxu0
        %v555 = vadd.f32 0.0, %v554
        %556 = vmatmul.f32.gmra.mxu0 %v271
        %v557 = vpop.f32.mrf.mxu0
        %v558 = vadd.f32 0.0, %v557
        %559 = vmatmul.f32.gmra.mxu0 %v273
        %v560 = vpop.f32.mrf.mxu0
        %v561 = vadd.f32 0.0, %v560
        %562 = vmatmul.f32.gmra.mxu0 %v275
        %v563 = vpop.f32.mrf.mxu0
        %v564 = vadd.f32 0.0, %v563
        %565 = vdwg.mxu0
        %566 = vmatpush.msra.mxu0 %v535
        %567 = vmatpush.msra.mxu0 %v533
        %568 = vmatpush.msra.mxu0 %v531
        %569 = vmatpush.msra.mxu0 %v529
        %570 = vmatpush.msra.mxu0 %v527
        %571 = vmatpush.msra.mxu0 %v525
        %572 = vmatpush.msra.mxu0 %v523
        %573 = vmatpush.msra.mxu0 %v521
        %574 = vmatpush.msra.mxu0 %v519
        %575 = vmatpush.msra.mxu0 %v517
        %576 = vmatpush.msra.mxu0 %v515
        %577 = vmatpush.msra.mxu0 %v513
        %578 = vmatpush.msra.mxu0 %v511
        %579 = vmatpush.msra.mxu0 %v509
        %580 = vmatpush.msra.mxu0 %v507
        %581 = vmatpush.msra.mxu0 %v505
        %582 = vmatmul.f32.gmra.mxu0 %v270
        %v583 = vpop.f32.mrf.mxu0
        %v584 = vadd.f32 %v555, %v583
        %585 = vmatmul.f32.gmra.mxu0 %v272
        %v586 = vpop.f32.mrf.mxu0
        %v587 = vadd.f32 %v558, %v586
        %588 = vmatmul.f32.gmra.mxu0 %v274
        %v589 = vpop.f32.mrf.mxu0
        %v590 = vadd.f32 %v561, %v589
        %591 = vmatmul.f32.gmra.mxu0 %v276
        %v592 = vpop.f32.mrf.mxu0
        %v593 = vadd.f32 %v564, %v592
        %594 = vdwg.mxu0
        %595 = vmatpush.msra.mxu0 %v504
        %596 = vmatpush.msra.mxu0 %v502
        %597 = vmatpush.msra.mxu0 %v500
        %598 = vmatpush.msra.mxu0 %v498
        %599 = vmatpush.msra.mxu0 %v496
        %600 = vmatpush.msra.mxu0 %v494
        %601 = vmatpush.msra.mxu0 %v492
        %602 = vmatpush.msra.mxu0 %v490
        %603 = vmatpush.msra.mxu0 %v488
        %604 = vmatpush.msra.mxu0 %v486
        %605 = vmatpush.msra.mxu0 %v484
        %606 = vmatpush.msra.mxu0 %v482
        %607 = vmatpush.msra.mxu0 %v480
        %608 = vmatpush.msra.mxu0 %v478
        %609 = vmatpush.msra.mxu0 %v476
        %610 = vmatpush.msra.mxu0 %v474
        %611 = vmatmul.f32.gmra.mxu0 %v269
        %v612 = vpop.f32.mrf.mxu0
        %v613 = vadd.f32 0.0, %v612
        %614 = vmatmul.f32.gmra.mxu0 %v271
        %v615 = vpop.f32.mrf.mxu0
        %v616 = vadd.f32 0.0, %v615
        %617 = vmatmul.f32.gmra.mxu0 %v273
        %v618 = vpop.f32.mrf.mxu0
        %v619 = vadd.f32 0.0, %v618
        %620 = vmatmul.f32.gmra.mxu0 %v275
        %v621 = vpop.f32.mrf.mxu0
        %v622 = vadd.f32 0.0, %v621
        %623 = vdwg.mxu0
        %624 = vmatpush.msra.mxu0 %v536
        %625 = vmatpush.msra.mxu0 %v534
        %626 = vmatpush.msra.mxu0 %v532
        %627 = vmatpush.msra.mxu0 %v530
        %628 = vmatpush.msra.mxu0 %v528
        %629 = vmatpush.msra.mxu0 %v526
        %630 = vmatpush.msra.mxu0 %v524
        %631 = vmatpush.msra.mxu0 %v522
        %632 = vmatpush.msra.mxu0 %v520
        %633 = vmatpush.msra.mxu0 %v518
        %634 = vmatpush.msra.mxu0 %v516
        %635 = vmatpush.msra.mxu0 %v514
        %636 = vmatpush.msra.mxu0 %v512
        %637 = vmatpush.msra.mxu0 %v510
        %638 = vmatpush.msra.mxu0 %v508
        %639 = vmatpush.msra.mxu0 %v506
        %640 = vmatmul.f32.gmra.mxu0 %v270
        %v641 = vpop.f32.mrf.mxu0
        %v642 = vadd.f32 %v613, %v641
        %643 = vmatmul.f32.gmra.mxu0 %v272
        %v644 = vpop.f32.mrf.mxu0
        %v645 = vadd.f32 %v616, %v644
        %646 = vmatmul.f32.gmra.mxu0 %v274
        %v647 = vpop.f32.mrf.mxu0
        %v648 = vadd.f32 %v619, %v647
        %649 = vmatmul.f32.gmra.mxu0 %v276
        %v650 = vpop.f32.mrf.mxu0
        %v651 = vadd.f32 %v622, %v650
        %652 = vdwg.mxu0
        %653 = vst [vmem:[#allocation2 + $0x18] sm:$0xff] %v584
        %654 = vst [vmem:[#allocation2 + $0x20] sm:$0xff] %v642
        %655 = vst [vmem:[#allocation2 + $0x68] sm:$0xff] %v587
        %656 = vst [vmem:[#allocation2 + $0x70] sm:$0xff] %v645
        %657 = vst [vmem:[#allocation2 + $0xb8] sm:$0xff] %v590
        %658 = vst [vmem:[#allocation2 + $0xc0] sm:$0xff] %v648
        %659 = vst [vmem:[#allocation2 + $0x108] sm:$0xff] %v593
        %660 = vst [vmem:[#allocation2 + $0x110] sm:$0xff] %v651
        %v661 = vld [vmem:[#allocation3 + $0x20] sm:$0xff]
        %v662 = vld [vmem:[#allocation3 + $0x28] sm:$0xff]
        %v663 = vld [vmem:[#allocation3 + $0x60] sm:$0xff]
        %v664 = vld [vmem:[#allocation3 + $0x68] sm:$0xff]
        %v665 = vld [vmem:[#allocation3 + $0xa0] sm:$0xff]
        %v666 = vld [vmem:[#allocation3 + $0xa8] sm:$0xff]
        %v667 = vld [vmem:[#allocation3 + $0xe0] sm:$0xff]
        %v668 = vld [vmem:[#allocation3 + $0xe8] sm:$0xff]
        %v669 = vld [vmem:[#allocation3 + $0x120] sm:$0xff]
        %v670 = vld [vmem:[#allocation3 + $0x128] sm:$0xff]
        %v671 = vld [vmem:[#allocation3 + $0x160] sm:$0xff]
        %v672 = vld [vmem:[#allocation3 + $0x168] sm:$0xff]
        %v673 = vld [vmem:[#allocation3 + $0x1a0] sm:$0xff]
        %v674 = vld [vmem:[#allocation3 + $0x1a8] sm:$0xff]
        %v675 = vld [vmem:[#allocation3 + $0x1e0] sm:$0xff]
        %v676 = vld [vmem:[#allocation3 + $0x1e8] sm:$0xff]
        %v677 = vld [vmem:[#allocation3 + $0x220] sm:$0xff]
        %v678 = vld [vmem:[#allocation3 + $0x228] sm:$0xff]
        %v679 = vld [vmem:[#allocation3 + $0x260] sm:$0xff]
        %v680 = vld [vmem:[#allocation3 + $0x268] sm:$0xff]
        %v681 = vld [vmem:[#allocation3 + $0x2a0] sm:$0xff]
        %v682 = vld [vmem:[#allocation3 + $0x2a8] sm:$0xff]
        %v683 = vld [vmem:[#allocation3 + $0x2e0] sm:$0xff]
        %v684 = vld [vmem:[#allocation3 + $0x2e8] sm:$0xff]
        %v685 = vld [vmem:[#allocation3 + $0x320] sm:$0xff]
        %v686 = vld [vmem:[#allocation3 + $0x328] sm:$0xff]
        %v687 = vld [vmem:[#allocation3 + $0x360] sm:$0xff]
        %v688 = vld [vmem:[#allocation3 + $0x368] sm:$0xff]
        %v689 = vld [vmem:[#allocation3 + $0x3a0] sm:$0xff]
        %v690 = vld [vmem:[#allocation3 + $0x3a8] sm:$0xff]
        %v691 = vld [vmem:[#allocation3 + $0x3e0] sm:$0xff]
        %v692 = vld [vmem:[#allocation3 + $0x3e8] sm:$0xff]
        %v693 = vld [vmem:[#allocation3 + $0x420] sm:$0xff]
        %v694 = vld [vmem:[#allocation3 + $0x428] sm:$0xff]
        %v695 = vld [vmem:[#allocation3 + $0x460] sm:$0xff]
        %v696 = vld [vmem:[#allocation3 + $0x468] sm:$0xff]
        %v697 = vld [vmem:[#allocation3 + $0x4a0] sm:$0xff]
        %v698 = vld [vmem:[#allocation3 + $0x4a8] sm:$0xff]
        %v699 = vld [vmem:[#allocation3 + $0x4e0] sm:$0xff]
        %v700 = vld [vmem:[#allocation3 + $0x4e8] sm:$0xff]
        %v701 = vld [vmem:[#allocation3 + $0x520] sm:$0xff]
        %v702 = vld [vmem:[#allocation3 + $0x528] sm:$0xff]
        %v703 = vld [vmem:[#allocation3 + $0x560] sm:$0xff]
        %v704 = vld [vmem:[#allocation3 + $0x568] sm:$0xff]
        %v705 = vld [vmem:[#allocation3 + $0x5a0] sm:$0xff]
        %v706 = vld [vmem:[#allocation3 + $0x5a8] sm:$0xff]
        %v707 = vld [vmem:[#allocation3 + $0x5e0] sm:$0xff]
        %v708 = vld [vmem:[#allocation3 + $0x5e8] sm:$0xff]
        %v709 = vld [vmem:[#allocation3 + $0x620] sm:$0xff]
        %v710 = vld [vmem:[#allocation3 + $0x628] sm:$0xff]
        %v711 = vld [vmem:[#allocation3 + $0x660] sm:$0xff]
        %v712 = vld [vmem:[#allocation3 + $0x668] sm:$0xff]
        %v713 = vld [vmem:[#allocation3 + $0x6a0] sm:$0xff]
        %v714 = vld [vmem:[#allocation3 + $0x6a8] sm:$0xff]
        %v715 = vld [vmem:[#allocation3 + $0x6e0] sm:$0xff]
        %v716 = vld [vmem:[#allocation3 + $0x6e8] sm:$0xff]
        %v717 = vld [vmem:[#allocation3 + $0x720] sm:$0xff]
        %v718 = vld [vmem:[#allocation3 + $0x728] sm:$0xff]
        %v719 = vld [vmem:[#allocation3 + $0x760] sm:$0xff]
        %v720 = vld [vmem:[#allocation3 + $0x768] sm:$0xff]
        %v721 = vld [vmem:[#allocation3 + $0x7a0] sm:$0xff]
        %v722 = vld [vmem:[#allocation3 + $0x7a8] sm:$0xff]
        %v723 = vld [vmem:[#allocation3 + $0x7e0] sm:$0xff]
        %v724 = vld [vmem:[#allocation3 + $0x7e8] sm:$0xff]
        %725 = vmatpush.msra.mxu0 %v691
        %726 = vmatpush.msra.mxu0 %v689
        %727 = vmatpush.msra.mxu0 %v687
        %728 = vmatpush.msra.mxu0 %v685
        %729 = vmatpush.msra.mxu0 %v683
        %730 = vmatpush.msra.mxu0 %v681
        %731 = vmatpush.msra.mxu0 %v679
        %732 = vmatpush.msra.mxu0 %v677
        %733 = vmatpush.msra.mxu0 %v675
        %734 = vmatpush.msra.mxu0 %v673
        %735 = vmatpush.msra.mxu0 %v671
        %736 = vmatpush.msra.mxu0 %v669
        %737 = vmatpush.msra.mxu0 %v667
        %738 = vmatpush.msra.mxu0 %v665
        %739 = vmatpush.msra.mxu0 %v663
        %740 = vmatpush.msra.mxu0 %v661
        %741 = vmatmul.f32.gmra.mxu0 %v269
        %v742 = vpop.f32.mrf.mxu0
        %v743 = vadd.f32 0.0, %v742
        %744 = vmatmul.f32.gmra.mxu0 %v271
        %v745 = vpop.f32.mrf.mxu0
        %v746 = vadd.f32 0.0, %v745
        %747 = vmatmul.f32.gmra.mxu0 %v273
        %v748 = vpop.f32.mrf.mxu0
        %v749 = vadd.f32 0.0, %v748
        %750 = vmatmul.f32.gmra.mxu0 %v275
        %v751 = vpop.f32.mrf.mxu0
        %v752 = vadd.f32 0.0, %v751
        %753 = vdwg.mxu0
        %754 = vmatpush.msra.mxu0 %v723
        %755 = vmatpush.msra.mxu0 %v721
        %756 = vmatpush.msra.mxu0 %v719
        %757 = vmatpush.msra.mxu0 %v717
        %758 = vmatpush.msra.mxu0 %v715
        %759 = vmatpush.msra.mxu0 %v713
        %760 = vmatpush.msra.mxu0 %v711
        %761 = vmatpush.msra.mxu0 %v709
        %762 = vmatpush.msra.mxu0 %v707
        %763 = vmatpush.msra.mxu0 %v705
        %764 = vmatpush.msra.mxu0 %v703
        %765 = vmatpush.msra.mxu0 %v701
        %766 = vmatpush.msra.mxu0 %v699
        %767 = vmatpush.msra.mxu0 %v697
        %768 = vmatpush.msra.mxu0 %v695
        %769 = vmatpush.msra.mxu0 %v693
        %770 = vmatmul.f32.gmra.mxu0 %v270
        %v771 = vpop.f32.mrf.mxu0
        %v772 = vadd.f32 %v743, %v771
        %773 = vmatmul.f32.gmra.mxu0 %v272
        %v774 = vpop.f32.mrf.mxu0
        %v775 = vadd.f32 %v746, %v774
        %776 = vmatmul.f32.gmra.mxu0 %v274
        %v777 = vpop.f32.mrf.mxu0
        %v778 = vadd.f32 %v749, %v777
        %779 = vmatmul.f32.gmra.mxu0 %v276
        %v780 = vpop.f32.mrf.mxu0
        %v781 = vadd.f32 %v752, %v780
        %782 = vdwg.mxu0
        %783 = vmatpush.msra.mxu0 %v692
        %784 = vmatpush.msra.mxu0 %v690
        %785 = vmatpush.msra.mxu0 %v688
        %786 = vmatpush.msra.mxu0 %v686
        %787 = vmatpush.msra.mxu0 %v684
        %788 = vmatpush.msra.mxu0 %v682
        %789 = vmatpush.msra.mxu0 %v680
        %790 = vmatpush.msra.mxu0 %v678
        %791 = vmatpush.msra.mxu0 %v676
        %792 = vmatpush.msra.mxu0 %v674
        %793 = vmatpush.msra.mxu0 %v672
        %794 = vmatpush.msra.mxu0 %v670
        %795 = vmatpush.msra.mxu0 %v668
        %796 = vmatpush.msra.mxu0 %v666
        %797 = vmatpush.msra.mxu0 %v664
        %798 = vmatpush.msra.mxu0 %v662
        %799 = vmatmul.f32.gmra.mxu0 %v269
        %v800 = vpop.f32.mrf.mxu0
        %v801 = vadd.f32 0.0, %v800
        %802 = vmatmul.f32.gmra.mxu0 %v271
        %v803 = vpop.f32.mrf.mxu0
        %v804 = vadd.f32 0.0, %v803
        %805 = vmatmul.f32.gmra.mxu0 %v273
        %v806 = vpop.f32.mrf.mxu0
        %v807 = vadd.f32 0.0, %v806
        %808 = vmatmul.f32.gmra.mxu0 %v275
        %v809 = vpop.f32.mrf.mxu0
        %v810 = vadd.f32 0.0, %v809
        %811 = vdwg.mxu0
        %812 = vmatpush.msra.mxu0 %v724
        %813 = vmatpush.msra.mxu0 %v722
        %814 = vmatpush.msra.mxu0 %v720
        %815 = vmatpush.msra.mxu0 %v718
        %816 = vmatpush.msra.mxu0 %v716
        %817 = vmatpush.msra.mxu0 %v714
        %818 = vmatpush.msra.mxu0 %v712
        %819 = vmatpush.msra.mxu0 %v710
        %820 = vmatpush.msra.mxu0 %v708
        %821 = vmatpush.msra.mxu0 %v706
        %822 = vmatpush.msra.mxu0 %v704
        %823 = vmatpush.msra.mxu0 %v702
        %824 = vmatpush.msra.mxu0 %v700
        %825 = vmatpush.msra.mxu0 %v698
        %826 = vmatpush.msra.mxu0 %v696
        %827 = vmatpush.msra.mxu0 %v694
        %828 = vmatmul.f32.gmra.mxu0 %v270
        %v829 = vpop.f32.mrf.mxu0
        %v830 = vadd.f32 %v801, %v829
        %831 = vmatmul.f32.gmra.mxu0 %v272
        %v832 = vpop.f32.mrf.mxu0
        %v833 = vadd.f32 %v804, %v832
        %834 = vmatmul.f32.gmra.mxu0 %v274
        %v835 = vpop.f32.mrf.mxu0
        %v836 = vadd.f32 %v807, %v835
        %837 = vmatmul.f32.gmra.mxu0 %v276
        %v838 = vpop.f32.mrf.mxu0
        %v839 = vadd.f32 %v810, %v838
        %840 = vdwg.mxu0
        %841 = vst [vmem:[#allocation2 + $0x28] sm:$0xff] %v772
        %842 = vst [vmem:[#allocation2 + $0x30] sm:$0xff] %v830
        %843 = vst [vmem:[#allocation2 + $0x78] sm:$0xff] %v775
        %844 = vst [vmem:[#allocation2 + $0x80] sm:$0xff] %v833
        %845 = vst [vmem:[#allocation2 + $0xc8] sm:$0xff] %v778
        %846 = vst [vmem:[#allocation2 + $0xd0] sm:$0xff] %v836
        %847 = vst [vmem:[#allocation2 + $0x118] sm:$0xff] %v781
        %848 = vst [vmem:[#allocation2 + $0x120] sm:$0xff] %v839
        %v849 = vld [vmem:[#allocation3 + $0x30] sm:$0xff]
        %v850 = vld [vmem:[#allocation3 + $0x38] sm:$0xff]
        %v851 = vld [vmem:[#allocation3 + $0x70] sm:$0xff]
        %v852 = vld [vmem:[#allocation3 + $0x78] sm:$0xff]
        %v853 = vld [vmem:[#allocation3 + $0xb0] sm:$0xff]
        %v854 = vld [vmem:[#allocation3 + $0xb8] sm:$0xff]
        %v855 = vld [vmem:[#allocation3 + $0xf0] sm:$0xff]
        %v856 = vld [vmem:[#allocation3 + $0xf8] sm:$0xff]
        %v857 = vld [vmem:[#allocation3 + $0x130] sm:$0xff]
        %v858 = vld [vmem:[#allocation3 + $0x138] sm:$0xff]
        %v859 = vld [vmem:[#allocation3 + $0x170] sm:$0xff]
        %v860 = vld [vmem:[#allocation3 + $0x178] sm:$0xff]
        %v861 = vld [vmem:[#allocation3 + $0x1b0] sm:$0xff]
        %v862 = vld [vmem:[#allocation3 + $0x1b8] sm:$0xff]
        %v863 = vld [vmem:[#allocation3 + $0x1f0] sm:$0xff]
        %v864 = vld [vmem:[#allocation3 + $0x1f8] sm:$0xff]
        %v865 = vld [vmem:[#allocation3 + $0x230] sm:$0xff]
        %v866 = vld [vmem:[#allocation3 + $0x238] sm:$0xff]
        %v867 = vld [vmem:[#allocation3 + $0x270] sm:$0xff]
        %v868 = vld [vmem:[#allocation3 + $0x278] sm:$0xff]
        %v869 = vld [vmem:[#allocation3 + $0x2b0] sm:$0xff]
        %v870 = vld [vmem:[#allocation3 + $0x2b8] sm:$0xff]
        %v871 = vld [vmem:[#allocation3 + $0x2f0] sm:$0xff]
        %v872 = vld [vmem:[#allocation3 + $0x2f8] sm:$0xff]
        %v873 = vld [vmem:[#allocation3 + $0x330] sm:$0xff]
        %v874 = vld [vmem:[#allocation3 + $0x338] sm:$0xff]
        %v875 = vld [vmem:[#allocation3 + $0x370] sm:$0xff]
        %v876 = vld [vmem:[#allocation3 + $0x378] sm:$0xff]
        %v877 = vld [vmem:[#allocation3 + $0x3b0] sm:$0xff]
        %v878 = vld [vmem:[#allocation3 + $0x3b8] sm:$0xff]
        %v879 = vld [vmem:[#allocation3 + $0x3f0] sm:$0xff]
        %v880 = vld [vmem:[#allocation3 + $0x3f8] sm:$0xff]
        %v881 = vld [vmem:[#allocation3 + $0x430] sm:$0xff]
        %v882 = vld [vmem:[#allocation3 + $0x438] sm:$0xff]
        %v883 = vld [vmem:[#allocation3 + $0x470] sm:$0xff]
        %v884 = vld [vmem:[#allocation3 + $0x478] sm:$0xff]
        %v885 = vld [vmem:[#allocation3 + $0x4b0] sm:$0xff]
        %v886 = vld [vmem:[#allocation3 + $0x4b8] sm:$0xff]
        %v887 = vld [vmem:[#allocation3 + $0x4f0] sm:$0xff]
        %v888 = vld [vmem:[#allocation3 + $0x4f8] sm:$0xff]
        %v889 = vld [vmem:[#allocation3 + $0x530] sm:$0xff]
        %v890 = vld [vmem:[#allocation3 + $0x538] sm:$0xff]
        %v891 = vld [vmem:[#allocation3 + $0x570] sm:$0xff]
        %v892 = vld [vmem:[#allocation3 + $0x578] sm:$0xff]
        %v893 = vld [vmem:[#allocation3 + $0x5b0] sm:$0xff]
        %v894 = vld [vmem:[#allocation3 + $0x5b8] sm:$0xff]
        %v895 = vld [vmem:[#allocation3 + $0x5f0] sm:$0xff]
        %v896 = vld [vmem:[#allocation3 + $0x5f8] sm:$0xff]
        %v897 = vld [vmem:[#allocation3 + $0x630] sm:$0xff]
        %v898 = vld [vmem:[#allocation3 + $0x638] sm:$0xff]
        %v899 = vld [vmem:[#allocation3 + $0x670] sm:$0xff]
        %v900 = vld [vmem:[#allocation3 + $0x678] sm:$0xff]
        %v901 = vld [vmem:[#allocation3 + $0x6b0] sm:$0xff]
        %v902 = vld [vmem:[#allocation3 + $0x6b8] sm:$0xff]
        %v903 = vld [vmem:[#allocation3 + $0x6f0] sm:$0xff]
        %v904 = vld [vmem:[#allocation3 + $0x6f8] sm:$0xff]
        %v905 = vld [vmem:[#allocation3 + $0x730] sm:$0xff]
        %v906 = vld [vmem:[#allocation3 + $0x738] sm:$0xff]
        %v907 = vld [vmem:[#allocation3 + $0x770] sm:$0xff]
        %v908 = vld [vmem:[#allocation3 + $0x778] sm:$0xff]
        %v909 = vld [vmem:[#allocation3 + $0x7b0] sm:$0xff]
        %v910 = vld [vmem:[#allocation3 + $0x7b8] sm:$0xff]
        %v911 = vld [vmem:[#allocation3 + $0x7f0] sm:$0xff]
        %v912 = vld [vmem:[#allocation3 + $0x7f8] sm:$0xff]
        %913 = vmatpush.msra.mxu0 %v879
        %914 = vmatpush.msra.mxu0 %v877
        %915 = vmatpush.msra.mxu0 %v875
        %916 = vmatpush.msra.mxu0 %v873
        %917 = vmatpush.msra.mxu0 %v871
        %918 = vmatpush.msra.mxu0 %v869
        %919 = vmatpush.msra.mxu0 %v867
        %920 = vmatpush.msra.mxu0 %v865
        %921 = vmatpush.msra.mxu0 %v863
        %922 = vmatpush.msra.mxu0 %v861
        %923 = vmatpush.msra.mxu0 %v859
        %924 = vmatpush.msra.mxu0 %v857
        %925 = vmatpush.msra.mxu0 %v855
        %926 = vmatpush.msra.mxu0 %v853
        %927 = vmatpush.msra.mxu0 %v851
        %928 = vmatpush.msra.mxu0 %v849
        %929 = vmatmul.f32.gmra.mxu0 %v269
        %v930 = vpop.f32.mrf.mxu0
        %v931 = vadd.f32 0.0, %v930
        %932 = vmatmul.f32.gmra.mxu0 %v271
        %v933 = vpop.f32.mrf.mxu0
        %v934 = vadd.f32 0.0, %v933
        %935 = vmatmul.f32.gmra.mxu0 %v273
        %v936 = vpop.f32.mrf.mxu0
        %v937 = vadd.f32 0.0, %v936
        %938 = vmatmul.f32.gmra.mxu0 %v275
        %v939 = vpop.f32.mrf.mxu0
        %v940 = vadd.f32 0.0, %v939
        %941 = vdwg.mxu0
        %942 = vmatpush.msra.mxu0 %v911
        %943 = vmatpush.msra.mxu0 %v909
        %944 = vmatpush.msra.mxu0 %v907
        %945 = vmatpush.msra.mxu0 %v905
        %946 = vmatpush.msra.mxu0 %v903
        %947 = vmatpush.msra.mxu0 %v901
        %948 = vmatpush.msra.mxu0 %v899
        %949 = vmatpush.msra.mxu0 %v897
        %950 = vmatpush.msra.mxu0 %v895
        %951 = vmatpush.msra.mxu0 %v893
        %952 = vmatpush.msra.mxu0 %v891
        %953 = vmatpush.msra.mxu0 %v889
        %954 = vmatpush.msra.mxu0 %v887
        %955 = vmatpush.msra.mxu0 %v885
        %956 = vmatpush.msra.mxu0 %v883
        %957 = vmatpush.msra.mxu0 %v881
        %958 = vmatmul.f32.gmra.mxu0 %v270
        %v959 = vpop.f32.mrf.mxu0
        %v960 = vadd.f32 %v931, %v959
        %961 = vmatmul.f32.gmra.mxu0 %v272
        %v962 = vpop.f32.mrf.mxu0
        %v963 = vadd.f32 %v934, %v962
        %964 = vmatmul.f32.gmra.mxu0 %v274
        %v965 = vpop.f32.mrf.mxu0
        %v966 = vadd.f32 %v937, %v965
        %967 = vmatmul.f32.gmra.mxu0 %v276
        %v968 = vpop.f32.mrf.mxu0
        %v969 = vadd.f32 %v940, %v968
        %970 = vdwg.mxu0
        %971 = vmatpush.msra.mxu0 %v880
        %972 = vmatpush.msra.mxu0 %v878
        %973 = vmatpush.msra.mxu0 %v876
        %974 = vmatpush.msra.mxu0 %v874
        %975 = vmatpush.msra.mxu0 %v872
        %976 = vmatpush.msra.mxu0 %v870
        %977 = vmatpush.msra.mxu0 %v868
        %978 = vmatpush.msra.mxu0 %v866
        %979 = vmatpush.msra.mxu0 %v864
        %980 = vmatpush.msra.mxu0 %v862
        %981 = vmatpush.msra.mxu0 %v860
        %982 = vmatpush.msra.mxu0 %v858
        %983 = vmatpush.msra.mxu0 %v856
        %984 = vmatpush.msra.mxu0 %v854
        %985 = vmatpush.msra.mxu0 %v852
        %986 = vmatpush.msra.mxu0 %v850
        %987 = vmatmul.f32.gmra.mxu0 %v269
        %v988 = vpop.f32.mrf.mxu0
        %v989 = vadd.f32 0.0, %v988
        %990 = vmatmul.f32.gmra.mxu0 %v271
        %v991 = vpop.f32.mrf.mxu0
        %v992 = vadd.f32 0.0, %v991
        %993 = vmatmul.f32.gmra.mxu0 %v273
        %v994 = vpop.f32.mrf.mxu0
        %v995 = vadd.f32 0.0, %v994
        %996 = vmatmul.f32.gmra.mxu0 %v275
        %v997 = vpop.f32.mrf.mxu0
        %v998 = vadd.f32 0.0, %v997
        %999 = vdwg.mxu0
        %1000 = vmatpush.msra.mxu0 %v912
        %1001 = vmatpush.msra.mxu0 %v910
        %1002 = vmatpush.msra.mxu0 %v908
        %1003 = vmatpush.msra.mxu0 %v906
        %1004 = vmatpush.msra.mxu0 %v904
        %1005 = vmatpush.msra.mxu0 %v902
        %1006 = vmatpush.msra.mxu0 %v900
        %1007 = vmatpush.msra.mxu0 %v898
        %1008 = vmatpush.msra.mxu0 %v896
        %1009 = vmatpush.msra.mxu0 %v894
        %1010 = vmatpush.msra.mxu0 %v892
        %1011 = vmatpush.msra.mxu0 %v890
        %1012 = vmatpush.msra.mxu0 %v888
        %1013 = vmatpush.msra.mxu0 %v886
        %1014 = vmatpush.msra.mxu0 %v884
        %1015 = vmatpush.msra.mxu0 %v882
        %1016 = vmatmul.f32.gmra.mxu0 %v270
        %v1017 = vpop.f32.mrf.mxu0
        %v1018 = vadd.f32 %v989, %v1017
        %1019 = vmatmul.f32.gmra.mxu0 %v272
        %v1020 = vpop.f32.mrf.mxu0
        %v1021 = vadd.f32 %v992, %v1020
        %1022 = vmatmul.f32.gmra.mxu0 %v274
        %v1023 = vpop.f32.mrf.mxu0
        %v1024 = vadd.f32 %v995, %v1023
        %1025 = vmatmul.f32.gmra.mxu0 %v276
        %v1026 = vpop.f32.mrf.mxu0
        %v1027 = vadd.f32 %v998, %v1026
        %1028 = vdwg.mxu0
        %1029 = vst [vmem:[#allocation2 + $0x38] sm:$0xff] %v960
        %1030 = vst [vmem:[#allocation2 + $0x40] sm:$0xff] %v1018
        %1031 = vst [vmem:[#allocation2 + $0x88] sm:$0xff] %v963
        %1032 = vst [vmem:[#allocation2 + $0x90] sm:$0xff] %v1021
        %1033 = vst [vmem:[#allocation2 + $0xd8] sm:$0xff] %v966
        %1034 = vst [vmem:[#allocation2 + $0xe0] sm:$0xff] %v1024
        %1035 = vst [vmem:[#allocation2 + $0x128] sm:$0xff] %v969
        %1036 = vst [vmem:[#allocation2 + $0x130] sm:$0xff] %v1027
        %v1037 = vld [vmem:[%s2] sm:$0xff]
        %v1038 = vld [vmem:[%s2 + $0x8] sm:$0xff]
        %v1039 = vld [vmem:[%s2 + $0x10] sm:$0xff]
        %v1040 = vld [vmem:[%s2 + $0x18] sm:$0xff]
        %v1041 = vld [vmem:[%s2 + $0x20] sm:$0xff]
        %v1042 = vld [vmem:[%s2 + $0x28] sm:$0xff]
        %v1043 = vld [vmem:[%s2 + $0x30] sm:$0xff]
        %v1044 = vld [vmem:[%s2 + $0x38] sm:$0xff]
        %v1045 = vld [vmem:[%s2 + $0x40] sm:$0xff]
        %v1046 = vld [vmem:[%s2 + $0x48] sm:$0xff]
        %v1047 = vld [vmem:[%s2 + $0x50] sm:$0xff]
        %v1048 = vld [vmem:[%s2 + $0x58] sm:$0xff]
        %v1049 = vld [vmem:[%s2 + $0x60] sm:$0xff]
        %v1050 = vld [vmem:[%s2 + $0x68] sm:$0xff]
        %v1051 = vld [vmem:[%s2 + $0x70] sm:$0xff]
        %v1052 = vld [vmem:[%s2 + $0x78] sm:$0xff]
        %v1053 = vld [vmem:[%s2 + $0x80] sm:$0xff]
        %v1054 = vld [vmem:[%s2 + $0x88] sm:$0xff]
        %v1055 = vld [vmem:[%s2 + $0x90] sm:$0xff]
        %v1056 = vld [vmem:[%s2 + $0x98] sm:$0xff]
        %v1057 = vld [vmem:[%s2 + $0xa0] sm:$0xff]
        %v1058 = vld [vmem:[%s2 + $0xa8] sm:$0xff]
        %v1059 = vld [vmem:[%s2 + $0xb0] sm:$0xff]
        %v1060 = vld [vmem:[%s2 + $0xb8] sm:$0xff]
        %v1061 = vld [vmem:[%s2 + $0xc0] sm:$0xff]
        %v1062 = vld [vmem:[%s2 + $0xc8] sm:$0xff]
        %v1063 = vld [vmem:[%s2 + $0xd0] sm:$0xff]
        %v1064 = vld [vmem:[%s2 + $0xd8] sm:$0xff]
        %v1065 = vld [vmem:[%s2 + $0xe0] sm:$0xff]
        %v1066 = vld [vmem:[%s2 + $0xe8] sm:$0xff]
        %v1067 = vld [vmem:[%s2 + $0xf0] sm:$0xff]
        %v1068 = vld [vmem:[%s2 + $0xf8] sm:$0xff]
        %1069 = vmatpush.msra.mxu0 %v1052
        %1070 = vmatpush.msra.mxu0 %v1051
        %1071 = vmatpush.msra.mxu0 %v1050
        %1072 = vmatpush.msra.mxu0 %v1049
        %1073 = vmatpush.msra.mxu0 %v1048
        %1074 = vmatpush.msra.mxu0 %v1047
        %1075 = vmatpush.msra.mxu0 %v1046
        %1076 = vmatpush.msra.mxu0 %v1045
        %1077 = vmatpush.msra.mxu0 %v1044
        %1078 = vmatpush.msra.mxu0 %v1043
        %1079 = vmatpush.msra.mxu0 %v1042
        %1080 = vmatpush.msra.mxu0 %v1041
        %1081 = vmatpush.msra.mxu0 %v1040
        %1082 = vmatpush.msra.mxu0 %v1039
        %1083 = vmatpush.msra.mxu0 %v1038
        %1084 = vmatpush.msra.mxu0 %v1037
        %1085 = vmatmul.f32.gmra.mxu0 %v269
        %v1086 = vpop.f32.mrf.mxu0
        %v1087 = vadd.f32 0.0, %v1086
        %1088 = vmatmul.f32.gmra.mxu0 %v271
        %v1089 = vpop.f32.mrf.mxu0
        %v1090 = vadd.f32 0.0, %v1089
        %1091 = vmatmul.f32.gmra.mxu0 %v273
        %v1092 = vpop.f32.mrf.mxu0
        %v1093 = vadd.f32 0.0, %v1092
        %1094 = vmatmul.f32.gmra.mxu0 %v275
        %v1095 = vpop.f32.mrf.mxu0
        %v1096 = vadd.f32 0.0, %v1095
        %1097 = vdwg.mxu0
        %1098 = vmatpush.msra.mxu0 %v1068
        %1099 = vmatpush.msra.mxu0 %v1067
        %1100 = vmatpush.msra.mxu0 %v1066
        %1101 = vmatpush.msra.mxu0 %v1065
        %1102 = vmatpush.msra.mxu0 %v1064
        %1103 = vmatpush.msra.mxu0 %v1063
        %1104 = vmatpush.msra.mxu0 %v1062
        %1105 = vmatpush.msra.mxu0 %v1061
        %1106 = vmatpush.msra.mxu0 %v1060
        %1107 = vmatpush.msra.mxu0 %v1059
        %1108 = vmatpush.msra.mxu0 %v1058
        %1109 = vmatpush.msra.mxu0 %v1057
        %1110 = vmatpush.msra.mxu0 %v1056
        %1111 = vmatpush.msra.mxu0 %v1055
        %1112 = vmatpush.msra.mxu0 %v1054
        %1113 = vmatpush.msra.mxu0 %v1053
        %1114 = vmatmul.f32.gmra.mxu0 %v270
        %v1115 = vpop.f32.mrf.mxu0
        %v1116 = vadd.f32 %v1087, %v1115
        %1117 = vmatmul.f32.gmra.mxu0 %v272
        %v1118 = vpop.f32.mrf.mxu0
        %v1119 = vadd.f32 %v1090, %v1118
        %1120 = vmatmul.f32.gmra.mxu0 %v274
        %v1121 = vpop.f32.mrf.mxu0
        %v1122 = vadd.f32 %v1093, %v1121
        %1123 = vmatmul.f32.gmra.mxu0 %v276
        %v1124 = vpop.f32.mrf.mxu0
        %v1125 = vadd.f32 %v1096, %v1124
        %1126 = vdwg.mxu0
        %v1127 = vld [vmem:[%s4] sm:$0xff]
        %v1128 = vld [vmem:[%s4 + $0x8] sm:$0xff]
        %v1129 = vld [vmem:[%s4 + $0x10] sm:$0xff]
        %v1130 = vld [vmem:[%s4 + $0x18] sm:$0xff]
        %1132 = vset.pattern.permute.xlu0 9
        %1133 = vperm.xlu0 %1132, %v1127
        %v1134 = vpop.permute.xlu0 %1133
        %1137 = vset.pattern.permute.xlu0 9
        %1138 = vperm.xlu0 %1137, %v1128
        %v1139 = vpop.permute.xlu0 %1138
        %1142 = vset.pattern.permute.xlu0 9
        %1143 = vperm.xlu0 %1142, %v1129
        %v1144 = vpop.permute.xlu0 %1143
        %1147 = vset.pattern.permute.xlu0 9
        %1148 = vperm.xlu0 %1147, %v1130
        %v1149 = vpop.permute.xlu0 %1148
        %v1151 = vmul.f32 %v1116, %v1134
        %v1152 = vmul.f32 %v1119, %v1139
        %v1153 = vmul.f32 %v1122, %v1144
        %v1154 = vmul.f32 %v1125, %v1149
        %v1155 = vadd.f32 %v1151, 0.0
        %v1156 = vadd.f32 %v1152, 0.0
        %v1157 = vadd.f32 %v1153, 0.0
        %v1158 = vadd.f32 %v1154, 0.0
        %1159 = vset.pattern.permute.xlu0 10
        %1160 = vperm.xlu0 %1159, %v1127
        %v1161 = vpop.permute.xlu0 %1160
        %1163 = vset.pattern.permute.xlu0 10
        %1164 = vperm.xlu0 %1163, %v1128
        %v1165 = vpop.permute.xlu0 %1164
        %1167 = vset.pattern.permute.xlu0 10
        %1168 = vperm.xlu0 %1167, %v1129
        %v1169 = vpop.permute.xlu0 %1168
        %1171 = vset.pattern.permute.xlu0 10
        %1172 = vperm.xlu0 %1171, %v1130
        %v1173 = vpop.permute.xlu0 %1172
        %v1175 = vmul.f32 %v1116, %v1161
        %v1176 = vmul.f32 %v1119, %v1165
        %v1177 = vmul.f32 %v1122, %v1169
        %v1178 = vmul.f32 %v1125, %v1173
        %1183 = vrot.lane.b32.xlu0 %v1175, 124
        %v1184 = vpop.permute.xlu0 %1183
        %1185 = vrot.lane.b32.xlu0 %v1176, 124
        %v1186 = vpop.permute.xlu0 %1185
        %1187 = vrot.lane.b32.xlu0 %v1177, 124
        %v1188 = vpop.permute.xlu0 %1187
        %1189 = vrot.lane.b32.xlu0 %v1178, 124
        %v1190 = vpop.permute.xlu0 %1189
        %v1195 = vadd.f32 %v1155, %v1184
        %v1196 = vadd.f32 %v1156, %v1186
        %v1197 = vadd.f32 %v1157, %v1188
        %v1198 = vadd.f32 %v1158, %v1190
        %1199 = vset.pattern.permute.xlu0 11
        %1200 = vperm.xlu0 %1199, %v1127
        %v1201 = vpop.permute.xlu0 %1200
        %1203 = vset.pattern.permute.xlu0 11
        %1204 = vperm.xlu0 %1203, %v1128
        %v1205 = vpop.permute.xlu0 %1204
        %1207 = vset.pattern.permute.xlu0 11
        %1208 = vperm.xlu0 %1207, %v1129
        %v1209 = vpop.permute.xlu0 %1208
        %1211 = vset.pattern.permute.xlu0 11
        %1212 = vperm.xlu0 %1211, %v1130
        %v1213 = vpop.permute.xlu0 %1212
        %v1215 = vmul.f32 %v1116, %v1201
        %v1216 = vmul.f32 %v1119, %v1205
        %v1217 = vmul.f32 %v1122, %v1209
        %v1218 = vmul.f32 %v1125, %v1213
        %1223 = vrot.lane.b32.xlu0 %v1215, 120
        %v1224 = vpop.permute.xlu0 %1223
        %1225 = vrot.lane.b32.xlu0 %v1216, 120
        %v1226 = vpop.permute.xlu0 %1225
        %1227 = vrot.lane.b32.xlu0 %v1217, 120
        %v1228 = vpop.permute.xlu0 %1227
        %1229 = vrot.lane.b32.xlu0 %v1218, 120
        %v1230 = vpop.permute.xlu0 %1229
        %v1235 = vadd.f32 %v1195, %v1224
        %v1236 = vadd.f32 %v1196, %v1226
        %v1237 = vadd.f32 %v1197, %v1228
        %v1238 = vadd.f32 %v1198, %v1230
        %1239 = vset.pattern.permute.xlu0 12
        %1240 = vperm.xlu0 %1239, %v1127
        %v1241 = vpop.permute.xlu0 %1240
        %1243 = vset.pattern.permute.xlu0 12
        %1244 = vperm.xlu0 %1243, %v1128
        %v1245 = vpop.permute.xlu0 %1244
        %1247 = vset.pattern.permute.xlu0 12
        %1248 = vperm.xlu0 %1247, %v1129
        %v1249 = vpop.permute.xlu0 %1248
        %1251 = vset.pattern.permute.xlu0 12
        %1252 = vperm.xlu0 %1251, %v1130
        %v1253 = vpop.permute.xlu0 %1252
        %v1255 = vmul.f32 %v1116, %v1241
        %v1256 = vmul.f32 %v1119, %v1245
        %v1257 = vmul.f32 %v1122, %v1249
        %v1258 = vmul.f32 %v1125, %v1253
        %1263 = vrot.lane.b32.xlu0 %v1255, 116
        %v1264 = vpop.permute.xlu0 %1263
        %1265 = vrot.lane.b32.xlu0 %v1256, 116
        %v1266 = vpop.permute.xlu0 %1265
        %1267 = vrot.lane.b32.xlu0 %v1257, 116
        %v1268 = vpop.permute.xlu0 %1267
        %1269 = vrot.lane.b32.xlu0 %v1258, 116
        %v1270 = vpop.permute.xlu0 %1269
        %v1275 = vadd.f32 %v1235, %v1264
        %v1276 = vadd.f32 %v1236, %v1266
        %v1277 = vadd.f32 %v1237, %v1268
        %v1278 = vadd.f32 %v1238, %v1270
        %1279 = vset.pattern.permute.xlu0 13
        %1280 = vperm.xlu0 %1279, %v1127
        %v1281 = vpop.permute.xlu0 %1280
        %1283 = vset.pattern.permute.xlu0 13
        %1284 = vperm.xlu0 %1283, %v1128
        %v1285 = vpop.permute.xlu0 %1284
        %1287 = vset.pattern.permute.xlu0 13
        %1288 = vperm.xlu0 %1287, %v1129
        %v1289 = vpop.permute.xlu0 %1288
        %1291 = vset.pattern.permute.xlu0 13
        %1292 = vperm.xlu0 %1291, %v1130
        %v1293 = vpop.permute.xlu0 %1292
        %v1295 = vmul.f32 %v1116, %v1281
        %v1296 = vmul.f32 %v1119, %v1285
        %v1297 = vmul.f32 %v1122, %v1289
        %v1298 = vmul.f32 %v1125, %v1293
        %1303 = vrot.lane.b32.xlu0 %v1295, 112
        %v1304 = vpop.permute.xlu0 %1303
        %1305 = vrot.lane.b32.xlu0 %v1296, 112
        %v1306 = vpop.permute.xlu0 %1305
        %1307 = vrot.lane.b32.xlu0 %v1297, 112
        %v1308 = vpop.permute.xlu0 %1307
        %1309 = vrot.lane.b32.xlu0 %v1298, 112
        %v1310 = vpop.permute.xlu0 %1309
        %v1315 = vadd.f32 %v1275, %v1304
        %v1316 = vadd.f32 %v1276, %v1306
        %v1317 = vadd.f32 %v1277, %v1308
        %v1318 = vadd.f32 %v1278, %v1310
        %1319 = vset.pattern.permute.xlu0 14
        %1320 = vperm.xlu0 %1319, %v1127
        %v1321 = vpop.permute.xlu0 %1320
        %1323 = vset.pattern.permute.xlu0 14
        %1324 = vperm.xlu0 %1323, %v1128
        %v1325 = vpop.permute.xlu0 %1324
        %1327 = vset.pattern.permute.xlu0 14
        %1328 = vperm.xlu0 %1327, %v1129
        %v1329 = vpop.permute.xlu0 %1328
        %1331 = vset.pattern.permute.xlu0 14
        %1332 = vperm.xlu0 %1331, %v1130
        %v1333 = vpop.permute.xlu0 %1332
        %v1335 = vmul.f32 %v1116, %v1321
        %v1336 = vmul.f32 %v1119, %v1325
        %v1337 = vmul.f32 %v1122, %v1329
        %v1338 = vmul.f32 %v1125, %v1333
        %1343 = vrot.lane.b32.xlu0 %v1335, 108
        %v1344 = vpop.permute.xlu0 %1343
        %1345 = vrot.lane.b32.xlu0 %v1336, 108
        %v1346 = vpop.permute.xlu0 %1345
        %1347 = vrot.lane.b32.xlu0 %v1337, 108
        %v1348 = vpop.permute.xlu0 %1347
        %1349 = vrot.lane.b32.xlu0 %v1338, 108
        %v1350 = vpop.permute.xlu0 %1349
        %v1355 = vadd.f32 %v1315, %v1344
        %v1356 = vadd.f32 %v1316, %v1346
        %v1357 = vadd.f32 %v1317, %v1348
        %v1358 = vadd.f32 %v1318, %v1350
        %1359 = vset.pattern.permute.xlu0 15
        %1360 = vperm.xlu0 %1359, %v1127
        %v1361 = vpop.permute.xlu0 %1360
        %1363 = vset.pattern.permute.xlu0 15
        %1364 = vperm.xlu0 %1363, %v1128
        %v1365 = vpop.permute.xlu0 %1364
        %1367 = vset.pattern.permute.xlu0 15
        %1368 = vperm.xlu0 %1367, %v1129
        %v1369 = vpop.permute.xlu0 %1368
        %1371 = vset.pattern.permute.xlu0 15
        %1372 = vperm.xlu0 %1371, %v1130
        %v1373 = vpop.permute.xlu0 %1372
        %v1375 = vmul.f32 %v1116, %v1361
        %v1376 = vmul.f32 %v1119, %v1365
        %v1377 = vmul.f32 %v1122, %v1369
        %v1378 = vmul.f32 %v1125, %v1373
        %1383 = vrot.lane.b32.xlu0 %v1375, 104
        %v1384 = vpop.permute.xlu0 %1383
        %1385 = vrot.lane.b32.xlu0 %v1376, 104
        %v1386 = vpop.permute.xlu0 %1385
        %1387 = vrot.lane.b32.xlu0 %v1377, 104
        %v1388 = vpop.permute.xlu0 %1387
        %1389 = vrot.lane.b32.xlu0 %v1378, 104
        %v1390 = vpop.permute.xlu0 %1389
        %v1395 = vadd.f32 %v1355, %v1384
        %v1396 = vadd.f32 %v1356, %v1386
        %v1397 = vadd.f32 %v1357, %v1388
        %v1398 = vadd.f32 %v1358, %v1390
        %1399 = vset.pattern.permute.xlu0 16
        %1400 = vperm.xlu0 %1399, %v1127
        %v1401 = vpop.permute.xlu0 %1400
        %1403 = vset.pattern.permute.xlu0 16
        %1404 = vperm.xlu0 %1403, %v1128
        %v1405 = vpop.permute.xlu0 %1404
        %1407 = vset.pattern.permute.xlu0 16
        %1408 = vperm.xlu0 %1407, %v1129
        %v1409 = vpop.permute.xlu0 %1408
        %1411 = vset.pattern.permute.xlu0 16
        %1412 = vperm.xlu0 %1411, %v1130
        %v1413 = vpop.permute.xlu0 %1412
        %v1415 = vmul.f32 %v1116, %v1401
        %v1416 = vmul.f32 %v1119, %v1405
        %v1417 = vmul.f32 %v1122, %v1409
        %v1418 = vmul.f32 %v1125, %v1413
        %1423 = vrot.lane.b32.xlu0 %v1415, 100
        %v1424 = vpop.permute.xlu0 %1423
        %1425 = vrot.lane.b32.xlu0 %v1416, 100
        %v1426 = vpop.permute.xlu0 %1425
        %1427 = vrot.lane.b32.xlu0 %v1417, 100
        %v1428 = vpop.permute.xlu0 %1427
        %1429 = vrot.lane.b32.xlu0 %v1418, 100
        %v1430 = vpop.permute.xlu0 %1429
        %v1435 = vadd.f32 %v1395, %v1424
        %v1436 = vadd.f32 %v1396, %v1426
        %v1437 = vadd.f32 %v1397, %v1428
        %v1438 = vadd.f32 %v1398, %v1430
        %1439 = vset.pattern.permute.xlu0 17
        %1440 = vperm.xlu0 %1439, %v1127
        %v1441 = vpop.permute.xlu0 %1440
        %1443 = vset.pattern.permute.xlu0 17
        %1444 = vperm.xlu0 %1443, %v1128
        %v1445 = vpop.permute.xlu0 %1444
        %1447 = vset.pattern.permute.xlu0 17
        %1448 = vperm.xlu0 %1447, %v1129
        %v1449 = vpop.permute.xlu0 %1448
        %1451 = vset.pattern.permute.xlu0 17
        %1452 = vperm.xlu0 %1451, %v1130
        %v1453 = vpop.permute.xlu0 %1452
        %v1455 = vmul.f32 %v1116, %v1441
        %v1456 = vmul.f32 %v1119, %v1445
        %v1457 = vmul.f32 %v1122, %v1449
        %v1458 = vmul.f32 %v1125, %v1453
        %1463 = vrot.lane.b32.xlu0 %v1455, 96
        %v1464 = vpop.permute.xlu0 %1463
        %1465 = vrot.lane.b32.xlu0 %v1456, 96
        %v1466 = vpop.permute.xlu0 %1465
        %1467 = vrot.lane.b32.xlu0 %v1457, 96
        %v1468 = vpop.permute.xlu0 %1467
        %1469 = vrot.lane.b32.xlu0 %v1458, 96
        %v1470 = vpop.permute.xlu0 %1469
        %v1475 = vadd.f32 %v1435, %v1464
        %v1476 = vadd.f32 %v1436, %v1466
        %v1477 = vadd.f32 %v1437, %v1468
        %v1478 = vadd.f32 %v1438, %v1470
        %1479 = vset.pattern.permute.xlu0 19
        %1480 = vperm.xlu0 %1479, %v1127
        %v1481 = vpop.permute.xlu0 %1480
        %1483 = vset.pattern.permute.xlu0 19
        %1484 = vperm.xlu0 %1483, %v1128
        %v1485 = vpop.permute.xlu0 %1484
        %1487 = vset.pattern.permute.xlu0 19
        %1488 = vperm.xlu0 %1487, %v1129
        %v1489 = vpop.permute.xlu0 %1488
        %1491 = vset.pattern.permute.xlu0 19
        %1492 = vperm.xlu0 %1491, %v1130
        %v1493 = vpop.permute.xlu0 %1492
        %v1495 = vadd.f32 %v1475, %v1481
        %v1496 = vadd.f32 %v1476, %v1485
        %v1497 = vadd.f32 %v1477, %v1489
        %v1498 = vadd.f32 %v1478, %v1493
        %v1499 = vld [vmem:[%s5] sm:$0xff]
        %v1500 = vld [vmem:[%s5 + $0x8] sm:$0xff]
        %v1501 = vld [vmem:[%s5 + $0x10] sm:$0xff]
        %v1502 = vld [vmem:[%s5 + $0x18] sm:$0xff]
        %v1503 = vld [vmem:[%s5 + $0x20] sm:$0xff]
        %v1504 = vld [vmem:[%s5 + $0x28] sm:$0xff]
        %v1505 = vld [vmem:[%s5 + $0x30] sm:$0xff]
        %v1506 = vld [vmem:[%s5 + $0x38] sm:$0xff]
        %v1507 = vld [vmem:[%s5 + $0x40] sm:$0xff]
        %v1508 = vld [vmem:[%s5 + $0x48] sm:$0xff]
        %v1509 = vld [vmem:[%s5 + $0x50] sm:$0xff]
        %v1510 = vld [vmem:[%s5 + $0x58] sm:$0xff]
        %v1511 = vld [vmem:[%s5 + $0x60] sm:$0xff]
        %v1512 = vld [vmem:[%s5 + $0x68] sm:$0xff]
        %v1513 = vld [vmem:[%s5 + $0x70] sm:$0xff]
        %v1514 = vld [vmem:[%s5 + $0x78] sm:$0xff]
        %v1515 = vld [vmem:[%s5 + $0x80] sm:$0x1]
        %v1516 = vld [vmem:[%s5 + $0x88] sm:$0x1]
        %1517 = vset.pattern.permute.xlu0 20
        %1518 = vperm.xlu0 %1517, %v1127
        %v1519 = vpop.permute.xlu0 %1518
        %1521 = vset.pattern.permute.xlu0 20
        %1522 = vperm.xlu0 %1521, %v1128
        %v1523 = vpop.permute.xlu0 %1522
        %1525 = vset.pattern.permute.xlu0 20
        %1526 = vperm.xlu0 %1525, %v1129
        %v1527 = vpop.permute.xlu0 %1526
        %1529 = vset.pattern.permute.xlu0 20
        %1530 = vperm.xlu0 %1529, %v1130
        %v1531 = vpop.permute.xlu0 %1530
        %vm1533 = vcmask 261120
        %v1535 = vsel %vm1533, %v1507, 0
        %v1538 = vsel %vm1533, %v1508, 0
        %v1541 = vsel %vm1533, %v1509, 0
        %v1544 = vsel %vm1533, %v1510, 0
        %1546 = vmatpush.msra.mxu0 0.0
        %1547 = vmatpush.msra.mxu0 0.0
        %1548 = vmatpush.msra.mxu0 0.0
        %1549 = vmatpush.msra.mxu0 0.0
        %1550 = vmatpush.msra.mxu0 0.0
        %1551 = vmatpush.msra.mxu0 0.0
        %1552 = vmatpush.msra.mxu0 0.0
        %1553 = vmatpush.msra.mxu0 0.0
        %1554 = vmatpush.msra.mxu0 0.0
        %1555 = vmatpush.msra.mxu0 0.0
        %1556 = vmatpush.msra.mxu0 0.0
        %1557 = vmatpush.msra.mxu0 0.0
        %1558 = vmatpush.msra.mxu0 %v1125
        %1559 = vmatpush.msra.mxu0 %v1122
        %1560 = vmatpush.msra.mxu0 %v1119
        %1561 = vmatpush.msra.mxu0 %v1116
        %1562 = vmatmul.f32.gmra.mxu0 %v1535
        %v1563 = vpop.f32.mrf.mxu0
        %v1564 = vadd.f32 %v1519, %v1563
        %1565 = vmatmul.f32.gmra.mxu0 %v1538
        %v1566 = vpop.f32.mrf.mxu0
        %v1567 = vadd.f32 %v1523, %v1566
        %1568 = vmatmul.f32.gmra.mxu0 %v1541
        %v1569 = vpop.f32.mrf.mxu0
        %v1570 = vadd.f32 %v1527, %v1569
        %1571 = vmatmul.f32.gmra.mxu0 %v1544
        %v1572 = vpop.f32.mrf.mxu0
        %v1573 = vadd.f32 %v1531, %v1572
        %1574 = vdwg.mxu0
        %v1576 = vsel %vm1533, %v1511, 0
        %v1579 = vsel %vm1533, %v1512, 0
        %v1582 = vsel %vm1533, %v1513, 0
        %v1585 = vsel %vm1533, %v1514, 0
        %1587 = vmatpush.msra.mxu0 0.0
        %1588 = vmatpush.msra.mxu0 0.0
        %1589 = vmatpush.msra.mxu0 0.0
        %1590 = vmatpush.msra.mxu0 0.0
        %1591 = vmatpush.msra.mxu0 0.0
        %1592 = vmatpush.msra.mxu0 0.0
        %1593 = vmatpush.msra.mxu0 0.0
        %1594 = vmatpush.msra.mxu0 0.0
        %1595 = vmatpush.msra.mxu0 0.0
        %1596 = vmatpush.msra.mxu0 0.0
        %1597 = vmatpush.msra.mxu0 0.0
        %1598 = vmatpush.msra.mxu0 0.0
        %1599 = vmatpush.msra.mxu0 %v1573
        %1600 = vmatpush.msra.mxu0 %v1570
        %1601 = vmatpush.msra.mxu0 %v1567
        %1602 = vmatpush.msra.mxu0 %v1564
        %1603 = vmatmul.f32.gmra.mxu0 %v1576
        %v1604 = vpop.f32.mrf.mxu0
        %v1605 = vadd.f32 0.0, %v1604
        %1606 = vmatmul.f32.gmra.mxu0 %v1579
        %v1607 = vpop.f32.mrf.mxu0
        %v1608 = vadd.f32 0.0, %v1607
        %1609 = vmatmul.f32.gmra.mxu0 %v1582
        %v1610 = vpop.f32.mrf.mxu0
        %v1611 = vadd.f32 0.0, %v1610
        %1612 = vmatmul.f32.gmra.mxu0 %v1585
        %v1613 = vpop.f32.mrf.mxu0
        %v1614 = vadd.f32 0.0, %v1613
        %1615 = vdwg.mxu0
        %v1616 = vperm.slane %v1516, 0
        %1621 = vrot.lane.b32.xlu0 %v1495, 124
        %v1622 = vpop.permute.xlu0 %1621
        %1623 = vrot.lane.b32.xlu0 %v1496, 124
        %v1624 = vpop.permute.xlu0 %1623
        %1625 = vrot.lane.b32.xlu0 %v1497, 124
        %v1626 = vpop.permute.xlu0 %1625
        %1627 = vrot.lane.b32.xlu0 %v1498, 124
        %v1628 = vpop.permute.xlu0 %1627
        %1633 = vxpose.xlu0.b32.start [1/16] %v1622, 128
        %1634 = vxpose.xlu0.b32.cont [2/16] %v1624, 128
        %1635 = vxpose.xlu0.b32.cont [3/16] %v1626, 128
        %1636 = vxpose.xlu0.b32.cont [4/16] %v1628, 128
        %1637 = vxpose.xlu0.b32.cont [5/16] 0.0, 128
        %1638 = vxpose.xlu0.b32.cont [6/16] 0.0, 128
        %1639 = vxpose.xlu0.b32.cont [7/16] 0.0, 128
        %1640 = vxpose.xlu0.b32.cont [8/16] 0.0, 128
        %1641 = vxpose.xlu0.b32.cont [9/16] 0.0, 128
        %1642 = vxpose.xlu0.b32.cont [10/16] 0.0, 128
        %1643 = vxpose.xlu0.b32.cont [11/16] 0.0, 128
        %1644 = vxpose.xlu0.b32.cont [12/16] 0.0, 128
        %1645 = vxpose.xlu0.b32.cont [13/16] 0.0, 128
        %1646 = vxpose.xlu0.b32.cont [14/16] 0.0, 128
        %1647 = vxpose.xlu0.b32.cont [15/16] 0.0, 128
        %1648 = vxpose.xlu0.b32.end [16/16] 0.0, 128
        %v1649 = vpop.trf.xlu0
        %v1650 = vpop.trf.xlu0
        %v1651 = vpop.trf.xlu0
        %v1652 = vpop.trf.xlu0
        %v1653 = vpop.trf.xlu0
        %v1654 = vpop.trf.xlu0
        %v1655 = vpop.trf.xlu0
        %v1656 = vpop.trf.xlu0
        %v1657 = vpop.trf.xlu0
        %v1658 = vpop.trf.xlu0
        %v1659 = vpop.trf.xlu0
        %v1660 = vpop.trf.xlu0
        %v1661 = vpop.trf.xlu0
        %v1662 = vpop.trf.xlu0
        %v1663 = vpop.trf.xlu0
        %v1664 = vpop.trf.xlu0
        %v1666 = vsel %vm1533, %v1649, 0
        %1668 = vmatpush.msra.mxu0 0.0
        %1669 = vmatpush.msra.mxu0 0.0
        %1670 = vmatpush.msra.mxu0 0.0
        %1671 = vmatpush.msra.mxu0 0.0
        %1672 = vmatpush.msra.mxu0 0.0
        %1673 = vmatpush.msra.mxu0 0.0
        %1674 = vmatpush.msra.mxu0 0.0
        %1675 = vmatpush.msra.mxu0 0.0
        %1676 = vmatpush.msra.mxu0 0.0
        %1677 = vmatpush.msra.mxu0 0.0
        %1678 = vmatpush.msra.mxu0 0.0
        %1679 = vmatpush.msra.mxu0 0.0
        %1680 = vmatpush.msra.mxu0 %v1506
        %1681 = vmatpush.msra.mxu0 %v1505
        %1682 = vmatpush.msra.mxu0 %v1504
        %1683 = vmatpush.msra.mxu0 %v1503
        %1684 = vmatmul.f32.gmra.mxu0 %v1666
        %v1685 = vpop.f32.mrf.mxu0
        %v1686 = vadd.f32 %v1616, %v1685
        %1687 = vdwg.mxu0
        %v1689 = vsel %vm1533, %v1686, 0
        %1691 = vmatpush.msra.mxu0 0.0
        %1692 = vmatpush.msra.mxu0 0.0
        %1693 = vmatpush.msra.mxu0 0.0
        %1694 = vmatpush.msra.mxu0 0.0
        %1695 = vmatpush.msra.mxu0 0.0
        %1696 = vmatpush.msra.mxu0 0.0
        %1697 = vmatpush.msra.mxu0 0.0
        %1698 = vmatpush.msra.mxu0 0.0
        %1699 = vmatpush.msra.mxu0 0.0
        %1700 = vmatpush.msra.mxu0 0.0
        %1701 = vmatpush.msra.mxu0 0.0
        %1702 = vmatpush.msra.mxu0 0.0
        %1703 = vmatpush.msra.mxu0 %v1502
        %1704 = vmatpush.msra.mxu0 %v1501
        %1705 = vmatpush.msra.mxu0 %v1500
        %1706 = vmatpush.msra.mxu0 %v1499
        %1707 = vmatmul.f32.gmra.mxu0 %v1689
        %v1708 = vpop.f32.mrf.mxu0
        %v1709 = vadd.f32 0.0, %v1708
        %1710 = vdwg.mxu0
        %v1711 = vperm.slane %v1515, 0
        %v1712 = vmul.f32 %v1686, %v1711
        %vm1713 = vcmask 257024
        %v1714 = vsel %vm1713, %v1712, 0.0
        %1715 = vadd.xlane.f32.xlu0 %v1714
        %v1716 = vpop.xlane.xlu0 %1715
        %v1717 = vld [vmem:[#allocation2] sm:$0xff]
        %v1718 = vld [vmem:[#allocation2 + $0x8] sm:$0xff]
        %v1719 = vld [vmem:[#allocation2 + $0x10] sm:$0xff]
        %v1720 = vld [vmem:[#allocation2 + $0x50] sm:$0xff]
        %v1721 = vld [vmem:[#allocation2 + $0x58] sm:$0xff]
        %v1722 = vld [vmem:[#allocation2 + $0x60] sm:$0xff]
        %v1723 = vld [vmem:[#allocation2 + $0xa0] sm:$0xff]
        %v1724 = vld [vmem:[#allocation2 + $0xa8] sm:$0xff]
        %v1725 = vld [vmem:[#allocation2 + $0xb0] sm:$0xff]
        %v1726 = vld [vmem:[#allocation2 + $0xf0] sm:$0xff]
        %v1727 = vld [vmem:[#allocation2 + $0xf8] sm:$0xff]
        %v1728 = vld [vmem:[#allocation2 + $0x100] sm:$0xff]
        %1729 = vset.pattern.permute.xlu0 0
        %1730 = vperm.xlu0 %1729, %v1127
        %v1731 = vpop.permute.xlu0 %1730
        %1733 = vset.pattern.permute.xlu0 0
        %1734 = vperm.xlu0 %1733, %v1128
        %v1735 = vpop.permute.xlu0 %1734
        %1737 = vset.pattern.permute.xlu0 0
        %1738 = vperm.xlu0 %1737, %v1129
        %v1739 = vpop.permute.xlu0 %1738
        %1741 = vset.pattern.permute.xlu0 0
        %1742 = vperm.xlu0 %1741, %v1130
        %v1743 = vpop.permute.xlu0 %1742
        %v1745 = vmul.f32 %v1717, %v1731
        %v1746 = vmul.f32 %v1718, %v1731
        %v1747 = vmul.f32 %v1719, %v1731
        %v1748 = vmul.f32 %v1720, %v1735
        %v1749 = vmul.f32 %v1721, %v1735
        %v1750 = vmul.f32 %v1722, %v1735
        %v1751 = vmul.f32 %v1723, %v1739
        %v1752 = vmul.f32 %v1724, %v1739
        %v1753 = vmul.f32 %v1725, %v1739
        %v1754 = vmul.f32 %v1726, %v1743
        %v1755 = vmul.f32 %v1727, %v1743
        %v1756 = vmul.f32 %v1728, %v1743
        %v1757 = vadd.f32 %v1745, 0.0
        %v1758 = vadd.f32 %v1746, 0.0
        %v1759 = vadd.f32 %v1747, 0.0
        %v1760 = vadd.f32 %v1748, 0.0
        %v1761 = vadd.f32 %v1749, 0.0
        %v1762 = vadd.f32 %v1750, 0.0
        %v1763 = vadd.f32 %v1751, 0.0
        %v1764 = vadd.f32 %v1752, 0.0
        %v1765 = vadd.f32 %v1753, 0.0
        %v1766 = vadd.f32 %v1754, 0.0
        %v1767 = vadd.f32 %v1755, 0.0
        %v1768 = vadd.f32 %v1756, 0.0
        %1769 = vset.pattern.permute.xlu0 3
        %1770 = vperm.xlu0 %1769, %v1127
        %v1771 = vpop.permute.xlu0 %1770
        %1773 = vset.pattern.permute.xlu0 3
        %1774 = vperm.xlu0 %1773, %v1128
        %v1775 = vpop.permute.xlu0 %1774
        %1777 = vset.pattern.permute.xlu0 3
        %1778 = vperm.xlu0 %1777, %v1129
        %v1779 = vpop.permute.xlu0 %1778
        %1781 = vset.pattern.permute.xlu0 3
        %1782 = vperm.xlu0 %1781, %v1130
        %v1783 = vpop.permute.xlu0 %1782
        %v1785 = vmul.f32 %v1717, %v1771
        %v1786 = vmul.f32 %v1718, %v1771
        %v1787 = vmul.f32 %v1719, %v1771
        %v1788 = vmul.f32 %v1720, %v1775
        %v1789 = vmul.f32 %v1721, %v1775
        %v1790 = vmul.f32 %v1722, %v1775
        %v1791 = vmul.f32 %v1723, %v1779
        %v1792 = vmul.f32 %v1724, %v1779
        %v1793 = vmul.f32 %v1725, %v1779
        %v1794 = vmul.f32 %v1726, %v1783
        %v1795 = vmul.f32 %v1727, %v1783
        %v1796 = vmul.f32 %v1728, %v1783
        %1809 = vrot.lane.b32.xlu0 %v1785, 96
        %v1810 = vpop.permute.xlu0 %1809
        %1811 = vrot.lane.b32.xlu0 %v1786, 96
        %v1812 = vpop.permute.xlu0 %1811
        %1813 = vrot.lane.b32.xlu0 %v1787, 96
        %v1814 = vpop.permute.xlu0 %1813
        %1815 = vrot.lane.b32.xlu0 %v1788, 96
        %v1816 = vpop.permute.xlu0 %1815
        %1817 = vrot.lane.b32.xlu0 %v1789, 96
        %v1818 = vpop.permute.xlu0 %1817
        %1819 = vrot.lane.b32.xlu0 %v1790, 96
        %v1820 = vpop.permute.xlu0 %1819
        %1821 = vrot.lane.b32.xlu0 %v1791, 96
        %v1822 = vpop.permute.xlu0 %1821
        %1823 = vrot.lane.b32.xlu0 %v1792, 96
        %v1824 = vpop.permute.xlu0 %1823
        %1825 = vrot.lane.b32.xlu0 %v1793, 96
        %v1826 = vpop.permute.xlu0 %1825
        %1827 = vrot.lane.b32.xlu0 %v1794, 96
        %v1828 = vpop.permute.xlu0 %1827
        %1829 = vrot.lane.b32.xlu0 %v1795, 96
        %v1830 = vpop.permute.xlu0 %1829
        %1831 = vrot.lane.b32.xlu0 %v1796, 96
        %v1832 = vpop.permute.xlu0 %1831
        %vm1833 = vcmask 785408
        %v1834 = vsel %vm1833, %v1810, %v1812
        %v1835 = vsel %vm1833, %v1812, %v1814
        %v1836 = vsel %vm1833, %v1816, %v1818
        %v1837 = vsel %vm1833, %v1818, %v1820
        %v1838 = vsel %vm1833, %v1822, %v1824
        %v1839 = vsel %vm1833, %v1824, %v1826
        %v1840 = vsel %vm1833, %v1828, %v1830
        %v1841 = vsel %vm1833, %v1830, %v1832
        %v1854 = vadd.f32 %v1757, %v1834
        %v1855 = vadd.f32 %v1758, %v1835
        %v1856 = vadd.f32 %v1759, %v1814
        %v1857 = vadd.f32 %v1760, %v1836
        %v1858 = vadd.f32 %v1761, %v1837
        %v1859 = vadd.f32 %v1762, %v1820
        %v1860 = vadd.f32 %v1763, %v1838
        %v1861 = vadd.f32 %v1764, %v1839
        %v1862 = vadd.f32 %v1765, %v1826
        %v1863 = vadd.f32 %v1766, %v1840
        %v1864 = vadd.f32 %v1767, %v1841
        %v1865 = vadd.f32 %v1768, %v1832
        %v1866 = vld [vmem:[#allocation2 + $0x8] sm:$0xff]
        %v1867 = vld [vmem:[#allocation2 + $0x10] sm:$0xff]
        %v1868 = vld [vmem:[#allocation2 + $0x18] sm:$0xff]
        %v1869 = vld [vmem:[#allocation2 + $0x58] sm:$0xff]
        %v1870 = vld [vmem:[#allocation2 + $0x60] sm:$0xff]
        %v1871 = vld [vmem:[#allocation2 + $0x68] sm:$0xff]
        %v1872 = vld [vmem:[#allocation2 + $0xa8] sm:$0xff]
        %v1873 = vld [vmem:[#allocation2 + $0xb0] sm:$0xff]
        %v1874 = vld [vmem:[#allocation2 + $0xb8] sm:$0xff]
        %v1875 = vld [vmem:[#allocation2 + $0xf8] sm:$0xff]
        %v1876 = vld [vmem:[#allocation2 + $0x100] sm:$0xff]
        %v1877 = vld [vmem:[#allocation2 + $0x108] sm:$0xff]
        %1878 = vset.pattern.permute.xlu0 6
        %1879 = vperm.xlu0 %1878, %v1127
        %v1880 = vpop.permute.xlu0 %1879
        %1882 = vset.pattern.permute.xlu0 6
        %1883 = vperm.xlu0 %1882, %v1128
        %v1884 = vpop.permute.xlu0 %1883
        %1886 = vset.pattern.permute.xlu0 6
        %1887 = vperm.xlu0 %1886, %v1129
        %v1888 = vpop.permute.xlu0 %1887
        %1890 = vset.pattern.permute.xlu0 6
        %1891 = vperm.xlu0 %1890, %v1130
        %v1892 = vpop.permute.xlu0 %1891
        %v1894 = vmul.f32 %v1866, %v1880
        %v1895 = vmul.f32 %v1867, %v1880
        %v1896 = vmul.f32 %v1868, %v1880
        %v1897 = vmul.f32 %v1869, %v1884
        %v1898 = vmul.f32 %v1870, %v1884
        %v1899 = vmul.f32 %v1871, %v1884
        %v1900 = vmul.f32 %v1872, %v1888
        %v1901 = vmul.f32 %v1873, %v1888
        %v1902 = vmul.f32 %v1874, %v1888
        %v1903 = vmul.f32 %v1875, %v1892
        %v1904 = vmul.f32 %v1876, %v1892
        %v1905 = vmul.f32 %v1877, %v1892
        %1918 = vrot.lane.b32.xlu0 %v1894, 64
        %v1919 = vpop.permute.xlu0 %1918
        %1920 = vrot.lane.b32.xlu0 %v1895, 64
        %v1921 = vpop.permute.xlu0 %1920
        %1922 = vrot.lane.b32.xlu0 %v1896, 64
        %v1923 = vpop.permute.xlu0 %1922
        %1924 = vrot.lane.b32.xlu0 %v1897, 64
        %v1925 = vpop.permute.xlu0 %1924
        %1926 = vrot.lane.b32.xlu0 %v1898, 64
        %v1927 = vpop.permute.xlu0 %1926
        %1928 = vrot.lane.b32.xlu0 %v1899, 64
        %v1929 = vpop.permute.xlu0 %1928
        %1930 = vrot.lane.b32.xlu0 %v1900, 64
        %v1931 = vpop.permute.xlu0 %1930
        %1932 = vrot.lane.b32.xlu0 %v1901, 64
        %v1933 = vpop.permute.xlu0 %1932
        %1934 = vrot.lane.b32.xlu0 %v1902, 64
        %v1935 = vpop.permute.xlu0 %1934
        %1936 = vrot.lane.b32.xlu0 %v1903, 64
        %v1937 = vpop.permute.xlu0 %1936
        %1938 = vrot.lane.b32.xlu0 %v1904, 64
        %v1939 = vpop.permute.xlu0 %1938
        %1940 = vrot.lane.b32.xlu0 %v1905, 64
        %v1941 = vpop.permute.xlu0 %1940
        %vm1942 = vcmask 523264
        %v1943 = vsel %vm1942, %v1919, %v1921
        %v1944 = vsel %vm1942, %v1921, %v1923
        %v1945 = vsel %vm1942, %v1925, %v1927
        %v1946 = vsel %vm1942, %v1927, %v1929
        %v1947 = vsel %vm1942, %v1931, %v1933
        %v1948 = vsel %vm1942, %v1933, %v1935
        %v1949 = vsel %vm1942, %v1937, %v1939
        %v1950 = vsel %vm1942, %v1939, %v1941
        %v1963 = vadd.f32 %v1854, %v1919
        %v1964 = vadd.f32 %v1855, %v1943
        %v1965 = vadd.f32 %v1856, %v1944
        %v1966 = vadd.f32 %v1857, %v1925
        %v1967 = vadd.f32 %v1858, %v1945
        %v1968 = vadd.f32 %v1859, %v1946
        %v1969 = vadd.f32 %v1860, %v1931
        %v1970 = vadd.f32 %v1861, %v1947
        %v1971 = vadd.f32 %v1862, %v1948
        %v1972 = vadd.f32 %v1863, %v1937
        %v1973 = vadd.f32 %v1864, %v1949
        %v1974 = vadd.f32 %v1865, %v1950
        %v1975 = vld [vmem:[%s3] ss:$2 sm:$0x3]
        %v1977 = vperm.slane %v1975, 0
        %v1978 = vperm.slane %v1975, 1
        %1979 = vrot.lane.b32.xlu0 %v1977, 95
        %v1980 = vpop.permute.xlu0 %1979
        %1981 = vrot.lane.b32.xlu0 %v1978, 95
        %v1982 = vpop.permute.xlu0 %1981
        %vm1983 = vcmask 777216
        %v1984 = vsel %vm1983, %v1980, %v1982
        %v1988 = vmul.f32 %v1963, %v1980
        %v1989 = vmul.f32 %v1964, %v1984
        %v1990 = vmul.f32 %v1965, %v1982
        %v1991 = vmul.f32 %v1966, %v1980
        %v1992 = vmul.f32 %v1967, %v1984
        %v1993 = vmul.f32 %v1968, %v1982
        %v1994 = vmul.f32 %v1969, %v1980
        %v1995 = vmul.f32 %v1970, %v1984
        %v1996 = vmul.f32 %v1971, %v1982
        %v1997 = vmul.f32 %v1972, %v1980
        %v1998 = vmul.f32 %v1973, %v1984
        %v1999 = vmul.f32 %v1974, %v1982
        %v2000 = vadd.f32 %v1988, 0.0
        %v2001 = vadd.f32 %v1989, 0.0
        %v2002 = vadd.f32 %v1990, 0.0
        %v2003 = vadd.f32 %v1991, 0.0
        %v2004 = vadd.f32 %v1992, 0.0
        %v2005 = vadd.f32 %v1993, 0.0
        %v2006 = vadd.f32 %v1994, 0.0
        %v2007 = vadd.f32 %v1995, 0.0
        %v2008 = vadd.f32 %v1996, 0.0
        %v2009 = vadd.f32 %v1997, 0.0
        %v2010 = vadd.f32 %v1998, 0.0
        %v2011 = vadd.f32 %v1999, 0.0
        %2012 = vset.pattern.permute.xlu0 1
        %2013 = vperm.xlu0 %2012, %v1127
        %v2014 = vpop.permute.xlu0 %2013
        %2016 = vset.pattern.permute.xlu0 1
        %2017 = vperm.xlu0 %2016, %v1128
        %v2018 = vpop.permute.xlu0 %2017
        %2020 = vset.pattern.permute.xlu0 1
        %2021 = vperm.xlu0 %2020, %v1129
        %v2022 = vpop.permute.xlu0 %2021
        %2024 = vset.pattern.permute.xlu0 1
        %2025 = vperm.xlu0 %2024, %v1130
        %v2026 = vpop.permute.xlu0 %2025
        %v2028 = vmul.f32 %v1717, %v2014
        %v2029 = vmul.f32 %v1718, %v2014
        %v2030 = vmul.f32 %v1719, %v2014
        %v2031 = vmul.f32 %v1720, %v2018
        %v2032 = vmul.f32 %v1721, %v2018
        %v2033 = vmul.f32 %v1722, %v2018
        %v2034 = vmul.f32 %v1723, %v2022
        %v2035 = vmul.f32 %v1724, %v2022
        %v2036 = vmul.f32 %v1725, %v2022
        %v2037 = vmul.f32 %v1726, %v2026
        %v2038 = vmul.f32 %v1727, %v2026
        %v2039 = vmul.f32 %v1728, %v2026
        %v2040 = vadd.f32 %v2028, 0.0
        %v2041 = vadd.f32 %v2029, 0.0
        %v2042 = vadd.f32 %v2030, 0.0
        %v2043 = vadd.f32 %v2031, 0.0
        %v2044 = vadd.f32 %v2032, 0.0
        %v2045 = vadd.f32 %v2033, 0.0
        %v2046 = vadd.f32 %v2034, 0.0
        %v2047 = vadd.f32 %v2035, 0.0
        %v2048 = vadd.f32 %v2036, 0.0
        %v2049 = vadd.f32 %v2037, 0.0
        %v2050 = vadd.f32 %v2038, 0.0
        %v2051 = vadd.f32 %v2039, 0.0
        %2052 = vset.pattern.permute.xlu0 4
        %2053 = vperm.xlu0 %2052, %v1127
        %v2054 = vpop.permute.xlu0 %2053
        %2056 = vset.pattern.permute.xlu0 4
        %2057 = vperm.xlu0 %2056, %v1128
        %v2058 = vpop.permute.xlu0 %2057
        %2060 = vset.pattern.permute.xlu0 4
        %2061 = vperm.xlu0 %2060, %v1129
        %v2062 = vpop.permute.xlu0 %2061
        %2064 = vset.pattern.permute.xlu0 4
        %2065 = vperm.xlu0 %2064, %v1130
        %v2066 = vpop.permute.xlu0 %2065
        %v2068 = vmul.f32 %v1718, %v2054
        %v2069 = vmul.f32 %v1719, %v2054
        %v2070 = vmul.f32 %v1721, %v2058
        %v2071 = vmul.f32 %v1722, %v2058
        %v2072 = vmul.f32 %v1724, %v2062
        %v2073 = vmul.f32 %v1725, %v2062
        %v2074 = vmul.f32 %v1727, %v2066
        %v2075 = vmul.f32 %v1728, %v2066
        %2084 = vrot.lane.b32.xlu0 %v2068, 96
        %v2085 = vpop.permute.xlu0 %2084
        %2086 = vrot.lane.b32.xlu0 %v2069, 96
        %v2087 = vpop.permute.xlu0 %2086
        %2088 = vrot.lane.b32.xlu0 %v2070, 96
        %v2089 = vpop.permute.xlu0 %2088
        %2090 = vrot.lane.b32.xlu0 %v2071, 96
        %v2091 = vpop.permute.xlu0 %2090
        %2092 = vrot.lane.b32.xlu0 %v2072, 96
        %v2093 = vpop.permute.xlu0 %2092
        %2094 = vrot.lane.b32.xlu0 %v2073, 96
        %v2095 = vpop.permute.xlu0 %2094
        %2096 = vrot.lane.b32.xlu0 %v2074, 96
        %v2097 = vpop.permute.xlu0 %2096
        %2098 = vrot.lane.b32.xlu0 %v2075, 96
        %v2099 = vpop.permute.xlu0 %2098
        %v2100 = vsel %vm1833, %v2085, %v2087
        %v2101 = vsel %vm1833, %v2089, %v2091
        %v2102 = vsel %vm1833, %v2093, %v2095
        %v2103 = vsel %vm1833, %v2097, %v2099
        %v2116 = vadd.f32 %v2040, %v2085
        %v2117 = vadd.f32 %v2041, %v2100
        %v2118 = vadd.f32 %v2042, %v2087
        %v2119 = vadd.f32 %v2043, %v2089
        %v2120 = vadd.f32 %v2044, %v2101
        %v2121 = vadd.f32 %v2045, %v2091
        %v2122 = vadd.f32 %v2046, %v2093
        %v2123 = vadd.f32 %v2047, %v2102
        %v2124 = vadd.f32 %v2048, %v2095
        %v2125 = vadd.f32 %v2049, %v2097
        %v2126 = vadd.f32 %v2050, %v2103
        %v2127 = vadd.f32 %v2051, %v2099
        %2128 = vset.pattern.permute.xlu0 7
        %2129 = vperm.xlu0 %2128, %v1127
        %v2130 = vpop.permute.xlu0 %2129
        %2132 = vset.pattern.permute.xlu0 7
        %2133 = vperm.xlu0 %2132, %v1128
        %v2134 = vpop.permute.xlu0 %2133
        %2136 = vset.pattern.permute.xlu0 7
        %2137 = vperm.xlu0 %2136, %v1129
        %v2138 = vpop.permute.xlu0 %2137
        %2140 = vset.pattern.permute.xlu0 7
        %2141 = vperm.xlu0 %2140, %v1130
        %v2142 = vpop.permute.xlu0 %2141
        %v2144 = vmul.f32 %v1866, %v2130
        %v2145 = vmul.f32 %v1867, %v2130
        %v2146 = vmul.f32 %v1868, %v2130
        %v2147 = vmul.f32 %v1869, %v2134
        %v2148 = vmul.f32 %v1870, %v2134
        %v2149 = vmul.f32 %v1871, %v2134
        %v2150 = vmul.f32 %v1872, %v2138
        %v2151 = vmul.f32 %v1873, %v2138
        %v2152 = vmul.f32 %v1874, %v2138
        %v2153 = vmul.f32 %v1875, %v2142
        %v2154 = vmul.f32 %v1876, %v2142
        %v2155 = vmul.f32 %v1877, %v2142
        %2168 = vrot.lane.b32.xlu0 %v2144, 64
        %v2169 = vpop.permute.xlu0 %2168
        %2170 = vrot.lane.b32.xlu0 %v2145, 64
        %v2171 = vpop.permute.xlu0 %2170
        %2172 = vrot.lane.b32.xlu0 %v2146, 64
        %v2173 = vpop.permute.xlu0 %2172
        %2174 = vrot.lane.b32.xlu0 %v2147, 64
        %v2175 = vpop.permute.xlu0 %2174
        %2176 = vrot.lane.b32.xlu0 %v2148, 64
        %v2177 = vpop.permute.xlu0 %2176
        %2178 = vrot.lane.b32.xlu0 %v2149, 64
        %v2179 = vpop.permute.xlu0 %2178
        %2180 = vrot.lane.b32.xlu0 %v2150, 64
        %v2181 = vpop.permute.xlu0 %2180
        %2182 = vrot.lane.b32.xlu0 %v2151, 64
        %v2183 = vpop.permute.xlu0 %2182
        %2184 = vrot.lane.b32.xlu0 %v2152, 64
        %v2185 = vpop.permute.xlu0 %2184
        %2186 = vrot.lane.b32.xlu0 %v2153, 64
        %v2187 = vpop.permute.xlu0 %2186
        %2188 = vrot.lane.b32.xlu0 %v2154, 64
        %v2189 = vpop.permute.xlu0 %2188
        %2190 = vrot.lane.b32.xlu0 %v2155, 64
        %v2191 = vpop.permute.xlu0 %2190
        %v2192 = vsel %vm1942, %v2169, %v2171
        %v2193 = vsel %vm1942, %v2171, %v2173
        %v2194 = vsel %vm1942, %v2175, %v2177
        %v2195 = vsel %vm1942, %v2177, %v2179
        %v2196 = vsel %vm1942, %v2181, %v2183
        %v2197 = vsel %vm1942, %v2183, %v2185
        %v2198 = vsel %vm1942, %v2187, %v2189
        %v2199 = vsel %vm1942, %v2189, %v2191
        %v2212 = vadd.f32 %v2116, %v2169
        %v2213 = vadd.f32 %v2117, %v2192
        %v2214 = vadd.f32 %v2118, %v2193
        %v2215 = vadd.f32 %v2119, %v2175
        %v2216 = vadd.f32 %v2120, %v2194
        %v2217 = vadd.f32 %v2121, %v2195
        %v2218 = vadd.f32 %v2122, %v2181
        %v2219 = vadd.f32 %v2123, %v2196
        %v2220 = vadd.f32 %v2124, %v2197
        %v2221 = vadd.f32 %v2125, %v2187
        %v2222 = vadd.f32 %v2126, %v2198
        %v2223 = vadd.f32 %v2127, %v2199
        %2236 = vrot.lane.b32.xlu0 %v2212, 127
        %v2237 = vpop.permute.xlu0 %2236
        %2238 = vrot.lane.b32.xlu0 %v2213, 127
        %v2239 = vpop.permute.xlu0 %2238
        %2240 = vrot.lane.b32.xlu0 %v2214, 127
        %v2241 = vpop.permute.xlu0 %2240
        %2242 = vrot.lane.b32.xlu0 %v2215, 127
        %v2243 = vpop.permute.xlu0 %2242
        %2244 = vrot.lane.b32.xlu0 %v2216, 127
        %v2245 = vpop.permute.xlu0 %2244
        %2246 = vrot.lane.b32.xlu0 %v2217, 127
        %v2247 = vpop.permute.xlu0 %2246
        %2248 = vrot.lane.b32.xlu0 %v2218, 127
        %v2249 = vpop.permute.xlu0 %2248
        %2250 = vrot.lane.b32.xlu0 %v2219, 127
        %v2251 = vpop.permute.xlu0 %2250
        %2252 = vrot.lane.b32.xlu0 %v2220, 127
        %v2253 = vpop.permute.xlu0 %2252
        %2254 = vrot.lane.b32.xlu0 %v2221, 127
        %v2255 = vpop.permute.xlu0 %2254
        %2256 = vrot.lane.b32.xlu0 %v2222, 127
        %v2257 = vpop.permute.xlu0 %2256
        %2258 = vrot.lane.b32.xlu0 %v2223, 127
        %v2259 = vpop.permute.xlu0 %2258
        %vm2260 = vcmask 1039360
        %v2261 = vsel %vm2260, %v2237, %v2239
        %v2262 = vsel %vm2260, %v2239, %v2241
        %v2263 = vsel %vm2260, %v2243, %v2245
        %v2264 = vsel %vm2260, %v2245, %v2247
        %v2265 = vsel %vm2260, %v2249, %v2251
        %v2266 = vsel %vm2260, %v2251, %v2253
        %v2267 = vsel %vm2260, %v2255, %v2257
        %v2268 = vsel %vm2260, %v2257, %v2259
        %v2281 = vadd.f32 %v2000, %v2261
        %v2282 = vadd.f32 %v2001, %v2262
        %v2283 = vadd.f32 %v2002, %v2241
        %v2284 = vadd.f32 %v2003, %v2263
        %v2285 = vadd.f32 %v2004, %v2264
        %v2286 = vadd.f32 %v2005, %v2247
        %v2287 = vadd.f32 %v2006, %v2265
        %v2288 = vadd.f32 %v2007, %v2266
        %v2289 = vadd.f32 %v2008, %v2253
        %v2290 = vadd.f32 %v2009, %v2267
        %v2291 = vadd.f32 %v2010, %v2268
        %v2292 = vadd.f32 %v2011, %v2259
        %2293 = vset.pattern.permute.xlu0 2
        %2294 = vperm.xlu0 %2293, %v1127
        %v2295 = vpop.permute.xlu0 %2294
        %2297 = vset.pattern.permute.xlu0 2
        %2298 = vperm.xlu0 %2297, %v1128
        %v2299 = vpop.permute.xlu0 %2298
        %2301 = vset.pattern.permute.xlu0 2
        %2302 = vperm.xlu0 %2301, %v1129
        %v2303 = vpop.permute.xlu0 %2302
        %2305 = vset.pattern.permute.xlu0 2
        %2306 = vperm.xlu0 %2305, %v1130
        %v2307 = vpop.permute.xlu0 %2306
        %v2309 = vmul.f32 %v1717, %v2295
        %v2310 = vmul.f32 %v1718, %v2295
        %v2311 = vmul.f32 %v1719, %v2295
        %v2312 = vmul.f32 %v1720, %v2299
        %v2313 = vmul.f32 %v1721, %v2299
        %v2314 = vmul.f32 %v1722, %v2299
        %v2315 = vmul.f32 %v1723, %v2303
        %v2316 = vmul.f32 %v1724, %v2303
        %v2317 = vmul.f32 %v1725, %v2303
        %v2318 = vmul.f32 %v1726, %v2307
        %v2319 = vmul.f32 %v1727, %v2307
        %v2320 = vmul.f32 %v1728, %v2307
        %v2321 = vadd.f32 %v2309, 0.0
        %v2322 = vadd.f32 %v2310, 0.0
        %v2323 = vadd.f32 %v2311, 0.0
        %v2324 = vadd.f32 %v2312, 0.0
        %v2325 = vadd.f32 %v2313, 0.0
        %v2326 = vadd.f32 %v2314, 0.0
        %v2327 = vadd.f32 %v2315, 0.0
        %v2328 = vadd.f32 %v2316, 0.0
        %v2329 = vadd.f32 %v2317, 0.0
        %v2330 = vadd.f32 %v2318, 0.0
        %v2331 = vadd.f32 %v2319, 0.0
        %v2332 = vadd.f32 %v2320, 0.0
        %2333 = vset.pattern.permute.xlu0 5
        %2334 = vperm.xlu0 %2333, %v1127
        %v2335 = vpop.permute.xlu0 %2334
        %2337 = vset.pattern.permute.xlu0 5
        %2338 = vperm.xlu0 %2337, %v1128
        %v2339 = vpop.permute.xlu0 %2338
        %2341 = vset.pattern.permute.xlu0 5
        %2342 = vperm.xlu0 %2341, %v1129
        %v2343 = vpop.permute.xlu0 %2342
        %2345 = vset.pattern.permute.xlu0 5
        %2346 = vperm.xlu0 %2345, %v1130
        %v2347 = vpop.permute.xlu0 %2346
        %v2349 = vmul.f32 %v1866, %v2335
        %v2350 = vmul.f32 %v1867, %v2335
        %v2351 = vmul.f32 %v1868, %v2335
        %v2352 = vmul.f32 %v1869, %v2339
        %v2353 = vmul.f32 %v1870, %v2339
        %v2354 = vmul.f32 %v1871, %v2339
        %v2355 = vmul.f32 %v1872, %v2343
        %v2356 = vmul.f32 %v1873, %v2343
        %v2357 = vmul.f32 %v1874, %v2343
        %v2358 = vmul.f32 %v1875, %v2347
        %v2359 = vmul.f32 %v1876, %v2347
        %v2360 = vmul.f32 %v1877, %v2347
        %2373 = vrot.lane.b32.xlu0 %v2349, 96
        %v2374 = vpop.permute.xlu0 %2373
        %2375 = vrot.lane.b32.xlu0 %v2350, 96
        %v2376 = vpop.permute.xlu0 %2375
        %2377 = vrot.lane.b32.xlu0 %v2351, 96
        %v2378 = vpop.permute.xlu0 %2377
        %2379 = vrot.lane.b32.xlu0 %v2352, 96
        %v2380 = vpop.permute.xlu0 %2379
        %2381 = vrot.lane.b32.xlu0 %v2353, 96
        %v2382 = vpop.permute.xlu0 %2381
        %2383 = vrot.lane.b32.xlu0 %v2354, 96
        %v2384 = vpop.permute.xlu0 %2383
        %2385 = vrot.lane.b32.xlu0 %v2355, 96
        %v2386 = vpop.permute.xlu0 %2385
        %2387 = vrot.lane.b32.xlu0 %v2356, 96
        %v2388 = vpop.permute.xlu0 %2387
        %2389 = vrot.lane.b32.xlu0 %v2357, 96
        %v2390 = vpop.permute.xlu0 %2389
        %2391 = vrot.lane.b32.xlu0 %v2358, 96
        %v2392 = vpop.permute.xlu0 %2391
        %2393 = vrot.lane.b32.xlu0 %v2359, 96
        %v2394 = vpop.permute.xlu0 %2393
        %2395 = vrot.lane.b32.xlu0 %v2360, 96
        %v2396 = vpop.permute.xlu0 %2395
        %v2397 = vsel %vm1833, %v2374, %v2376
        %v2398 = vsel %vm1833, %v2376, %v2378
        %v2399 = vsel %vm1833, %v2380, %v2382
        %v2400 = vsel %vm1833, %v2382, %v2384
        %v2401 = vsel %vm1833, %v2386, %v2388
        %v2402 = vsel %vm1833, %v2388, %v2390
        %v2403 = vsel %vm1833, %v2392, %v2394
        %v2404 = vsel %vm1833, %v2394, %v2396
        %v2417 = vadd.f32 %v2321, %v2374
        %v2418 = vadd.f32 %v2322, %v2397
        %v2419 = vadd.f32 %v2323, %v2398
        %v2420 = vadd.f32 %v2324, %v2380
        %v2421 = vadd.f32 %v2325, %v2399
        %v2422 = vadd.f32 %v2326, %v2400
        %v2423 = vadd.f32 %v2327, %v2386
        %v2424 = vadd.f32 %v2328, %v2401
        %v2425 = vadd.f32 %v2329, %v2402
        %v2426 = vadd.f32 %v2330, %v2392
        %v2427 = vadd.f32 %v2331, %v2403
        %v2428 = vadd.f32 %v2332, %v2404
        %2429 = vset.pattern.permute.xlu0 8
        %2430 = vperm.xlu0 %2429, %v1127
        %v2431 = vpop.permute.xlu0 %2430
        %2433 = vset.pattern.permute.xlu0 8
        %2434 = vperm.xlu0 %2433, %v1128
        %v2435 = vpop.permute.xlu0 %2434
        %2437 = vset.pattern.permute.xlu0 8
        %2438 = vperm.xlu0 %2437, %v1129
        %v2439 = vpop.permute.xlu0 %2438
        %2441 = vset.pattern.permute.xlu0 8
        %2442 = vperm.xlu0 %2441, %v1130
        %v2443 = vpop.permute.xlu0 %2442
        %v2445 = vmul.f32 %v1866, %v2431
        %v2446 = vmul.f32 %v1867, %v2431
        %v2447 = vmul.f32 %v1868, %v2431
        %v2448 = vmul.f32 %v1869, %v2435
        %v2449 = vmul.f32 %v1870, %v2435
        %v2450 = vmul.f32 %v1871, %v2435
        %v2451 = vmul.f32 %v1872, %v2439
        %v2452 = vmul.f32 %v1873, %v2439
        %v2453 = vmul.f32 %v1874, %v2439
        %v2454 = vmul.f32 %v1875, %v2443
        %v2455 = vmul.f32 %v1876, %v2443
        %v2456 = vmul.f32 %v1877, %v2443
        %2469 = vrot.lane.b32.xlu0 %v2445, 64
        %v2470 = vpop.permute.xlu0 %2469
        %2471 = vrot.lane.b32.xlu0 %v2446, 64
        %v2472 = vpop.permute.xlu0 %2471
        %2473 = vrot.lane.b32.xlu0 %v2447, 64
        %v2474 = vpop.permute.xlu0 %2473
        %2475 = vrot.lane.b32.xlu0 %v2448, 64
        %v2476 = vpop.permute.xlu0 %2475
        %2477 = vrot.lane.b32.xlu0 %v2449, 64
        %v2478 = vpop.permute.xlu0 %2477
        %2479 = vrot.lane.b32.xlu0 %v2450, 64
        %v2480 = vpop.permute.xlu0 %2479
        %2481 = vrot.lane.b32.xlu0 %v2451, 64
        %v2482 = vpop.permute.xlu0 %2481
        %2483 = vrot.lane.b32.xlu0 %v2452, 64
        %v2484 = vpop.permute.xlu0 %2483
        %2485 = vrot.lane.b32.xlu0 %v2453, 64
        %v2486 = vpop.permute.xlu0 %2485
        %2487 = vrot.lane.b32.xlu0 %v2454, 64
        %v2488 = vpop.permute.xlu0 %2487
        %2489 = vrot.lane.b32.xlu0 %v2455, 64
        %v2490 = vpop.permute.xlu0 %2489
        %2491 = vrot.lane.b32.xlu0 %v2456, 64
        %v2492 = vpop.permute.xlu0 %2491
        %v2493 = vsel %vm1942, %v2470, %v2472
        %v2494 = vsel %vm1942, %v2472, %v2474
        %v2495 = vsel %vm1942, %v2476, %v2478
        %v2496 = vsel %vm1942, %v2478, %v2480
        %v2497 = vsel %vm1942, %v2482, %v2484
        %v2498 = vsel %vm1942, %v2484, %v2486
        %v2499 = vsel %vm1942, %v2488, %v2490
        %v2500 = vsel %vm1942, %v2490, %v2492
        %v2513 = vadd.f32 %v2417, %v2470
        %v2514 = vadd.f32 %v2418, %v2493
        %v2515 = vadd.f32 %v2419, %v2494
        %v2516 = vadd.f32 %v2420, %v2476
        %v2517 = vadd.f32 %v2421, %v2495
        %v2518 = vadd.f32 %v2422, %v2496
        %v2519 = vadd.f32 %v2423, %v2482
        %v2520 = vadd.f32 %v2424, %v2497
        %v2521 = vadd.f32 %v2425, %v2498
        %v2522 = vadd.f32 %v2426, %v2488
        %v2523 = vadd.f32 %v2427, %v2499
        %v2524 = vadd.f32 %v2428, %v2500
        %s2525 = scalar_lea.vmem %s3, 1
        %v2526 = vld [vmem:[%s2525] ss:$2 sm:$0x3]
        %v2528 = vperm.slane %v2526, 0
        %v2529 = vperm.slane %v2526, 1
        %2530 = vrot.lane.b32.xlu0 %v2528, 97
        %v2531 = vpop.permute.xlu0 %2530
        %2532 = vrot.lane.b32.xlu0 %v2529, 97
        %v2533 = vpop.permute.xlu0 %2532
        %vm2534 = vcmask 793600
        %v2535 = vsel %vm2534, %v2531, %v2533
        %v2539 = vmul.f32 %v2513, %v2531
        %v2540 = vmul.f32 %v2514, %v2535
        %v2541 = vmul.f32 %v2515, %v2533
        %v2542 = vmul.f32 %v2516, %v2531
        %v2543 = vmul.f32 %v2517, %v2535
        %v2544 = vmul.f32 %v2518, %v2533
        %v2545 = vmul.f32 %v2519, %v2531
        %v2546 = vmul.f32 %v2520, %v2535
        %v2547 = vmul.f32 %v2521, %v2533
        %v2548 = vmul.f32 %v2522, %v2531
        %v2549 = vmul.f32 %v2523, %v2535
        %v2550 = vmul.f32 %v2524, %v2533
        %2563 = vrot.lane.b32.xlu0 %v2539, 126
        %v2564 = vpop.permute.xlu0 %2563
        %2565 = vrot.lane.b32.xlu0 %v2540, 126
        %v2566 = vpop.permute.xlu0 %2565
        %2567 = vrot.lane.b32.xlu0 %v2541, 126
        %v2568 = vpop.permute.xlu0 %2567
        %2569 = vrot.lane.b32.xlu0 %v2542, 126
        %v2570 = vpop.permute.xlu0 %2569
        %2571 = vrot.lane.b32.xlu0 %v2543, 126
        %v2572 = vpop.permute.xlu0 %2571
        %2573 = vrot.lane.b32.xlu0 %v2544, 126
        %v2574 = vpop.permute.xlu0 %2573
        %2575 = vrot.lane.b32.xlu0 %v2545, 126
        %v2576 = vpop.permute.xlu0 %2575
        %2577 = vrot.lane.b32.xlu0 %v2546, 126
        %v2578 = vpop.permute.xlu0 %2577
        %2579 = vrot.lane.b32.xlu0 %v2547, 126
        %v2580 = vpop.permute.xlu0 %2579
        %2581 = vrot.lane.b32.xlu0 %v2548, 126
        %v2582 = vpop.permute.xlu0 %2581
        %2583 = vrot.lane.b32.xlu0 %v2549, 126
        %v2584 = vpop.permute.xlu0 %2583
        %2585 = vrot.lane.b32.xlu0 %v2550, 126
        %v2586 = vpop.permute.xlu0 %2585
        %vm2587 = vcmask 1031168
        %v2588 = vsel %vm2587, %v2564, %v2566
        %v2589 = vsel %vm2587, %v2566, %v2568
        %v2590 = vsel %vm2587, %v2570, %v2572
        %v2591 = vsel %vm2587, %v2572, %v2574
        %v2592 = vsel %vm2587, %v2576, %v2578
        %v2593 = vsel %vm2587, %v2578, %v2580
        %v2594 = vsel %vm2587, %v2582, %v2584
        %v2595 = vsel %vm2587, %v2584, %v2586
        %v2608 = vadd.f32 %v2281, %v2588
        %v2609 = vadd.f32 %v2282, %v2589
        %v2610 = vadd.f32 %v2283, %v2568
        %v2611 = vadd.f32 %v2284, %v2590
        %v2612 = vadd.f32 %v2285, %v2591
        %v2613 = vadd.f32 %v2286, %v2574
        %v2614 = vadd.f32 %v2287, %v2592
        %v2615 = vadd.f32 %v2288, %v2593
        %v2616 = vadd.f32 %v2289, %v2580
        %v2617 = vadd.f32 %v2290, %v2594
        %v2618 = vadd.f32 %v2291, %v2595
        %v2619 = vadd.f32 %v2292, %v2586
        %2620 = vset.pattern.permute.xlu0 18
        %2621 = vperm.xlu0 %2620, %v1127
        %v2622 = vpop.permute.xlu0 %2621
        %2624 = vset.pattern.permute.xlu0 18
        %2625 = vperm.xlu0 %2624, %v1128
        %v2626 = vpop.permute.xlu0 %2625
        %2628 = vset.pattern.permute.xlu0 18
        %2629 = vperm.xlu0 %2628, %v1129
        %v2630 = vpop.permute.xlu0 %2629
        %2632 = vset.pattern.permute.xlu0 18
        %2633 = vperm.xlu0 %2632, %v1130
        %v2634 = vpop.permute.xlu0 %2633
        %v2636 = vadd.f32 %v2608, %v2622
        %v2637 = vadd.f32 %v2609, %v2622
        %v2638 = vadd.f32 %v2610, %v2622
        %v2639 = vadd.f32 %v2611, %v2626
        %v2640 = vadd.f32 %v2612, %v2626
        %v2641 = vadd.f32 %v2613, %v2626
        %v2642 = vadd.f32 %v2614, %v2630
        %v2643 = vadd.f32 %v2615, %v2630
        %v2644 = vadd.f32 %v2616, %v2630
        %v2645 = vadd.f32 %v2617, %v2634
        %v2646 = vadd.f32 %v2618, %v2634
        %v2647 = vadd.f32 %v2619, %v2634
        %2660 = vrot.lane.b32.xlu0 %v2636, 33
        %v2661 = vpop.permute.xlu0 %2660
        %2662 = vrot.lane.b32.xlu0 %v2637, 33
        %v2663 = vpop.permute.xlu0 %2662
        %2664 = vrot.lane.b32.xlu0 %v2638, 33
        %v2665 = vpop.permute.xlu0 %2664
        %2666 = vrot.lane.b32.xlu0 %v2639, 33
        %v2667 = vpop.permute.xlu0 %2666
        %2668 = vrot.lane.b32.xlu0 %v2640, 33
        %v2669 = vpop.permute.xlu0 %2668
        %2670 = vrot.lane.b32.xlu0 %v2641, 33
        %v2671 = vpop.permute.xlu0 %2670
        %2672 = vrot.lane.b32.xlu0 %v2642, 33
        %v2673 = vpop.permute.xlu0 %2672
        %2674 = vrot.lane.b32.xlu0 %v2643, 33
        %v2675 = vpop.permute.xlu0 %2674
        %2676 = vrot.lane.b32.xlu0 %v2644, 33
        %v2677 = vpop.permute.xlu0 %2676
        %2678 = vrot.lane.b32.xlu0 %v2645, 33
        %v2679 = vpop.permute.xlu0 %2678
        %2680 = vrot.lane.b32.xlu0 %v2646, 33
        %v2681 = vpop.permute.xlu0 %2680
        %2682 = vrot.lane.b32.xlu0 %v2647, 33
        %v2683 = vpop.permute.xlu0 %2682
        %vm2684 = vcmask 269312
        %v2685 = vsel %vm2684, %v2661, %v2663
        %v2686 = vsel %vm2684, %v2663, %v2665
        %v2687 = vsel %vm2684, %v2667, %v2669
        %v2688 = vsel %vm2684, %v2669, %v2671
        %v2689 = vsel %vm2684, %v2673, %v2675
        %v2690 = vsel %vm2684, %v2675, %v2677
        %v2691 = vsel %vm2684, %v2679, %v2681
        %v2692 = vsel %vm2684, %v2681, %v2683
        %v2702 = vsel %vm1533, %v1709, 0
        %2704 = vmatpush.msra.mxu0 0.0
        %2705 = vmatpush.msra.mxu0 0.0
        %2706 = vmatpush.msra.mxu0 0.0
        %2707 = vmatpush.msra.mxu0 0.0
        %2708 = vmatpush.msra.mxu0 0.0
        %2709 = vmatpush.msra.mxu0 0.0
        %2710 = vmatpush.msra.mxu0 0.0
        %2711 = vmatpush.msra.mxu0 0.0
        %2712 = vmatpush.msra.mxu0 0.0
        %2713 = vmatpush.msra.mxu0 0.0
        %2714 = vmatpush.msra.mxu0 0.0
        %2715 = vmatpush.msra.mxu0 0.0
        %2716 = vmatpush.msra.mxu0 %v2691
        %2717 = vmatpush.msra.mxu0 %v2689
        %2718 = vmatpush.msra.mxu0 %v2687
        %2719 = vmatpush.msra.mxu0 %v2685
        %2720 = vmatmul.f32.gmra.mxu0 %v2702
        %v2721 = vpop.f32.mrf.mxu0
        %v2722 = vadd.f32 %v1716, %v2721
        %2723 = vdwg.mxu0
        %2724 = vmatpush.msra.mxu0 0.0
        %2725 = vmatpush.msra.mxu0 0.0
        %2726 = vmatpush.msra.mxu0 0.0
        %2727 = vmatpush.msra.mxu0 0.0
        %2728 = vmatpush.msra.mxu0 0.0
        %2729 = vmatpush.msra.mxu0 0.0
        %2730 = vmatpush.msra.mxu0 0.0
        %2731 = vmatpush.msra.mxu0 0.0
        %2732 = vmatpush.msra.mxu0 0.0
        %2733 = vmatpush.msra.mxu0 0.0
        %2734 = vmatpush.msra.mxu0 0.0
        %2735 = vmatpush.msra.mxu0 0.0
        %2736 = vmatpush.msra.mxu0 %v2692
        %2737 = vmatpush.msra.mxu0 %v2690
        %2738 = vmatpush.msra.mxu0 %v2688
        %2739 = vmatpush.msra.mxu0 %v2686
        %2740 = vmatmul.f32.gmra.mxu0 %v2702
        %v2741 = vpop.f32.mrf.mxu0
        %v2742 = vadd.f32 %v1716, %v2741
        %2743 = vdwg.mxu0
        %vm2744 = vcmask 1043456
        %v2745 = vsel %vm2744, %v2722, -inf
        %v2746 = vrot.slane %v2745, 4
        %v2747 = vmax.f32 %v2745, %v2746
        %v2748 = vrot.slane %v2747, 2
        %v2749 = vmax.f32 %v2747, %v2748
        %v2750 = vrot.slane %v2749, 1
        %v2751 = vmax.f32 %v2749, %v2750
        %v2752 = vsel %vm2744, %v2742, -inf
        %v2753 = vrot.slane %v2752, 4
        %v2754 = vmax.f32 %v2752, %v2753
        %v2755 = vrot.slane %v2754, 2
        %v2756 = vmax.f32 %v2754, %v2755
        %v2757 = vrot.slane %v2756, 1
        %v2758 = vmax.f32 %v2756, %v2757
        %v2759 = vsub.f32 %v2722, %v2751
        %v2760 = vsub.f32 %v2742, %v2758
        %v2761 = vmul.f32 %v2759, 1.442695
        %v2762 = vpow.pop %v2761
        %v2763 = vmul.f32 %v2760, 1.442695
        %v2764 = vpow.pop %v2763
        %v2765 = vsel %vm2744, %v2762, 0.0
        %v2766 = vrot.slane %v2765, 4
        %v2767 = vadd.f32 %v2765, %v2766
        %v2768 = vrot.slane %v2767, 2
        %v2769 = vadd.f32 %v2767, %v2768
        %v2770 = vrot.slane %v2769, 1
        %v2771 = vadd.f32 %v2769, %v2770
        %v2772 = vsel %vm2744, %v2764, 0.0
        %v2773 = vrot.slane %v2772, 4
        %v2774 = vadd.f32 %v2772, %v2773
        %v2775 = vrot.slane %v2774, 2
        %v2776 = vadd.f32 %v2774, %v2775
        %v2777 = vrot.slane %v2776, 1
        %v2778 = vadd.f32 %v2776, %v2777
        %v2779 = vrcp.pop %v2771
        %v2780 = vmul.f32 %v2771, %v2779
        %v2781 = vsub.f32 1.0, %v2780
        %v2782 = vmul.f32 %v2779, %v2781
        %v2783 = vadd.f32 %v2779, %v2782
        %vm2784 = vweird.f32 %v2771
        %vm2785 = vweird.f32 %v2779
        %vm2786 = vmor %vm2784, %vm2785
        %v2787 = vsel %vm2786, %v2779, %v2783
        %v2788 = vand.u32 2147483647, %v2771
        %vm2789 = vcmp.eq.f32.partialorder %v2788, 8.507059e+37
        %v2790 = vand.u32 %v2771, 2147483648
        %v2791 = vor.u32 1.1754944e-38, %v2790
        %v2792 = vsel %vm2789, %v2791, %v2787
        %v2793 = vmul.f32 1.0, %v2792
        %v2794 = vrcp.pop %v2778
        %v2795 = vmul.f32 %v2778, %v2794
        %v2796 = vsub.f32 1.0, %v2795
        %v2797 = vmul.f32 %v2794, %v2796
        %v2798 = vadd.f32 %v2794, %v2797
        %vm2799 = vweird.f32 %v2778
        %vm2800 = vweird.f32 %v2794
        %vm2801 = vmor %vm2799, %vm2800
        %v2802 = vsel %vm2801, %v2794, %v2798
        %v2803 = vand.u32 2147483647, %v2778
        %vm2804 = vcmp.eq.f32.partialorder %v2803, 8.507059e+37
        %v2805 = vand.u32 %v2778, 2147483648
        %v2806 = vor.u32 1.1754944e-38, %v2805
        %v2807 = vsel %vm2804, %v2806, %v2802
        %v2808 = vmul.f32 1.0, %v2807
        %v2809 = vmul.f32 %v2762, %v2793
        %v2810 = vmul.f32 %v2764, %v2808
        %2811 = vset.pattern.permute.xlu0 21
        %2812 = vperm.xlu0 %2811, %v1127
        %v2813 = vpop.permute.xlu0 %2812
        %2815 = vset.pattern.permute.xlu0 21
        %2816 = vperm.xlu0 %2815, %v1128
        %v2817 = vpop.permute.xlu0 %2816
        %2819 = vset.pattern.permute.xlu0 21
        %2820 = vperm.xlu0 %2819, %v1129
        %v2821 = vpop.permute.xlu0 %2820
        %2823 = vset.pattern.permute.xlu0 21
        %2824 = vperm.xlu0 %2823, %v1130
        %v2825 = vpop.permute.xlu0 %2824
        %vm2827 = vcmask 31744
        %v2829 = vsel %vm2827, %v1605, 0
        %v2832 = vsel %vm2827, %v1608, 0
        %v2835 = vsel %vm2827, %v1611, 0
        %v2838 = vsel %vm2827, %v1614, 0
        %v2841 = vsel %vm2744, %v2809, 0
        %v2844 = vsel %vm2744, %v2810, 0
        %2846 = vmatpush.msra.mxu0 0.0
        %2847 = vmatpush.msra.mxu0 0.0
        %2848 = vmatpush.msra.mxu0 0.0
        %2849 = vmatpush.msra.mxu0 0.0
        %2850 = vmatpush.msra.mxu0 0.0
        %2851 = vmatpush.msra.mxu0 0.0
        %2852 = vmatpush.msra.mxu0 0.0
        %2853 = vmatpush.msra.mxu0 0.0
        %2854 = vmatpush.msra.mxu0 0.0
        %2855 = vmatpush.msra.mxu0 0.0
        %2856 = vmatpush.msra.mxu0 0.0
        %2857 = vmatpush.msra.mxu0 0.0
        %2858 = vmatpush.msra.mxu0 0.0
        %2859 = vmatpush.msra.mxu0 0.0
        %2860 = vmatpush.msra.mxu0 0.0
        %2861 = vmatpush.msra.mxu0 %v2841
        %2862 = vmatmul.f32.gmra.mxu0 %v2829
        %v2863 = vpop.f32.mrf.mxu0
        %v2864 = vadd.f32 %v2813, %v2863
        %2865 = vmatmul.f32.gmra.mxu0 %v2832
        %v2866 = vpop.f32.mrf.mxu0
        %v2867 = vadd.f32 %v2817, %v2866
        %2868 = vmatmul.f32.gmra.mxu0 %v2835
        %v2869 = vpop.f32.mrf.mxu0
        %v2870 = vadd.f32 %v2821, %v2869
        %2871 = vmatmul.f32.gmra.mxu0 %v2838
        %v2872 = vpop.f32.mrf.mxu0
        %v2873 = vadd.f32 %v2825, %v2872
        %2874 = vdwg.mxu0
        %2875 = vmatpush.msra.mxu0 0.0
        %2876 = vmatpush.msra.mxu0 0.0
        %2877 = vmatpush.msra.mxu0 0.0
        %2878 = vmatpush.msra.mxu0 0.0
        %2879 = vmatpush.msra.mxu0 0.0
        %2880 = vmatpush.msra.mxu0 0.0
        %2881 = vmatpush.msra.mxu0 0.0
        %2882 = vmatpush.msra.mxu0 0.0
        %2883 = vmatpush.msra.mxu0 0.0
        %2884 = vmatpush.msra.mxu0 0.0
        %2885 = vmatpush.msra.mxu0 0.0
        %2886 = vmatpush.msra.mxu0 0.0
        %2887 = vmatpush.msra.mxu0 0.0
        %2888 = vmatpush.msra.mxu0 0.0
        %2889 = vmatpush.msra.mxu0 0.0
        %2890 = vmatpush.msra.mxu0 %v2844
        %2891 = vmatmul.f32.gmra.mxu0 %v2829
        %v2892 = vpop.f32.mrf.mxu0
        %v2893 = vadd.f32 %v2813, %v2892
        %2894 = vmatmul.f32.gmra.mxu0 %v2832
        %v2895 = vpop.f32.mrf.mxu0
        %v2896 = vadd.f32 %v2817, %v2895
        %2897 = vmatmul.f32.gmra.mxu0 %v2835
        %v2898 = vpop.f32.mrf.mxu0
        %v2899 = vadd.f32 %v2821, %v2898
        %2900 = vmatmul.f32.gmra.mxu0 %v2838
        %v2901 = vpop.f32.mrf.mxu0
        %v2902 = vadd.f32 %v2825, %v2901
        %2903 = vdwg.mxu0
        %v2904 = vadd.f32 %v1718, %v2864
        %v2905 = vadd.f32 %v1719, %v2893
        %v2906 = vadd.f32 %v1721, %v2867
        %v2907 = vadd.f32 %v1722, %v2896
        %v2908 = vadd.f32 %v1724, %v2870
        %v2909 = vadd.f32 %v1725, %v2899
        %v2910 = vadd.f32 %v1727, %v2873
        %v2911 = vadd.f32 %v1728, %v2902
        %2912 = vst [vmem:[%s268] sm:$0xff] %v2904
        %2913 = vst [vmem:[%s268 + $0x8] sm:$0xff] %v2905
        %2914 = vst [vmem:[%s268 + $0x40] sm:$0xff] %v2906
        %2915 = vst [vmem:[%s268 + $0x48] sm:$0xff] %v2907
        %2916 = vst [vmem:[%s268 + $0x80] sm:$0xff] %v2908
        %2917 = vst [vmem:[%s268 + $0x88] sm:$0xff] %v2909
        %2918 = vst [vmem:[%s268 + $0xc0] sm:$0xff] %v2910
        %2919 = vst [vmem:[%s268 + $0xc8] sm:$0xff] %v2911
        %v2920 = vld [vmem:[#allocation2 + $0x10] sm:$0xff]
        %v2921 = vld [vmem:[#allocation2 + $0x18] sm:$0xff]
        %v2922 = vld [vmem:[#allocation2 + $0x20] sm:$0xff]
        %v2923 = vld [vmem:[#allocation2 + $0x60] sm:$0xff]
        %v2924 = vld [vmem:[#allocation2 + $0x68] sm:$0xff]
        %v2925 = vld [vmem:[#allocation2 + $0x70] sm:$0xff]
        %v2926 = vld [vmem:[#allocation2 + $0xb0] sm:$0xff]
        %v2927 = vld [vmem:[#allocation2 + $0xb8] sm:$0xff]
        %v2928 = vld [vmem:[#allocation2 + $0xc0] sm:$0xff]
        %v2929 = vld [vmem:[#allocation2 + $0x100] sm:$0xff]
        %v2930 = vld [vmem:[#allocation2 + $0x108] sm:$0xff]
        %v2931 = vld [vmem:[#allocation2 + $0x110] sm:$0xff]
        %v2932 = vmul.f32 %v2920, %v1731
        %v2933 = vmul.f32 %v2921, %v1731
        %v2934 = vmul.f32 %v2922, %v1731
        %v2935 = vmul.f32 %v2923, %v1735
        %v2936 = vmul.f32 %v2924, %v1735
        %v2937 = vmul.f32 %v2925, %v1735
        %v2938 = vmul.f32 %v2926, %v1739
        %v2939 = vmul.f32 %v2927, %v1739
        %v2940 = vmul.f32 %v2928, %v1739
        %v2941 = vmul.f32 %v2929, %v1743
        %v2942 = vmul.f32 %v2930, %v1743
        %v2943 = vmul.f32 %v2931, %v1743
        %v2944 = vadd.f32 %v2932, 0.0
        %v2945 = vadd.f32 %v2933, 0.0
        %v2946 = vadd.f32 %v2934, 0.0
        %v2947 = vadd.f32 %v2935, 0.0
        %v2948 = vadd.f32 %v2936, 0.0
        %v2949 = vadd.f32 %v2937, 0.0
        %v2950 = vadd.f32 %v2938, 0.0
        %v2951 = vadd.f32 %v2939, 0.0
        %v2952 = vadd.f32 %v2940, 0.0
        %v2953 = vadd.f32 %v2941, 0.0
        %v2954 = vadd.f32 %v2942, 0.0
        %v2955 = vadd.f32 %v2943, 0.0
        %v2956 = vmul.f32 %v2920, %v1771
        %v2957 = vmul.f32 %v2921, %v1771
        %v2958 = vmul.f32 %v2922, %v1771
        %v2959 = vmul.f32 %v2923, %v1775
        %v2960 = vmul.f32 %v2924, %v1775
        %v2961 = vmul.f32 %v2925, %v1775
        %v2962 = vmul.f32 %v2926, %v1779
        %v2963 = vmul.f32 %v2927, %v1779
        %v2964 = vmul.f32 %v2928, %v1779
        %v2965 = vmul.f32 %v2929, %v1783
        %v2966 = vmul.f32 %v2930, %v1783
        %v2967 = vmul.f32 %v2931, %v1783
        %2980 = vrot.lane.b32.xlu0 %v2956, 96
        %v2981 = vpop.permute.xlu0 %2980
        %2982 = vrot.lane.b32.xlu0 %v2957, 96
        %v2983 = vpop.permute.xlu0 %2982
        %2984 = vrot.lane.b32.xlu0 %v2958, 96
        %v2985 = vpop.permute.xlu0 %2984
        %2986 = vrot.lane.b32.xlu0 %v2959, 96
        %v2987 = vpop.permute.xlu0 %2986
        %2988 = vrot.lane.b32.xlu0 %v2960, 96
        %v2989 = vpop.permute.xlu0 %2988
        %2990 = vrot.lane.b32.xlu0 %v2961, 96
        %v2991 = vpop.permute.xlu0 %2990
        %2992 = vrot.lane.b32.xlu0 %v2962, 96
        %v2993 = vpop.permute.xlu0 %2992
        %2994 = vrot.lane.b32.xlu0 %v2963, 96
        %v2995 = vpop.permute.xlu0 %2994
        %2996 = vrot.lane.b32.xlu0 %v2964, 96
        %v2997 = vpop.permute.xlu0 %2996
        %2998 = vrot.lane.b32.xlu0 %v2965, 96
        %v2999 = vpop.permute.xlu0 %2998
        %3000 = vrot.lane.b32.xlu0 %v2966, 96
        %v3001 = vpop.permute.xlu0 %3000
        %3002 = vrot.lane.b32.xlu0 %v2967, 96
        %v3003 = vpop.permute.xlu0 %3002
        %v3004 = vsel %vm1833, %v2981, %v2983
        %v3005 = vsel %vm1833, %v2983, %v2985
        %v3006 = vsel %vm1833, %v2987, %v2989
        %v3007 = vsel %vm1833, %v2989, %v2991
        %v3008 = vsel %vm1833, %v2993, %v2995
        %v3009 = vsel %vm1833, %v2995, %v2997
        %v3010 = vsel %vm1833, %v2999, %v3001
        %v3011 = vsel %vm1833, %v3001, %v3003
        %v3024 = vadd.f32 %v2944, %v3004
        %v3025 = vadd.f32 %v2945, %v3005
        %v3026 = vadd.f32 %v2946, %v2985
        %v3027 = vadd.f32 %v2947, %v3006
        %v3028 = vadd.f32 %v2948, %v3007
        %v3029 = vadd.f32 %v2949, %v2991
        %v3030 = vadd.f32 %v2950, %v3008
        %v3031 = vadd.f32 %v2951, %v3009
        %v3032 = vadd.f32 %v2952, %v2997
        %v3033 = vadd.f32 %v2953, %v3010
        %v3034 = vadd.f32 %v2954, %v3011
        %v3035 = vadd.f32 %v2955, %v3003
        %v3036 = vld [vmem:[#allocation2 + $0x28] sm:$0xff]
        %v3037 = vld [vmem:[#allocation2 + $0x78] sm:$0xff]
        %v3038 = vld [vmem:[#allocation2 + $0xc8] sm:$0xff]
        %v3039 = vld [vmem:[#allocation2 + $0x118] sm:$0xff]
        %v3040 = vmul.f32 %v2921, %v1880
        %v3041 = vmul.f32 %v2922, %v1880
        %v3042 = vmul.f32 %v3036, %v1880
        %v3043 = vmul.f32 %v2924, %v1884
        %v3044 = vmul.f32 %v2925, %v1884
        %v3045 = vmul.f32 %v3037, %v1884
        %v3046 = vmul.f32 %v2927, %v1888
        %v3047 = vmul.f32 %v2928, %v1888
        %v3048 = vmul.f32 %v3038, %v1888
        %v3049 = vmul.f32 %v2930, %v1892
        %v3050 = vmul.f32 %v2931, %v1892
        %v3051 = vmul.f32 %v3039, %v1892
        %3064 = vrot.lane.b32.xlu0 %v3040, 64
        %v3065 = vpop.permute.xlu0 %3064
        %3066 = vrot.lane.b32.xlu0 %v3041, 64
        %v3067 = vpop.permute.xlu0 %3066
        %3068 = vrot.lane.b32.xlu0 %v3042, 64
        %v3069 = vpop.permute.xlu0 %3068
        %3070 = vrot.lane.b32.xlu0 %v3043, 64
        %v3071 = vpop.permute.xlu0 %3070
        %3072 = vrot.lane.b32.xlu0 %v3044, 64
        %v3073 = vpop.permute.xlu0 %3072
        %3074 = vrot.lane.b32.xlu0 %v3045, 64
        %v3075 = vpop.permute.xlu0 %3074
        %3076 = vrot.lane.b32.xlu0 %v3046, 64
        %v3077 = vpop.permute.xlu0 %3076
        %3078 = vrot.lane.b32.xlu0 %v3047, 64
        %v3079 = vpop.permute.xlu0 %3078
        %3080 = vrot.lane.b32.xlu0 %v3048, 64
        %v3081 = vpop.permute.xlu0 %3080
        %3082 = vrot.lane.b32.xlu0 %v3049, 64
        %v3083 = vpop.permute.xlu0 %3082
        %3084 = vrot.lane.b32.xlu0 %v3050, 64
        %v3085 = vpop.permute.xlu0 %3084
        %3086 = vrot.lane.b32.xlu0 %v3051, 64
        %v3087 = vpop.permute.xlu0 %3086
        %v3088 = vsel %vm1942, %v3065, %v3067
        %v3089 = vsel %vm1942, %v3067, %v3069
        %v3090 = vsel %vm1942, %v3071, %v3073
        %v3091 = vsel %vm1942, %v3073, %v3075
        %v3092 = vsel %vm1942, %v3077, %v3079
        %v3093 = vsel %vm1942, %v3079, %v3081
        %v3094 = vsel %vm1942, %v3083, %v3085
        %v3095 = vsel %vm1942, %v3085, %v3087
        %v3108 = vadd.f32 %v3024, %v3065
        %v3109 = vadd.f32 %v3025, %v3088
        %v3110 = vadd.f32 %v3026, %v3089
        %v3111 = vadd.f32 %v3027, %v3071
        %v3112 = vadd.f32 %v3028, %v3090
        %v3113 = vadd.f32 %v3029, %v3091
        %v3114 = vadd.f32 %v3030, %v3077
        %v3115 = vadd.f32 %v3031, %v3092
        %v3116 = vadd.f32 %v3032, %v3093
        %v3117 = vadd.f32 %v3033, %v3083
        %v3118 = vadd.f32 %v3034, %v3094
        %v3119 = vadd.f32 %v3035, %v3095
        %s3120 = scalar_lea.vmem %s3, 4
        %v3121 = vld [vmem:[%s3120] ss:$2 sm:$0x3]
        %v3123 = vperm.slane %v3121, 0
        %v3124 = vperm.slane %v3121, 1
        %3125 = vrot.lane.b32.xlu0 %v3123, 95
        %v3126 = vpop.permute.xlu0 %3125
        %3127 = vrot.lane.b32.xlu0 %v3124, 95
        %v3128 = vpop.permute.xlu0 %3127
        %v3129 = vsel %vm1983, %v3126, %v3128
        %v3133 = vmul.f32 %v3108, %v3126
        %v3134 = vmul.f32 %v3109, %v3129
        %v3135 = vmul.f32 %v3110, %v3128
        %v3136 = vmul.f32 %v3111, %v3126
        %v3137 = vmul.f32 %v3112, %v3129
        %v3138 = vmul.f32 %v3113, %v3128
        %v3139 = vmul.f32 %v3114, %v3126
        %v3140 = vmul.f32 %v3115, %v3129
        %v3141 = vmul.f32 %v3116, %v3128
        %v3142 = vmul.f32 %v3117, %v3126
        %v3143 = vmul.f32 %v3118, %v3129
        %v3144 = vmul.f32 %v3119, %v3128
        %v3145 = vadd.f32 %v3133, 0.0
        %v3146 = vadd.f32 %v3134, 0.0
        %v3147 = vadd.f32 %v3135, 0.0
        %v3148 = vadd.f32 %v3136, 0.0
        %v3149 = vadd.f32 %v3137, 0.0
        %v3150 = vadd.f32 %v3138, 0.0
        %v3151 = vadd.f32 %v3139, 0.0
        %v3152 = vadd.f32 %v3140, 0.0
        %v3153 = vadd.f32 %v3141, 0.0
        %v3154 = vadd.f32 %v3142, 0.0
        %v3155 = vadd.f32 %v3143, 0.0
        %v3156 = vadd.f32 %v3144, 0.0
        %v3157 = vmul.f32 %v2920, %v2014
        %v3158 = vmul.f32 %v2921, %v2014
        %v3159 = vmul.f32 %v2922, %v2014
        %v3160 = vmul.f32 %v2923, %v2018
        %v3161 = vmul.f32 %v2924, %v2018
        %v3162 = vmul.f32 %v2925, %v2018
        %v3163 = vmul.f32 %v2926, %v2022
        %v3164 = vmul.f32 %v2927, %v2022
        %v3165 = vmul.f32 %v2928, %v2022
        %v3166 = vmul.f32 %v2929, %v2026
        %v3167 = vmul.f32 %v2930, %v2026
        %v3168 = vmul.f32 %v2931, %v2026
        %v3169 = vadd.f32 %v3157, 0.0
        %v3170 = vadd.f32 %v3158, 0.0
        %v3171 = vadd.f32 %v3159, 0.0
        %v3172 = vadd.f32 %v3160, 0.0
        %v3173 = vadd.f32 %v3161, 0.0
        %v3174 = vadd.f32 %v3162, 0.0
        %v3175 = vadd.f32 %v3163, 0.0
        %v3176 = vadd.f32 %v3164, 0.0
        %v3177 = vadd.f32 %v3165, 0.0
        %v3178 = vadd.f32 %v3166, 0.0
        %v3179 = vadd.f32 %v3167, 0.0
        %v3180 = vadd.f32 %v3168, 0.0
        %v3181 = vmul.f32 %v2921, %v2054
        %v3182 = vmul.f32 %v2922, %v2054
        %v3183 = vmul.f32 %v2924, %v2058
        %v3184 = vmul.f32 %v2925, %v2058
        %v3185 = vmul.f32 %v2927, %v2062
        %v3186 = vmul.f32 %v2928, %v2062
        %v3187 = vmul.f32 %v2930, %v2066
        %v3188 = vmul.f32 %v2931, %v2066
        %3197 = vrot.lane.b32.xlu0 %v3181, 96
        %v3198 = vpop.permute.xlu0 %3197
        %3199 = vrot.lane.b32.xlu0 %v3182, 96
        %v3200 = vpop.permute.xlu0 %3199
        %3201 = vrot.lane.b32.xlu0 %v3183, 96
        %v3202 = vpop.permute.xlu0 %3201
        %3203 = vrot.lane.b32.xlu0 %v3184, 96
        %v3204 = vpop.permute.xlu0 %3203
        %3205 = vrot.lane.b32.xlu0 %v3185, 96
        %v3206 = vpop.permute.xlu0 %3205
        %3207 = vrot.lane.b32.xlu0 %v3186, 96
        %v3208 = vpop.permute.xlu0 %3207
        %3209 = vrot.lane.b32.xlu0 %v3187, 96
        %v3210 = vpop.permute.xlu0 %3209
        %3211 = vrot.lane.b32.xlu0 %v3188, 96
        %v3212 = vpop.permute.xlu0 %3211
        %v3213 = vsel %vm1833, %v3198, %v3200
        %v3214 = vsel %vm1833, %v3202, %v3204
        %v3215 = vsel %vm1833, %v3206, %v3208
        %v3216 = vsel %vm1833, %v3210, %v3212
        %v3229 = vadd.f32 %v3169, %v3198
        %v3230 = vadd.f32 %v3170, %v3213
        %v3231 = vadd.f32 %v3171, %v3200
        %v3232 = vadd.f32 %v3172, %v3202
        %v3233 = vadd.f32 %v3173, %v3214
        %v3234 = vadd.f32 %v3174, %v3204
        %v3235 = vadd.f32 %v3175, %v3206
        %v3236 = vadd.f32 %v3176, %v3215
        %v3237 = vadd.f32 %v3177, %v3208
        %v3238 = vadd.f32 %v3178, %v3210
        %v3239 = vadd.f32 %v3179, %v3216
        %v3240 = vadd.f32 %v3180, %v3212
        %v3241 = vmul.f32 %v2921, %v2130
        %v3242 = vmul.f32 %v2922, %v2130
        %v3243 = vmul.f32 %v3036, %v2130
        %v3244 = vmul.f32 %v2924, %v2134
        %v3245 = vmul.f32 %v2925, %v2134
        %v3246 = vmul.f32 %v3037, %v2134
        %v3247 = vmul.f32 %v2927, %v2138
        %v3248 = vmul.f32 %v2928, %v2138
        %v3249 = vmul.f32 %v3038, %v2138
        %v3250 = vmul.f32 %v2930, %v2142
        %v3251 = vmul.f32 %v2931, %v2142
        %v3252 = vmul.f32 %v3039, %v2142
        %3265 = vrot.lane.b32.xlu0 %v3241, 64
        %v3266 = vpop.permute.xlu0 %3265
        %3267 = vrot.lane.b32.xlu0 %v3242, 64
        %v3268 = vpop.permute.xlu0 %3267
        %3269 = vrot.lane.b32.xlu0 %v3243, 64
        %v3270 = vpop.permute.xlu0 %3269
        %3271 = vrot.lane.b32.xlu0 %v3244, 64
        %v3272 = vpop.permute.xlu0 %3271
        %3273 = vrot.lane.b32.xlu0 %v3245, 64
        %v3274 = vpop.permute.xlu0 %3273
        %3275 = vrot.lane.b32.xlu0 %v3246, 64
        %v3276 = vpop.permute.xlu0 %3275
        %3277 = vrot.lane.b32.xlu0 %v3247, 64
        %v3278 = vpop.permute.xlu0 %3277
        %3279 = vrot.lane.b32.xlu0 %v3248, 64
        %v3280 = vpop.permute.xlu0 %3279
        %3281 = vrot.lane.b32.xlu0 %v3249, 64
        %v3282 = vpop.permute.xlu0 %3281
        %3283 = vrot.lane.b32.xlu0 %v3250, 64
        %v3284 = vpop.permute.xlu0 %3283
        %3285 = vrot.lane.b32.xlu0 %v3251, 64
        %v3286 = vpop.permute.xlu0 %3285
        %3287 = vrot.lane.b32.xlu0 %v3252, 64
        %v3288 = vpop.permute.xlu0 %3287
        %v3289 = vsel %vm1942, %v3266, %v3268
        %v3290 = vsel %vm1942, %v3268, %v3270
        %v3291 = vsel %vm1942, %v3272, %v3274
        %v3292 = vsel %vm1942, %v3274, %v3276
        %v3293 = vsel %vm1942, %v3278, %v3280
        %v3294 = vsel %vm1942, %v3280, %v3282
        %v3295 = vsel %vm1942, %v3284, %v3286
        %v3296 = vsel %vm1942, %v3286, %v3288
        %v3309 = vadd.f32 %v3229, %v3266
        %v3310 = vadd.f32 %v3230, %v3289
        %v3311 = vadd.f32 %v3231, %v3290
        %v3312 = vadd.f32 %v3232, %v3272
        %v3313 = vadd.f32 %v3233, %v3291
        %v3314 = vadd.f32 %v3234, %v3292
        %v3315 = vadd.f32 %v3235, %v3278
        %v3316 = vadd.f32 %v3236, %v3293
        %v3317 = vadd.f32 %v3237, %v3294
        %v3318 = vadd.f32 %v3238, %v3284
        %v3319 = vadd.f32 %v3239, %v3295
        %v3320 = vadd.f32 %v3240, %v3296
        %3333 = vrot.lane.b32.xlu0 %v3309, 127
        %v3334 = vpop.permute.xlu0 %3333
        %3335 = vrot.lane.b32.xlu0 %v3310, 127
        %v3336 = vpop.permute.xlu0 %3335
        %3337 = vrot.lane.b32.xlu0 %v3311, 127
        %v3338 = vpop.permute.xlu0 %3337
        %3339 = vrot.lane.b32.xlu0 %v3312, 127
        %v3340 = vpop.permute.xlu0 %3339
        %3341 = vrot.lane.b32.xlu0 %v3313, 127
        %v3342 = vpop.permute.xlu0 %3341
        %3343 = vrot.lane.b32.xlu0 %v3314, 127
        %v3344 = vpop.permute.xlu0 %3343
        %3345 = vrot.lane.b32.xlu0 %v3315, 127
        %v3346 = vpop.permute.xlu0 %3345
        %3347 = vrot.lane.b32.xlu0 %v3316, 127
        %v3348 = vpop.permute.xlu0 %3347
        %3349 = vrot.lane.b32.xlu0 %v3317, 127
        %v3350 = vpop.permute.xlu0 %3349
        %3351 = vrot.lane.b32.xlu0 %v3318, 127
        %v3352 = vpop.permute.xlu0 %3351
        %3353 = vrot.lane.b32.xlu0 %v3319, 127
        %v3354 = vpop.permute.xlu0 %3353
        %3355 = vrot.lane.b32.xlu0 %v3320, 127
        %v3356 = vpop.permute.xlu0 %3355
        %v3357 = vsel %vm2260, %v3334, %v3336
        %v3358 = vsel %vm2260, %v3336, %v3338
        %v3359 = vsel %vm2260, %v3340, %v3342
        %v3360 = vsel %vm2260, %v3342, %v3344
        %v3361 = vsel %vm2260, %v3346, %v3348
        %v3362 = vsel %vm2260, %v3348, %v3350
        %v3363 = vsel %vm2260, %v3352, %v3354
        %v3364 = vsel %vm2260, %v3354, %v3356
        %v3377 = vadd.f32 %v3145, %v3357
        %v3378 = vadd.f32 %v3146, %v3358
        %v3379 = vadd.f32 %v3147, %v3338
        %v3380 = vadd.f32 %v3148, %v3359
        %v3381 = vadd.f32 %v3149, %v3360
        %v3382 = vadd.f32 %v3150, %v3344
        %v3383 = vadd.f32 %v3151, %v3361
        %v3384 = vadd.f32 %v3152, %v3362
        %v3385 = vadd.f32 %v3153, %v3350
        %v3386 = vadd.f32 %v3154, %v3363
        %v3387 = vadd.f32 %v3155, %v3364
        %v3388 = vadd.f32 %v3156, %v3356
        %v3389 = vmul.f32 %v2920, %v2295
        %v3390 = vmul.f32 %v2921, %v2295
        %v3391 = vmul.f32 %v2922, %v2295
        %v3392 = vmul.f32 %v2923, %v2299
        %v3393 = vmul.f32 %v2924, %v2299
        %v3394 = vmul.f32 %v2925, %v2299
        %v3395 = vmul.f32 %v2926, %v2303
        %v3396 = vmul.f32 %v2927, %v2303
        %v3397 = vmul.f32 %v2928, %v2303
        %v3398 = vmul.f32 %v2929, %v2307
        %v3399 = vmul.f32 %v2930, %v2307
        %v3400 = vmul.f32 %v2931, %v2307
        %v3401 = vadd.f32 %v3389, 0.0
        %v3402 = vadd.f32 %v3390, 0.0
        %v3403 = vadd.f32 %v3391, 0.0
        %v3404 = vadd.f32 %v3392, 0.0
        %v3405 = vadd.f32 %v3393, 0.0
        %v3406 = vadd.f32 %v3394, 0.0
        %v3407 = vadd.f32 %v3395, 0.0
        %v3408 = vadd.f32 %v3396, 0.0
        %v3409 = vadd.f32 %v3397, 0.0
        %v3410 = vadd.f32 %v3398, 0.0
        %v3411 = vadd.f32 %v3399, 0.0
        %v3412 = vadd.f32 %v3400, 0.0
        %v3413 = vmul.f32 %v2921, %v2335
        %v3414 = vmul.f32 %v2922, %v2335
        %v3415 = vmul.f32 %v3036, %v2335
        %v3416 = vmul.f32 %v2924, %v2339
        %v3417 = vmul.f32 %v2925, %v2339
        %v3418 = vmul.f32 %v3037, %v2339
        %v3419 = vmul.f32 %v2927, %v2343
        %v3420 = vmul.f32 %v2928, %v2343
        %v3421 = vmul.f32 %v3038, %v2343
        %v3422 = vmul.f32 %v2930, %v2347
        %v3423 = vmul.f32 %v2931, %v2347
        %v3424 = vmul.f32 %v3039, %v2347
        %3437 = vrot.lane.b32.xlu0 %v3413, 96
        %v3438 = vpop.permute.xlu0 %3437
        %3439 = vrot.lane.b32.xlu0 %v3414, 96
        %v3440 = vpop.permute.xlu0 %3439
        %3441 = vrot.lane.b32.xlu0 %v3415, 96
        %v3442 = vpop.permute.xlu0 %3441
        %3443 = vrot.lane.b32.xlu0 %v3416, 96
        %v3444 = vpop.permute.xlu0 %3443
        %3445 = vrot.lane.b32.xlu0 %v3417, 96
        %v3446 = vpop.permute.xlu0 %3445
        %3447 = vrot.lane.b32.xlu0 %v3418, 96
        %v3448 = vpop.permute.xlu0 %3447
        %3449 = vrot.lane.b32.xlu0 %v3419, 96
        %v3450 = vpop.permute.xlu0 %3449
        %3451 = vrot.lane.b32.xlu0 %v3420, 96
        %v3452 = vpop.permute.xlu0 %3451
        %3453 = vrot.lane.b32.xlu0 %v3421, 96
        %v3454 = vpop.permute.xlu0 %3453
        %3455 = vrot.lane.b32.xlu0 %v3422, 96
        %v3456 = vpop.permute.xlu0 %3455
        %3457 = vrot.lane.b32.xlu0 %v3423, 96
        %v3458 = vpop.permute.xlu0 %3457
        %3459 = vrot.lane.b32.xlu0 %v3424, 96
        %v3460 = vpop.permute.xlu0 %3459
        %v3461 = vsel %vm1833, %v3438, %v3440
        %v3462 = vsel %vm1833, %v3440, %v3442
        %v3463 = vsel %vm1833, %v3444, %v3446
        %v3464 = vsel %vm1833, %v3446, %v3448
        %v3465 = vsel %vm1833, %v3450, %v3452
        %v3466 = vsel %vm1833, %v3452, %v3454
        %v3467 = vsel %vm1833, %v3456, %v3458
        %v3468 = vsel %vm1833, %v3458, %v3460
        %v3481 = vadd.f32 %v3401, %v3438
        %v3482 = vadd.f32 %v3402, %v3461
        %v3483 = vadd.f32 %v3403, %v3462
        %v3484 = vadd.f32 %v3404, %v3444
        %v3485 = vadd.f32 %v3405, %v3463
        %v3486 = vadd.f32 %v3406, %v3464
        %v3487 = vadd.f32 %v3407, %v3450
        %v3488 = vadd.f32 %v3408, %v3465
        %v3489 = vadd.f32 %v3409, %v3466
        %v3490 = vadd.f32 %v3410, %v3456
        %v3491 = vadd.f32 %v3411, %v3467
        %v3492 = vadd.f32 %v3412, %v3468
        %v3493 = vmul.f32 %v2921, %v2431
        %v3494 = vmul.f32 %v2922, %v2431
        %v3495 = vmul.f32 %v3036, %v2431
        %v3496 = vmul.f32 %v2924, %v2435
        %v3497 = vmul.f32 %v2925, %v2435
        %v3498 = vmul.f32 %v3037, %v2435
        %v3499 = vmul.f32 %v2927, %v2439
        %v3500 = vmul.f32 %v2928, %v2439
        %v3501 = vmul.f32 %v3038, %v2439
        %v3502 = vmul.f32 %v2930, %v2443
        %v3503 = vmul.f32 %v2931, %v2443
        %v3504 = vmul.f32 %v3039, %v2443
        %3517 = vrot.lane.b32.xlu0 %v3493, 64
        %v3518 = vpop.permute.xlu0 %3517
        %3519 = vrot.lane.b32.xlu0 %v3494, 64
        %v3520 = vpop.permute.xlu0 %3519
        %3521 = vrot.lane.b32.xlu0 %v3495, 64
        %v3522 = vpop.permute.xlu0 %3521
        %3523 = vrot.lane.b32.xlu0 %v3496, 64
        %v3524 = vpop.permute.xlu0 %3523
        %3525 = vrot.lane.b32.xlu0 %v3497, 64
        %v3526 = vpop.permute.xlu0 %3525
        %3527 = vrot.lane.b32.xlu0 %v3498, 64
        %v3528 = vpop.permute.xlu0 %3527
        %3529 = vrot.lane.b32.xlu0 %v3499, 64
        %v3530 = vpop.permute.xlu0 %3529
        %3531 = vrot.lane.b32.xlu0 %v3500, 64
        %v3532 = vpop.permute.xlu0 %3531
        %3533 = vrot.lane.b32.xlu0 %v3501, 64
        %v3534 = vpop.permute.xlu0 %3533
        %3535 = vrot.lane.b32.xlu0 %v3502, 64
        %v3536 = vpop.permute.xlu0 %3535
        %3537 = vrot.lane.b32.xlu0 %v3503, 64
        %v3538 = vpop.permute.xlu0 %3537
        %3539 = vrot.lane.b32.xlu0 %v3504, 64
        %v3540 = vpop.permute.xlu0 %3539
        %v3541 = vsel %vm1942, %v3518, %v3520
        %v3542 = vsel %vm1942, %v3520, %v3522
        %v3543 = vsel %vm1942, %v3524, %v3526
        %v3544 = vsel %vm1942, %v3526, %v3528
        %v3545 = vsel %vm1942, %v3530, %v3532
        %v3546 = vsel %vm1942, %v3532, %v3534
        %v3547 = vsel %vm1942, %v3536, %v3538
        %v3548 = vsel %vm1942, %v3538, %v3540
        %v3561 = vadd.f32 %v3481, %v3518
        %v3562 = vadd.f32 %v3482, %v3541
        %v3563 = vadd.f32 %v3483, %v3542
        %v3564 = vadd.f32 %v3484, %v3524
        %v3565 = vadd.f32 %v3485, %v3543
        %v3566 = vadd.f32 %v3486, %v3544
        %v3567 = vadd.f32 %v3487, %v3530
        %v3568 = vadd.f32 %v3488, %v3545
        %v3569 = vadd.f32 %v3489, %v3546
        %v3570 = vadd.f32 %v3490, %v3536
        %v3571 = vadd.f32 %v3491, %v3547
        %v3572 = vadd.f32 %v3492, %v3548
        %s3573 = scalar_lea.vmem %s3, 5
        %v3574 = vld [vmem:[%s3573] ss:$2 sm:$0x3]
        %v3576 = vperm.slane %v3574, 0
        %v3577 = vperm.slane %v3574, 1
        %3578 = vrot.lane.b32.xlu0 %v3576, 97
        %v3579 = vpop.permute.xlu0 %3578
        %3580 = vrot.lane.b32.xlu0 %v3577, 97
        %v3581 = vpop.permute.xlu0 %3580
        %v3582 = vsel %vm2534, %v3579, %v3581
        %v3586 = vmul.f32 %v3561, %v3579
        %v3587 = vmul.f32 %v3562, %v3582
        %v3588 = vmul.f32 %v3563, %v3581
        %v3589 = vmul.f32 %v3564, %v3579
        %v3590 = vmul.f32 %v3565, %v3582
        %v3591 = vmul.f32 %v3566, %v3581
        %v3592 = vmul.f32 %v3567, %v3579
        %v3593 = vmul.f32 %v3568, %v3582
        %v3594 = vmul.f32 %v3569, %v3581
        %v3595 = vmul.f32 %v3570, %v3579
        %v3596 = vmul.f32 %v3571, %v3582
        %v3597 = vmul.f32 %v3572, %v3581
        %3610 = vrot.lane.b32.xlu0 %v3586, 126
        %v3611 = vpop.permute.xlu0 %3610
        %3612 = vrot.lane.b32.xlu0 %v3587, 126
        %v3613 = vpop.permute.xlu0 %3612
        %3614 = vrot.lane.b32.xlu0 %v3588, 126
        %v3615 = vpop.permute.xlu0 %3614
        %3616 = vrot.lane.b32.xlu0 %v3589, 126
        %v3617 = vpop.permute.xlu0 %3616
        %3618 = vrot.lane.b32.xlu0 %v3590, 126
        %v3619 = vpop.permute.xlu0 %3618
        %3620 = vrot.lane.b32.xlu0 %v3591, 126
        %v3621 = vpop.permute.xlu0 %3620
        %3622 = vrot.lane.b32.xlu0 %v3592, 126
        %v3623 = vpop.permute.xlu0 %3622
        %3624 = vrot.lane.b32.xlu0 %v3593, 126
        %v3625 = vpop.permute.xlu0 %3624
        %3626 = vrot.lane.b32.xlu0 %v3594, 126
        %v3627 = vpop.permute.xlu0 %3626
        %3628 = vrot.lane.b32.xlu0 %v3595, 126
        %v3629 = vpop.permute.xlu0 %3628
        %3630 = vrot.lane.b32.xlu0 %v3596, 126
        %v3631 = vpop.permute.xlu0 %3630
        %3632 = vrot.lane.b32.xlu0 %v3597, 126
        %v3633 = vpop.permute.xlu0 %3632
        %v3634 = vsel %vm2587, %v3611, %v3613
        %v3635 = vsel %vm2587, %v3613, %v3615
        %v3636 = vsel %vm2587, %v3617, %v3619
        %v3637 = vsel %vm2587, %v3619, %v3621
        %v3638 = vsel %vm2587, %v3623, %v3625
        %v3639 = vsel %vm2587, %v3625, %v3627
        %v3640 = vsel %vm2587, %v3629, %v3631
        %v3641 = vsel %vm2587, %v3631, %v3633
        %v3654 = vadd.f32 %v3377, %v3634
        %v3655 = vadd.f32 %v3378, %v3635
        %v3656 = vadd.f32 %v3379, %v3615
        %v3657 = vadd.f32 %v3380, %v3636
        %v3658 = vadd.f32 %v3381, %v3637
        %v3659 = vadd.f32 %v3382, %v3621
        %v3660 = vadd.f32 %v3383, %v3638
        %v3661 = vadd.f32 %v3384, %v3639
        %v3662 = vadd.f32 %v3385, %v3627
        %v3663 = vadd.f32 %v3386, %v3640
        %v3664 = vadd.f32 %v3387, %v3641
        %v3665 = vadd.f32 %v3388, %v3633
        %v3666 = vadd.f32 %v3654, %v2622
        %v3667 = vadd.f32 %v3655, %v2622
        %v3668 = vadd.f32 %v3656, %v2622
        %v3669 = vadd.f32 %v3657, %v2626
        %v3670 = vadd.f32 %v3658, %v2626
        %v3671 = vadd.f32 %v3659, %v2626
        %v3672 = vadd.f32 %v3660, %v2630
        %v3673 = vadd.f32 %v3661, %v2630
        %v3674 = vadd.f32 %v3662, %v2630
        %v3675 = vadd.f32 %v3663, %v2634
        %v3676 = vadd.f32 %v3664, %v2634
        %v3677 = vadd.f32 %v3665, %v2634
        %3690 = vrot.lane.b32.xlu0 %v3666, 33
        %v3691 = vpop.permute.xlu0 %3690
        %3692 = vrot.lane.b32.xlu0 %v3667, 33
        %v3693 = vpop.permute.xlu0 %3692
        %3694 = vrot.lane.b32.xlu0 %v3668, 33
        %v3695 = vpop.permute.xlu0 %3694
        %3696 = vrot.lane.b32.xlu0 %v3669, 33
        %v3697 = vpop.permute.xlu0 %3696
        %3698 = vrot.lane.b32.xlu0 %v3670, 33
        %v3699 = vpop.permute.xlu0 %3698
        %3700 = vrot.lane.b32.xlu0 %v3671, 33
        %v3701 = vpop.permute.xlu0 %3700
        %3702 = vrot.lane.b32.xlu0 %v3672, 33
        %v3703 = vpop.permute.xlu0 %3702
        %3704 = vrot.lane.b32.xlu0 %v3673, 33
        %v3705 = vpop.permute.xlu0 %3704
        %3706 = vrot.lane.b32.xlu0 %v3674, 33
        %v3707 = vpop.permute.xlu0 %3706
        %3708 = vrot.lane.b32.xlu0 %v3675, 33
        %v3709 = vpop.permute.xlu0 %3708
        %3710 = vrot.lane.b32.xlu0 %v3676, 33
        %v3711 = vpop.permute.xlu0 %3710
        %3712 = vrot.lane.b32.xlu0 %v3677, 33
        %v3713 = vpop.permute.xlu0 %3712
        %v3714 = vsel %vm2684, %v3691, %v3693
        %v3715 = vsel %vm2684, %v3693, %v3695
        %v3716 = vsel %vm2684, %v3697, %v3699
        %v3717 = vsel %vm2684, %v3699, %v3701
        %v3718 = vsel %vm2684, %v3703, %v3705
        %v3719 = vsel %vm2684, %v3705, %v3707
        %v3720 = vsel %vm2684, %v3709, %v3711
        %v3721 = vsel %vm2684, %v3711, %v3713
        %3730 = vmatpush.msra.mxu0 0.0
        %3731 = vmatpush.msra.mxu0 0.0
        %3732 = vmatpush.msra.mxu0 0.0
        %3733 = vmatpush.msra.mxu0 0.0
        %3734 = vmatpush.msra.mxu0 0.0
        %3735 = vmatpush.msra.mxu0 0.0
        %3736 = vmatpush.msra.mxu0 0.0
        %3737 = vmatpush.msra.mxu0 0.0
        %3738 = vmatpush.msra.mxu0 0.0
        %3739 = vmatpush.msra.mxu0 0.0
        %3740 = vmatpush.msra.mxu0 0.0
        %3741 = vmatpush.msra.mxu0 0.0
        %3742 = vmatpush.msra.mxu0 %v3720
        %3743 = vmatpush.msra.mxu0 %v3718
        %3744 = vmatpush.msra.mxu0 %v3716
        %3745 = vmatpush.msra.mxu0 %v3714
        %3746 = vmatmul.f32.gmra.mxu0 %v2702
        %v3747 = vpop.f32.mrf.mxu0
        %v3748 = vadd.f32 %v1716, %v3747
        %3749 = vdwg.mxu0
        %3750 = vmatpush.msra.mxu0 0.0
        %3751 = vmatpush.msra.mxu0 0.0
        %3752 = vmatpush.msra.mxu0 0.0
        %3753 = vmatpush.msra.mxu0 0.0
        %3754 = vmatpush.msra.mxu0 0.0
        %3755 = vmatpush.msra.mxu0 0.0
        %3756 = vmatpush.msra.mxu0 0.0
        %3757 = vmatpush.msra.mxu0 0.0
        %3758 = vmatpush.msra.mxu0 0.0
        %3759 = vmatpush.msra.mxu0 0.0
        %3760 = vmatpush.msra.mxu0 0.0
        %3761 = vmatpush.msra.mxu0 0.0
        %3762 = vmatpush.msra.mxu0 %v3721
        %3763 = vmatpush.msra.mxu0 %v3719
        %3764 = vmatpush.msra.mxu0 %v3717
        %3765 = vmatpush.msra.mxu0 %v3715
        %3766 = vmatmul.f32.gmra.mxu0 %v2702
        %v3767 = vpop.f32.mrf.mxu0
        %v3768 = vadd.f32 %v1716, %v3767
        %3769 = vdwg.mxu0
        %v3770 = vsel %vm2744, %v3748, -inf
        %v3771 = vrot.slane %v3770, 4
        %v3772 = vmax.f32 %v3770, %v3771
        %v3773 = vrot.slane %v3772, 2
        %v3774 = vmax.f32 %v3772, %v3773
        %v3775 = vrot.slane %v3774, 1
        %v3776 = vmax.f32 %v3774, %v3775
        %v3777 = vsel %vm2744, %v3768, -inf
        %v3778 = vrot.slane %v3777, 4
        %v3779 = vmax.f32 %v3777, %v3778
        %v3780 = vrot.slane %v3779, 2
        %v3781 = vmax.f32 %v3779, %v3780
        %v3782 = vrot.slane %v3781, 1
        %v3783 = vmax.f32 %v3781, %v3782
        %v3784 = vsub.f32 %v3748, %v3776
        %v3785 = vsub.f32 %v3768, %v3783
        %v3786 = vmul.f32 %v3784, 1.442695
        %v3787 = vpow.pop %v3786
        %v3788 = vmul.f32 %v3785, 1.442695
        %v3789 = vpow.pop %v3788
        %v3790 = vsel %vm2744, %v3787, 0.0
        %v3791 = vrot.slane %v3790, 4
        %v3792 = vadd.f32 %v3790, %v3791
        %v3793 = vrot.slane %v3792, 2
        %v3794 = vadd.f32 %v3792, %v3793
        %v3795 = vrot.slane %v3794, 1
        %v3796 = vadd.f32 %v3794, %v3795
        %v3797 = vsel %vm2744, %v3789, 0.0
        %v3798 = vrot.slane %v3797, 4
        %v3799 = vadd.f32 %v3797, %v3798
        %v3800 = vrot.slane %v3799, 2
        %v3801 = vadd.f32 %v3799, %v3800
        %v3802 = vrot.slane %v3801, 1
        %v3803 = vadd.f32 %v3801, %v3802
        %v3804 = vrcp.pop %v3796
        %v3805 = vmul.f32 %v3796, %v3804
        %v3806 = vsub.f32 1.0, %v3805
        %v3807 = vmul.f32 %v3804, %v3806
        %v3808 = vadd.f32 %v3804, %v3807
        %vm3809 = vweird.f32 %v3796
        %vm3810 = vweird.f32 %v3804
        %vm3811 = vmor %vm3809, %vm3810
        %v3812 = vsel %vm3811, %v3804, %v3808
        %v3813 = vand.u32 2147483647, %v3796
        %vm3814 = vcmp.eq.f32.partialorder %v3813, 8.507059e+37
        %v3815 = vand.u32 %v3796, 2147483648
        %v3816 = vor.u32 1.1754944e-38, %v3815
        %v3817 = vsel %vm3814, %v3816, %v3812
        %v3818 = vmul.f32 1.0, %v3817
        %v3819 = vrcp.pop %v3803
        %v3820 = vmul.f32 %v3803, %v3819
        %v3821 = vsub.f32 1.0, %v3820
        %v3822 = vmul.f32 %v3819, %v3821
        %v3823 = vadd.f32 %v3819, %v3822
        %vm3824 = vweird.f32 %v3803
        %vm3825 = vweird.f32 %v3819
        %vm3826 = vmor %vm3824, %vm3825
        %v3827 = vsel %vm3826, %v3819, %v3823
        %v3828 = vand.u32 2147483647, %v3803
        %vm3829 = vcmp.eq.f32.partialorder %v3828, 8.507059e+37
        %v3830 = vand.u32 %v3803, 2147483648
        %v3831 = vor.u32 1.1754944e-38, %v3830
        %v3832 = vsel %vm3829, %v3831, %v3827
        %v3833 = vmul.f32 1.0, %v3832
        %v3834 = vmul.f32 %v3787, %v3818
        %v3835 = vmul.f32 %v3789, %v3833
        %v3837 = vsel %vm2744, %v3834, 0
        %v3840 = vsel %vm2744, %v3835, 0
        %3842 = vmatpush.msra.mxu0 0.0
        %3843 = vmatpush.msra.mxu0 0.0
        %3844 = vmatpush.msra.mxu0 0.0
        %3845 = vmatpush.msra.mxu0 0.0
        %3846 = vmatpush.msra.mxu0 0.0
        %3847 = vmatpush.msra.mxu0 0.0
        %3848 = vmatpush.msra.mxu0 0.0
        %3849 = vmatpush.msra.mxu0 0.0
        %3850 = vmatpush.msra.mxu0 0.0
        %3851 = vmatpush.msra.mxu0 0.0
        %3852 = vmatpush.msra.mxu0 0.0
        %3853 = vmatpush.msra.mxu0 0.0
        %3854 = vmatpush.msra.mxu0 0.0
        %3855 = vmatpush.msra.mxu0 0.0
        %3856 = vmatpush.msra.mxu0 0.0
        %3857 = vmatpush.msra.mxu0 %v3837
        %3858 = vmatmul.f32.gmra.mxu0 %v2829
        %v3859 = vpop.f32.mrf.mxu0
        %v3860 = vadd.f32 %v2813, %v3859
        %3861 = vmatmul.f32.gmra.mxu0 %v2832
        %v3862 = vpop.f32.mrf.mxu0
        %v3863 = vadd.f32 %v2817, %v3862
        %3864 = vmatmul.f32.gmra.mxu0 %v2835
        %v3865 = vpop.f32.mrf.mxu0
        %v3866 = vadd.f32 %v2821, %v3865
        %3867 = vmatmul.f32.gmra.mxu0 %v2838
        %v3868 = vpop.f32.mrf.mxu0
        %v3869 = vadd.f32 %v2825, %v3868
        %3870 = vdwg.mxu0
        %3871 = vmatpush.msra.mxu0 0.0
        %3872 = vmatpush.msra.mxu0 0.0
        %3873 = vmatpush.msra.mxu0 0.0
        %3874 = vmatpush.msra.mxu0 0.0
        %3875 = vmatpush.msra.mxu0 0.0
        %3876 = vmatpush.msra.mxu0 0.0
        %3877 = vmatpush.msra.mxu0 0.0
        %3878 = vmatpush.msra.mxu0 0.0
        %3879 = vmatpush.msra.mxu0 0.0
        %3880 = vmatpush.msra.mxu0 0.0
        %3881 = vmatpush.msra.mxu0 0.0
        %3882 = vmatpush.msra.mxu0 0.0
        %3883 = vmatpush.msra.mxu0 0.0
        %3884 = vmatpush.msra.mxu0 0.0
        %3885 = vmatpush.msra.mxu0 0.0
        %3886 = vmatpush.msra.mxu0 %v3840
        %3887 = vmatmul.f32.gmra.mxu0 %v2829
        %v3888 = vpop.f32.mrf.mxu0
        %v3889 = vadd.f32 %v2813, %v3888
        %3890 = vmatmul.f32.gmra.mxu0 %v2832
        %v3891 = vpop.f32.mrf.mxu0
        %v3892 = vadd.f32 %v2817, %v3891
        %3893 = vmatmul.f32.gmra.mxu0 %v2835
        %v3894 = vpop.f32.mrf.mxu0
        %v3895 = vadd.f32 %v2821, %v3894
        %3896 = vmatmul.f32.gmra.mxu0 %v2838
        %v3897 = vpop.f32.mrf.mxu0
        %v3898 = vadd.f32 %v2825, %v3897
        %3899 = vdwg.mxu0
        %v3900 = vadd.f32 %v2921, %v3860
        %v3901 = vadd.f32 %v2922, %v3889
        %v3902 = vadd.f32 %v2924, %v3863
        %v3903 = vadd.f32 %v2925, %v3892
        %v3904 = vadd.f32 %v2927, %v3866
        %v3905 = vadd.f32 %v2928, %v3895
        %v3906 = vadd.f32 %v2930, %v3869
        %v3907 = vadd.f32 %v2931, %v3898
        %3908 = vst [vmem:[%s268 + $0x10] sm:$0xff] %v3900
        %3909 = vst [vmem:[%s268 + $0x18] sm:$0xff] %v3901
        %3910 = vst [vmem:[%s268 + $0x50] sm:$0xff] %v3902
        %3911 = vst [vmem:[%s268 + $0x58] sm:$0xff] %v3903
        %3912 = vst [vmem:[%s268 + $0x90] sm:$0xff] %v3904
        %3913 = vst [vmem:[%s268 + $0x98] sm:$0xff] %v3905
        %3914 = vst [vmem:[%s268 + $0xd0] sm:$0xff] %v3906
        %3915 = vst [vmem:[%s268 + $0xd8] sm:$0xff] %v3907
        %v3916 = vld [vmem:[#allocation2 + $0x20] sm:$0xff]
        %v3917 = vld [vmem:[#allocation2 + $0x28] sm:$0xff]
        %v3918 = vld [vmem:[#allocation2 + $0x30] sm:$0xff]
        %v3919 = vld [vmem:[#allocation2 + $0x70] sm:$0xff]
        %v3920 = vld [vmem:[#allocation2 + $0x78] sm:$0xff]
        %v3921 = vld [vmem:[#allocation2 + $0x80] sm:$0xff]
        %v3922 = vld [vmem:[#allocation2 + $0xc0] sm:$0xff]
        %v3923 = vld [vmem:[#allocation2 + $0xc8] sm:$0xff]
        %v3924 = vld [vmem:[#allocation2 + $0xd0] sm:$0xff]
        %v3925 = vld [vmem:[#allocation2 + $0x110] sm:$0xff]
        %v3926 = vld [vmem:[#allocation2 + $0x118] sm:$0xff]
        %v3927 = vld [vmem:[#allocation2 + $0x120] sm:$0xff]
        %v3928 = vmul.f32 %v3916, %v1731
        %v3929 = vmul.f32 %v3917, %v1731
        %v3930 = vmul.f32 %v3918, %v1731
        %v3931 = vmul.f32 %v3919, %v1735
        %v3932 = vmul.f32 %v3920, %v1735
        %v3933 = vmul.f32 %v3921, %v1735
        %v3934 = vmul.f32 %v3922, %v1739
        %v3935 = vmul.f32 %v3923, %v1739
        %v3936 = vmul.f32 %v3924, %v1739
        %v3937 = vmul.f32 %v3925, %v1743
        %v3938 = vmul.f32 %v3926, %v1743
        %v3939 = vmul.f32 %v3927, %v1743
        %v3940 = vadd.f32 %v3928, 0.0
        %v3941 = vadd.f32 %v3929, 0.0
        %v3942 = vadd.f32 %v3930, 0.0
        %v3943 = vadd.f32 %v3931, 0.0
        %v3944 = vadd.f32 %v3932, 0.0
        %v3945 = vadd.f32 %v3933, 0.0
        %v3946 = vadd.f32 %v3934, 0.0
        %v3947 = vadd.f32 %v3935, 0.0
        %v3948 = vadd.f32 %v3936, 0.0
        %v3949 = vadd.f32 %v3937, 0.0
        %v3950 = vadd.f32 %v3938, 0.0
        %v3951 = vadd.f32 %v3939, 0.0
        %v3952 = vmul.f32 %v3916, %v1771
        %v3953 = vmul.f32 %v3917, %v1771
        %v3954 = vmul.f32 %v3918, %v1771
        %v3955 = vmul.f32 %v3919, %v1775
        %v3956 = vmul.f32 %v3920, %v1775
        %v3957 = vmul.f32 %v3921, %v1775
        %v3958 = vmul.f32 %v3922, %v1779
        %v3959 = vmul.f32 %v3923, %v1779
        %v3960 = vmul.f32 %v3924, %v1779
        %v3961 = vmul.f32 %v3925, %v1783
        %v3962 = vmul.f32 %v3926, %v1783
        %v3963 = vmul.f32 %v3927, %v1783
        %3976 = vrot.lane.b32.xlu0 %v3952, 96
        %v3977 = vpop.permute.xlu0 %3976
        %3978 = vrot.lane.b32.xlu0 %v3953, 96
        %v3979 = vpop.permute.xlu0 %3978
        %3980 = vrot.lane.b32.xlu0 %v3954, 96
        %v3981 = vpop.permute.xlu0 %3980
        %3982 = vrot.lane.b32.xlu0 %v3955, 96
        %v3983 = vpop.permute.xlu0 %3982
        %3984 = vrot.lane.b32.xlu0 %v3956, 96
        %v3985 = vpop.permute.xlu0 %3984
        %3986 = vrot.lane.b32.xlu0 %v3957, 96
        %v3987 = vpop.permute.xlu0 %3986
        %3988 = vrot.lane.b32.xlu0 %v3958, 96
        %v3989 = vpop.permute.xlu0 %3988
        %3990 = vrot.lane.b32.xlu0 %v3959, 96
        %v3991 = vpop.permute.xlu0 %3990
        %3992 = vrot.lane.b32.xlu0 %v3960, 96
        %v3993 = vpop.permute.xlu0 %3992
        %3994 = vrot.lane.b32.xlu0 %v3961, 96
        %v3995 = vpop.permute.xlu0 %3994
        %3996 = vrot.lane.b32.xlu0 %v3962, 96
        %v3997 = vpop.permute.xlu0 %3996
        %3998 = vrot.lane.b32.xlu0 %v3963, 96
        %v3999 = vpop.permute.xlu0 %3998
        %v4000 = vsel %vm1833, %v3977, %v3979
        %v4001 = vsel %vm1833, %v3979, %v3981
        %v4002 = vsel %vm1833, %v3983, %v3985
        %v4003 = vsel %vm1833, %v3985, %v3987
        %v4004 = vsel %vm1833, %v3989, %v3991
        %v4005 = vsel %vm1833, %v3991, %v3993
        %v4006 = vsel %vm1833, %v3995, %v3997
        %v4007 = vsel %vm1833, %v3997, %v3999
        %v4020 = vadd.f32 %v3940, %v4000
        %v4021 = vadd.f32 %v3941, %v4001
        %v4022 = vadd.f32 %v3942, %v3981
        %v4023 = vadd.f32 %v3943, %v4002
        %v4024 = vadd.f32 %v3944, %v4003
        %v4025 = vadd.f32 %v3945, %v3987
        %v4026 = vadd.f32 %v3946, %v4004
        %v4027 = vadd.f32 %v3947, %v4005
        %v4028 = vadd.f32 %v3948, %v3993
        %v4029 = vadd.f32 %v3949, %v4006
        %v4030 = vadd.f32 %v3950, %v4007
        %v4031 = vadd.f32 %v3951, %v3999
        %v4032 = vld [vmem:[#allocation2 + $0x38] sm:$0xff]
        %v4033 = vld [vmem:[#allocation2 + $0x88] sm:$0xff]
        %v4034 = vld [vmem:[#allocation2 + $0xd8] sm:$0xff]
        %v4035 = vld [vmem:[#allocation2 + $0x128] sm:$0xff]
        %v4036 = vmul.f32 %v3917, %v1880
        %v4037 = vmul.f32 %v3918, %v1880
        %v4038 = vmul.f32 %v4032, %v1880
        %v4039 = vmul.f32 %v3920, %v1884
        %v4040 = vmul.f32 %v3921, %v1884
        %v4041 = vmul.f32 %v4033, %v1884
        %v4042 = vmul.f32 %v3923, %v1888
        %v4043 = vmul.f32 %v3924, %v1888
        %v4044 = vmul.f32 %v4034, %v1888
        %v4045 = vmul.f32 %v3926, %v1892
        %v4046 = vmul.f32 %v3927, %v1892
        %v4047 = vmul.f32 %v4035, %v1892
        %4060 = vrot.lane.b32.xlu0 %v4036, 64
        %v4061 = vpop.permute.xlu0 %4060
        %4062 = vrot.lane.b32.xlu0 %v4037, 64
        %v4063 = vpop.permute.xlu0 %4062
        %4064 = vrot.lane.b32.xlu0 %v4038, 64
        %v4065 = vpop.permute.xlu0 %4064
        %4066 = vrot.lane.b32.xlu0 %v4039, 64
        %v4067 = vpop.permute.xlu0 %4066
        %4068 = vrot.lane.b32.xlu0 %v4040, 64
        %v4069 = vpop.permute.xlu0 %4068
        %4070 = vrot.lane.b32.xlu0 %v4041, 64
        %v4071 = vpop.permute.xlu0 %4070
        %4072 = vrot.lane.b32.xlu0 %v4042, 64
        %v4073 = vpop.permute.xlu0 %4072
        %4074 = vrot.lane.b32.xlu0 %v4043, 64
        %v4075 = vpop.permute.xlu0 %4074
        %4076 = vrot.lane.b32.xlu0 %v4044, 64
        %v4077 = vpop.permute.xlu0 %4076
        %4078 = vrot.lane.b32.xlu0 %v4045, 64
        %v4079 = vpop.permute.xlu0 %4078
        %4080 = vrot.lane.b32.xlu0 %v4046, 64
        %v4081 = vpop.permute.xlu0 %4080
        %4082 = vrot.lane.b32.xlu0 %v4047, 64
        %v4083 = vpop.permute.xlu0 %4082
        %v4084 = vsel %vm1942, %v4061, %v4063
        %v4085 = vsel %vm1942, %v4063, %v4065
        %v4086 = vsel %vm1942, %v4067, %v4069
        %v4087 = vsel %vm1942, %v4069, %v4071
        %v4088 = vsel %vm1942, %v4073, %v4075
        %v4089 = vsel %vm1942, %v4075, %v4077
        %v4090 = vsel %vm1942, %v4079, %v4081
        %v4091 = vsel %vm1942, %v4081, %v4083
        %v4104 = vadd.f32 %v4020, %v4061
        %v4105 = vadd.f32 %v4021, %v4084
        %v4106 = vadd.f32 %v4022, %v4085
        %v4107 = vadd.f32 %v4023, %v4067
        %v4108 = vadd.f32 %v4024, %v4086
        %v4109 = vadd.f32 %v4025, %v4087
        %v4110 = vadd.f32 %v4026, %v4073
        %v4111 = vadd.f32 %v4027, %v4088
        %v4112 = vadd.f32 %v4028, %v4089
        %v4113 = vadd.f32 %v4029, %v4079
        %v4114 = vadd.f32 %v4030, %v4090
        %v4115 = vadd.f32 %v4031, %v4091
        %s4116 = scalar_lea.vmem %s3, 8
        %v4117 = vld [vmem:[%s4116] ss:$2 sm:$0x3]
        %v4119 = vperm.slane %v4117, 0
        %v4120 = vperm.slane %v4117, 1
        %4121 = vrot.lane.b32.xlu0 %v4119, 95
        %v4122 = vpop.permute.xlu0 %4121
        %4123 = vrot.lane.b32.xlu0 %v4120, 95
        %v4124 = vpop.permute.xlu0 %4123
        %v4125 = vsel %vm1983, %v4122, %v4124
        %v4129 = vmul.f32 %v4104, %v4122
        %v4130 = vmul.f32 %v4105, %v4125
        %v4131 = vmul.f32 %v4106, %v4124
        %v4132 = vmul.f32 %v4107, %v4122
        %v4133 = vmul.f32 %v4108, %v4125
        %v4134 = vmul.f32 %v4109, %v4124
        %v4135 = vmul.f32 %v4110, %v4122
        %v4136 = vmul.f32 %v4111, %v4125
        %v4137 = vmul.f32 %v4112, %v4124
        %v4138 = vmul.f32 %v4113, %v4122
        %v4139 = vmul.f32 %v4114, %v4125
        %v4140 = vmul.f32 %v4115, %v4124
        %v4141 = vadd.f32 %v4129, 0.0
        %v4142 = vadd.f32 %v4130, 0.0
        %v4143 = vadd.f32 %v4131, 0.0
        %v4144 = vadd.f32 %v4132, 0.0
        %v4145 = vadd.f32 %v4133, 0.0
        %v4146 = vadd.f32 %v4134, 0.0
        %v4147 = vadd.f32 %v4135, 0.0
        %v4148 = vadd.f32 %v4136, 0.0
        %v4149 = vadd.f32 %v4137, 0.0
        %v4150 = vadd.f32 %v4138, 0.0
        %v4151 = vadd.f32 %v4139, 0.0
        %v4152 = vadd.f32 %v4140, 0.0
        %v4153 = vmul.f32 %v3916, %v2014
        %v4154 = vmul.f32 %v3917, %v2014
        %v4155 = vmul.f32 %v3918, %v2014
        %v4156 = vmul.f32 %v3919, %v2018
        %v4157 = vmul.f32 %v3920, %v2018
        %v4158 = vmul.f32 %v3921, %v2018
        %v4159 = vmul.f32 %v3922, %v2022
        %v4160 = vmul.f32 %v3923, %v2022
        %v4161 = vmul.f32 %v3924, %v2022
        %v4162 = vmul.f32 %v3925, %v2026
        %v4163 = vmul.f32 %v3926, %v2026
        %v4164 = vmul.f32 %v3927, %v2026
        %v4165 = vadd.f32 %v4153, 0.0
        %v4166 = vadd.f32 %v4154, 0.0
        %v4167 = vadd.f32 %v4155, 0.0
        %v4168 = vadd.f32 %v4156, 0.0
        %v4169 = vadd.f32 %v4157, 0.0
        %v4170 = vadd.f32 %v4158, 0.0
        %v4171 = vadd.f32 %v4159, 0.0
        %v4172 = vadd.f32 %v4160, 0.0
        %v4173 = vadd.f32 %v4161, 0.0
        %v4174 = vadd.f32 %v4162, 0.0
        %v4175 = vadd.f32 %v4163, 0.0
        %v4176 = vadd.f32 %v4164, 0.0
        %v4177 = vmul.f32 %v3917, %v2054
        %v4178 = vmul.f32 %v3918, %v2054
        %v4179 = vmul.f32 %v3920, %v2058
        %v4180 = vmul.f32 %v3921, %v2058
        %v4181 = vmul.f32 %v3923, %v2062
        %v4182 = vmul.f32 %v3924, %v2062
        %v4183 = vmul.f32 %v3926, %v2066
        %v4184 = vmul.f32 %v3927, %v2066
        %4193 = vrot.lane.b32.xlu0 %v4177, 96
        %v4194 = vpop.permute.xlu0 %4193
        %4195 = vrot.lane.b32.xlu0 %v4178, 96
        %v4196 = vpop.permute.xlu0 %4195
        %4197 = vrot.lane.b32.xlu0 %v4179, 96
        %v4198 = vpop.permute.xlu0 %4197
        %4199 = vrot.lane.b32.xlu0 %v4180, 96
        %v4200 = vpop.permute.xlu0 %4199
        %4201 = vrot.lane.b32.xlu0 %v4181, 96
        %v4202 = vpop.permute.xlu0 %4201
        %4203 = vrot.lane.b32.xlu0 %v4182, 96
        %v4204 = vpop.permute.xlu0 %4203
        %4205 = vrot.lane.b32.xlu0 %v4183, 96
        %v4206 = vpop.permute.xlu0 %4205
        %4207 = vrot.lane.b32.xlu0 %v4184, 96
        %v4208 = vpop.permute.xlu0 %4207
        %v4209 = vsel %vm1833, %v4194, %v4196
        %v4210 = vsel %vm1833, %v4198, %v4200
        %v4211 = vsel %vm1833, %v4202, %v4204
        %v4212 = vsel %vm1833, %v4206, %v4208
        %v4225 = vadd.f32 %v4165, %v4194
        %v4226 = vadd.f32 %v4166, %v4209
        %v4227 = vadd.f32 %v4167, %v4196
        %v4228 = vadd.f32 %v4168, %v4198
        %v4229 = vadd.f32 %v4169, %v4210
        %v4230 = vadd.f32 %v4170, %v4200
        %v4231 = vadd.f32 %v4171, %v4202
        %v4232 = vadd.f32 %v4172, %v4211
        %v4233 = vadd.f32 %v4173, %v4204
        %v4234 = vadd.f32 %v4174, %v4206
        %v4235 = vadd.f32 %v4175, %v4212
        %v4236 = vadd.f32 %v4176, %v4208
        %v4237 = vmul.f32 %v3917, %v2130
        %v4238 = vmul.f32 %v3918, %v2130
        %v4239 = vmul.f32 %v4032, %v2130
        %v4240 = vmul.f32 %v3920, %v2134
        %v4241 = vmul.f32 %v3921, %v2134
        %v4242 = vmul.f32 %v4033, %v2134
        %v4243 = vmul.f32 %v3923, %v2138
        %v4244 = vmul.f32 %v3924, %v2138
        %v4245 = vmul.f32 %v4034, %v2138
        %v4246 = vmul.f32 %v3926, %v2142
        %v4247 = vmul.f32 %v3927, %v2142
        %v4248 = vmul.f32 %v4035, %v2142
        %4261 = vrot.lane.b32.xlu0 %v4237, 64
        %v4262 = vpop.permute.xlu0 %4261
        %4263 = vrot.lane.b32.xlu0 %v4238, 64
        %v4264 = vpop.permute.xlu0 %4263
        %4265 = vrot.lane.b32.xlu0 %v4239, 64
        %v4266 = vpop.permute.xlu0 %4265
        %4267 = vrot.lane.b32.xlu0 %v4240, 64
        %v4268 = vpop.permute.xlu0 %4267
        %4269 = vrot.lane.b32.xlu0 %v4241, 64
        %v4270 = vpop.permute.xlu0 %4269
        %4271 = vrot.lane.b32.xlu0 %v4242, 64
        %v4272 = vpop.permute.xlu0 %4271
        %4273 = vrot.lane.b32.xlu0 %v4243, 64
        %v4274 = vpop.permute.xlu0 %4273
        %4275 = vrot.lane.b32.xlu0 %v4244, 64
        %v4276 = vpop.permute.xlu0 %4275
        %4277 = vrot.lane.b32.xlu0 %v4245, 64
        %v4278 = vpop.permute.xlu0 %4277
        %4279 = vrot.lane.b32.xlu0 %v4246, 64
        %v4280 = vpop.permute.xlu0 %4279
        %4281 = vrot.lane.b32.xlu0 %v4247, 64
        %v4282 = vpop.permute.xlu0 %4281
        %4283 = vrot.lane.b32.xlu0 %v4248, 64
        %v4284 = vpop.permute.xlu0 %4283
        %v4285 = vsel %vm1942, %v4262, %v4264
        %v4286 = vsel %vm1942, %v4264, %v4266
        %v4287 = vsel %vm1942, %v4268, %v4270
        %v4288 = vsel %vm1942, %v4270, %v4272
        %v4289 = vsel %vm1942, %v4274, %v4276
        %v4290 = vsel %vm1942, %v4276, %v4278
        %v4291 = vsel %vm1942, %v4280, %v4282
        %v4292 = vsel %vm1942, %v4282, %v4284
        %v4305 = vadd.f32 %v4225, %v4262
        %v4306 = vadd.f32 %v4226, %v4285
        %v4307 = vadd.f32 %v4227, %v4286
        %v4308 = vadd.f32 %v4228, %v4268
        %v4309 = vadd.f32 %v4229, %v4287
        %v4310 = vadd.f32 %v4230, %v4288
        %v4311 = vadd.f32 %v4231, %v4274
        %v4312 = vadd.f32 %v4232, %v4289
        %v4313 = vadd.f32 %v4233, %v4290
        %v4314 = vadd.f32 %v4234, %v4280
        %v4315 = vadd.f32 %v4235, %v4291
        %v4316 = vadd.f32 %v4236, %v4292
        %4329 = vrot.lane.b32.xlu0 %v4305, 127
        %v4330 = vpop.permute.xlu0 %4329
        %4331 = vrot.lane.b32.xlu0 %v4306, 127
        %v4332 = vpop.permute.xlu0 %4331
        %4333 = vrot.lane.b32.xlu0 %v4307, 127
        %v4334 = vpop.permute.xlu0 %4333
        %4335 = vrot.lane.b32.xlu0 %v4308, 127
        %v4336 = vpop.permute.xlu0 %4335
        %4337 = vrot.lane.b32.xlu0 %v4309, 127
        %v4338 = vpop.permute.xlu0 %4337
        %4339 = vrot.lane.b32.xlu0 %v4310, 127
        %v4340 = vpop.permute.xlu0 %4339
        %4341 = vrot.lane.b32.xlu0 %v4311, 127
        %v4342 = vpop.permute.xlu0 %4341
        %4343 = vrot.lane.b32.xlu0 %v4312, 127
        %v4344 = vpop.permute.xlu0 %4343
        %4345 = vrot.lane.b32.xlu0 %v4313, 127
        %v4346 = vpop.permute.xlu0 %4345
        %4347 = vrot.lane.b32.xlu0 %v4314, 127
        %v4348 = vpop.permute.xlu0 %4347
        %4349 = vrot.lane.b32.xlu0 %v4315, 127
        %v4350 = vpop.permute.xlu0 %4349
        %4351 = vrot.lane.b32.xlu0 %v4316, 127
        %v4352 = vpop.permute.xlu0 %4351
        %v4353 = vsel %vm2260, %v4330, %v4332
        %v4354 = vsel %vm2260, %v4332, %v4334
        %v4355 = vsel %vm2260, %v4336, %v4338
        %v4356 = vsel %vm2260, %v4338, %v4340
        %v4357 = vsel %vm2260, %v4342, %v4344
        %v4358 = vsel %vm2260, %v4344, %v4346
        %v4359 = vsel %vm2260, %v4348, %v4350
        %v4360 = vsel %vm2260, %v4350, %v4352
        %v4373 = vadd.f32 %v4141, %v4353
        %v4374 = vadd.f32 %v4142, %v4354
        %v4375 = vadd.f32 %v4143, %v4334
        %v4376 = vadd.f32 %v4144, %v4355
        %v4377 = vadd.f32 %v4145, %v4356
        %v4378 = vadd.f32 %v4146, %v4340
        %v4379 = vadd.f32 %v4147, %v4357
        %v4380 = vadd.f32 %v4148, %v4358
        %v4381 = vadd.f32 %v4149, %v4346
        %v4382 = vadd.f32 %v4150, %v4359
        %v4383 = vadd.f32 %v4151, %v4360
        %v4384 = vadd.f32 %v4152, %v4352
        %v4385 = vmul.f32 %v3916, %v2295
        %v4386 = vmul.f32 %v3917, %v2295
        %v4387 = vmul.f32 %v3918, %v2295
        %v4388 = vmul.f32 %v3919, %v2299
        %v4389 = vmul.f32 %v3920, %v2299
        %v4390 = vmul.f32 %v3921, %v2299
        %v4391 = vmul.f32 %v3922, %v2303
        %v4392 = vmul.f32 %v3923, %v2303
        %v4393 = vmul.f32 %v3924, %v2303
        %v4394 = vmul.f32 %v3925, %v2307
        %v4395 = vmul.f32 %v3926, %v2307
        %v4396 = vmul.f32 %v3927, %v2307
        %v4397 = vadd.f32 %v4385, 0.0
        %v4398 = vadd.f32 %v4386, 0.0
        %v4399 = vadd.f32 %v4387, 0.0
        %v4400 = vadd.f32 %v4388, 0.0
        %v4401 = vadd.f32 %v4389, 0.0
        %v4402 = vadd.f32 %v4390, 0.0
        %v4403 = vadd.f32 %v4391, 0.0
        %v4404 = vadd.f32 %v4392, 0.0
        %v4405 = vadd.f32 %v4393, 0.0
        %v4406 = vadd.f32 %v4394, 0.0
        %v4407 = vadd.f32 %v4395, 0.0
        %v4408 = vadd.f32 %v4396, 0.0
        %v4409 = vmul.f32 %v3917, %v2335
        %v4410 = vmul.f32 %v3918, %v2335
        %v4411 = vmul.f32 %v4032, %v2335
        %v4412 = vmul.f32 %v3920, %v2339
        %v4413 = vmul.f32 %v3921, %v2339
        %v4414 = vmul.f32 %v4033, %v2339
        %v4415 = vmul.f32 %v3923, %v2343
        %v4416 = vmul.f32 %v3924, %v2343
        %v4417 = vmul.f32 %v4034, %v2343
        %v4418 = vmul.f32 %v3926, %v2347
        %v4419 = vmul.f32 %v3927, %v2347
        %v4420 = vmul.f32 %v4035, %v2347
        %4433 = vrot.lane.b32.xlu0 %v4409, 96
        %v4434 = vpop.permute.xlu0 %4433
        %4435 = vrot.lane.b32.xlu0 %v4410, 96
        %v4436 = vpop.permute.xlu0 %4435
        %4437 = vrot.lane.b32.xlu0 %v4411, 96
        %v4438 = vpop.permute.xlu0 %4437
        %4439 = vrot.lane.b32.xlu0 %v4412, 96
        %v4440 = vpop.permute.xlu0 %4439
        %4441 = vrot.lane.b32.xlu0 %v4413, 96
        %v4442 = vpop.permute.xlu0 %4441
        %4443 = vrot.lane.b32.xlu0 %v4414, 96
        %v4444 = vpop.permute.xlu0 %4443
        %4445 = vrot.lane.b32.xlu0 %v4415, 96
        %v4446 = vpop.permute.xlu0 %4445
        %4447 = vrot.lane.b32.xlu0 %v4416, 96
        %v4448 = vpop.permute.xlu0 %4447
        %4449 = vrot.lane.b32.xlu0 %v4417, 96
        %v4450 = vpop.permute.xlu0 %4449
        %4451 = vrot.lane.b32.xlu0 %v4418, 96
        %v4452 = vpop.permute.xlu0 %4451
        %4453 = vrot.lane.b32.xlu0 %v4419, 96
        %v4454 = vpop.permute.xlu0 %4453
        %4455 = vrot.lane.b32.xlu0 %v4420, 96
        %v4456 = vpop.permute.xlu0 %4455
        %v4457 = vsel %vm1833, %v4434, %v4436
        %v4458 = vsel %vm1833, %v4436, %v4438
        %v4459 = vsel %vm1833, %v4440, %v4442
        %v4460 = vsel %vm1833, %v4442, %v4444
        %v4461 = vsel %vm1833, %v4446, %v4448
        %v4462 = vsel %vm1833, %v4448, %v4450
        %v4463 = vsel %vm1833, %v4452, %v4454
        %v4464 = vsel %vm1833, %v4454, %v4456
        %v4477 = vadd.f32 %v4397, %v4434
        %v4478 = vadd.f32 %v4398, %v4457
        %v4479 = vadd.f32 %v4399, %v4458
        %v4480 = vadd.f32 %v4400, %v4440
        %v4481 = vadd.f32 %v4401, %v4459
        %v4482 = vadd.f32 %v4402, %v4460
        %v4483 = vadd.f32 %v4403, %v4446
        %v4484 = vadd.f32 %v4404, %v4461
        %v4485 = vadd.f32 %v4405, %v4462
        %v4486 = vadd.f32 %v4406, %v4452
        %v4487 = vadd.f32 %v4407, %v4463
        %v4488 = vadd.f32 %v4408, %v4464
        %v4489 = vmul.f32 %v3917, %v2431
        %v4490 = vmul.f32 %v3918, %v2431
        %v4491 = vmul.f32 %v4032, %v2431
        %v4492 = vmul.f32 %v3920, %v2435
        %v4493 = vmul.f32 %v3921, %v2435
        %v4494 = vmul.f32 %v4033, %v2435
        %v4495 = vmul.f32 %v3923, %v2439
        %v4496 = vmul.f32 %v3924, %v2439
        %v4497 = vmul.f32 %v4034, %v2439
        %v4498 = vmul.f32 %v3926, %v2443
        %v4499 = vmul.f32 %v3927, %v2443
        %v4500 = vmul.f32 %v4035, %v2443
        %4513 = vrot.lane.b32.xlu0 %v4489, 64
        %v4514 = vpop.permute.xlu0 %4513
        %4515 = vrot.lane.b32.xlu0 %v4490, 64
        %v4516 = vpop.permute.xlu0 %4515
        %4517 = vrot.lane.b32.xlu0 %v4491, 64
        %v4518 = vpop.permute.xlu0 %4517
        %4519 = vrot.lane.b32.xlu0 %v4492, 64
        %v4520 = vpop.permute.xlu0 %4519
        %4521 = vrot.lane.b32.xlu0 %v4493, 64
        %v4522 = vpop.permute.xlu0 %4521
        %4523 = vrot.lane.b32.xlu0 %v4494, 64
        %v4524 = vpop.permute.xlu0 %4523
        %4525 = vrot.lane.b32.xlu0 %v4495, 64
        %v4526 = vpop.permute.xlu0 %4525
        %4527 = vrot.lane.b32.xlu0 %v4496, 64
        %v4528 = vpop.permute.xlu0 %4527
        %4529 = vrot.lane.b32.xlu0 %v4497, 64
        %v4530 = vpop.permute.xlu0 %4529
        %4531 = vrot.lane.b32.xlu0 %v4498, 64
        %v4532 = vpop.permute.xlu0 %4531
        %4533 = vrot.lane.b32.xlu0 %v4499, 64
        %v4534 = vpop.permute.xlu0 %4533
        %4535 = vrot.lane.b32.xlu0 %v4500, 64
        %v4536 = vpop.permute.xlu0 %4535
        %v4537 = vsel %vm1942, %v4514, %v4516
        %v4538 = vsel %vm1942, %v4516, %v4518
        %v4539 = vsel %vm1942, %v4520, %v4522
        %v4540 = vsel %vm1942, %v4522, %v4524
        %v4541 = vsel %vm1942, %v4526, %v4528
        %v4542 = vsel %vm1942, %v4528, %v4530
        %v4543 = vsel %vm1942, %v4532, %v4534
        %v4544 = vsel %vm1942, %v4534, %v4536
        %v4557 = vadd.f32 %v4477, %v4514
        %v4558 = vadd.f32 %v4478, %v4537
        %v4559 = vadd.f32 %v4479, %v4538
        %v4560 = vadd.f32 %v4480, %v4520
        %v4561 = vadd.f32 %v4481, %v4539
        %v4562 = vadd.f32 %v4482, %v4540
        %v4563 = vadd.f32 %v4483, %v4526
        %v4564 = vadd.f32 %v4484, %v4541
        %v4565 = vadd.f32 %v4485, %v4542
        %v4566 = vadd.f32 %v4486, %v4532
        %v4567 = vadd.f32 %v4487, %v4543
        %v4568 = vadd.f32 %v4488, %v4544
        %s4569 = scalar_lea.vmem %s3, 9
        %v4570 = vld [vmem:[%s4569] ss:$2 sm:$0x3]
        %v4572 = vperm.slane %v4570, 0
        %v4573 = vperm.slane %v4570, 1
        %4574 = vrot.lane.b32.xlu0 %v4572, 97
        %v4575 = vpop.permute.xlu0 %4574
        %4576 = vrot.lane.b32.xlu0 %v4573, 97
        %v4577 = vpop.permute.xlu0 %4576
        %v4578 = vsel %vm2534, %v4575, %v4577
        %v4582 = vmul.f32 %v4557, %v4575
        %v4583 = vmul.f32 %v4558, %v4578
        %v4584 = vmul.f32 %v4559, %v4577
        %v4585 = vmul.f32 %v4560, %v4575
        %v4586 = vmul.f32 %v4561, %v4578
        %v4587 = vmul.f32 %v4562, %v4577
        %v4588 = vmul.f32 %v4563, %v4575
        %v4589 = vmul.f32 %v4564, %v4578
        %v4590 = vmul.f32 %v4565, %v4577
        %v4591 = vmul.f32 %v4566, %v4575
        %v4592 = vmul.f32 %v4567, %v4578
        %v4593 = vmul.f32 %v4568, %v4577
        %4606 = vrot.lane.b32.xlu0 %v4582, 126
        %v4607 = vpop.permute.xlu0 %4606
        %4608 = vrot.lane.b32.xlu0 %v4583, 126
        %v4609 = vpop.permute.xlu0 %4608
        %4610 = vrot.lane.b32.xlu0 %v4584, 126
        %v4611 = vpop.permute.xlu0 %4610
        %4612 = vrot.lane.b32.xlu0 %v4585, 126
        %v4613 = vpop.permute.xlu0 %4612
        %4614 = vrot.lane.b32.xlu0 %v4586, 126
        %v4615 = vpop.permute.xlu0 %4614
        %4616 = vrot.lane.b32.xlu0 %v4587, 126
        %v4617 = vpop.permute.xlu0 %4616
        %4618 = vrot.lane.b32.xlu0 %v4588, 126
        %v4619 = vpop.permute.xlu0 %4618
        %4620 = vrot.lane.b32.xlu0 %v4589, 126
        %v4621 = vpop.permute.xlu0 %4620
        %4622 = vrot.lane.b32.xlu0 %v4590, 126
        %v4623 = vpop.permute.xlu0 %4622
        %4624 = vrot.lane.b32.xlu0 %v4591, 126
        %v4625 = vpop.permute.xlu0 %4624
        %4626 = vrot.lane.b32.xlu0 %v4592, 126
        %v4627 = vpop.permute.xlu0 %4626
        %4628 = vrot.lane.b32.xlu0 %v4593, 126
        %v4629 = vpop.permute.xlu0 %4628
        %v4630 = vsel %vm2587, %v4607, %v4609
        %v4631 = vsel %vm2587, %v4609, %v4611
        %v4632 = vsel %vm2587, %v4613, %v4615
        %v4633 = vsel %vm2587, %v4615, %v4617
        %v4634 = vsel %vm2587, %v4619, %v4621
        %v4635 = vsel %vm2587, %v4621, %v4623
        %v4636 = vsel %vm2587, %v4625, %v4627
        %v4637 = vsel %vm2587, %v4627, %v4629
        %v4650 = vadd.f32 %v4373, %v4630
        %v4651 = vadd.f32 %v4374, %v4631
        %v4652 = vadd.f32 %v4375, %v4611
        %v4653 = vadd.f32 %v4376, %v4632
        %v4654 = vadd.f32 %v4377, %v4633
        %v4655 = vadd.f32 %v4378, %v4617
        %v4656 = vadd.f32 %v4379, %v4634
        %v4657 = vadd.f32 %v4380, %v4635
        %v4658 = vadd.f32 %v4381, %v4623
        %v4659 = vadd.f32 %v4382, %v4636
        %v4660 = vadd.f32 %v4383, %v4637
        %v4661 = vadd.f32 %v4384, %v4629
        %v4662 = vadd.f32 %v4650, %v2622
        %v4663 = vadd.f32 %v4651, %v2622
        %v4664 = vadd.f32 %v4652, %v2622
        %v4665 = vadd.f32 %v4653, %v2626
        %v4666 = vadd.f32 %v4654, %v2626
        %v4667 = vadd.f32 %v4655, %v2626
        %v4668 = vadd.f32 %v4656, %v2630
        %v4669 = vadd.f32 %v4657, %v2630
        %v4670 = vadd.f32 %v4658, %v2630
        %v4671 = vadd.f32 %v4659, %v2634
        %v4672 = vadd.f32 %v4660, %v2634
        %v4673 = vadd.f32 %v4661, %v2634
        %4686 = vrot.lane.b32.xlu0 %v4662, 33
        %v4687 = vpop.permute.xlu0 %4686
        %4688 = vrot.lane.b32.xlu0 %v4663, 33
        %v4689 = vpop.permute.xlu0 %4688
        %4690 = vrot.lane.b32.xlu0 %v4664, 33
        %v4691 = vpop.permute.xlu0 %4690
        %4692 = vrot.lane.b32.xlu0 %v4665, 33
        %v4693 = vpop.permute.xlu0 %4692
        %4694 = vrot.lane.b32.xlu0 %v4666, 33
        %v4695 = vpop.permute.xlu0 %4694
        %4696 = vrot.lane.b32.xlu0 %v4667, 33
        %v4697 = vpop.permute.xlu0 %4696
        %4698 = vrot.lane.b32.xlu0 %v4668, 33
        %v4699 = vpop.permute.xlu0 %4698
        %4700 = vrot.lane.b32.xlu0 %v4669, 33
        %v4701 = vpop.permute.xlu0 %4700
        %4702 = vrot.lane.b32.xlu0 %v4670, 33
        %v4703 = vpop.permute.xlu0 %4702
        %4704 = vrot.lane.b32.xlu0 %v4671, 33
        %v4705 = vpop.permute.xlu0 %4704
        %4706 = vrot.lane.b32.xlu0 %v4672, 33
        %v4707 = vpop.permute.xlu0 %4706
        %4708 = vrot.lane.b32.xlu0 %v4673, 33
        %v4709 = vpop.permute.xlu0 %4708
        %v4710 = vsel %vm2684, %v4687, %v4689
        %v4711 = vsel %vm2684, %v4689, %v4691
        %v4712 = vsel %vm2684, %v4693, %v4695
        %v4713 = vsel %vm2684, %v4695, %v4697
        %v4714 = vsel %vm2684, %v4699, %v4701
        %v4715 = vsel %vm2684, %v4701, %v4703
        %v4716 = vsel %vm2684, %v4705, %v4707
        %v4717 = vsel %vm2684, %v4707, %v4709
        %4726 = vmatpush.msra.mxu0 0.0
        %4727 = vmatpush.msra.mxu0 0.0
        %4728 = vmatpush.msra.mxu0 0.0
        %4729 = vmatpush.msra.mxu0 0.0
        %4730 = vmatpush.msra.mxu0 0.0
        %4731 = vmatpush.msra.mxu0 0.0
        %4732 = vmatpush.msra.mxu0 0.0
        %4733 = vmatpush.msra.mxu0 0.0
        %4734 = vmatpush.msra.mxu0 0.0
        %4735 = vmatpush.msra.mxu0 0.0
        %4736 = vmatpush.msra.mxu0 0.0
        %4737 = vmatpush.msra.mxu0 0.0
        %4738 = vmatpush.msra.mxu0 %v4716
        %4739 = vmatpush.msra.mxu0 %v4714
        %4740 = vmatpush.msra.mxu0 %v4712
        %4741 = vmatpush.msra.mxu0 %v4710
        %4742 = vmatmul.f32.gmra.mxu0 %v2702
        %v4743 = vpop.f32.mrf.mxu0
        %v4744 = vadd.f32 %v1716, %v4743
        %4745 = vdwg.mxu0
        %4746 = vmatpush.msra.mxu0 0.0
        %4747 = vmatpush.msra.mxu0 0.0
        %4748 = vmatpush.msra.mxu0 0.0
        %4749 = vmatpush.msra.mxu0 0.0
        %4750 = vmatpush.msra.mxu0 0.0
        %4751 = vmatpush.msra.mxu0 0.0
        %4752 = vmatpush.msra.mxu0 0.0
        %4753 = vmatpush.msra.mxu0 0.0
        %4754 = vmatpush.msra.mxu0 0.0
        %4755 = vmatpush.msra.mxu0 0.0
        %4756 = vmatpush.msra.mxu0 0.0
        %4757 = vmatpush.msra.mxu0 0.0
        %4758 = vmatpush.msra.mxu0 %v4717
        %4759 = vmatpush.msra.mxu0 %v4715
        %4760 = vmatpush.msra.mxu0 %v4713
        %4761 = vmatpush.msra.mxu0 %v4711
        %4762 = vmatmul.f32.gmra.mxu0 %v2702
        %v4763 = vpop.f32.mrf.mxu0
        %v4764 = vadd.f32 %v1716, %v4763
        %4765 = vdwg.mxu0
        %v4766 = vsel %vm2744, %v4744, -inf
        %v4767 = vrot.slane %v4766, 4
        %v4768 = vmax.f32 %v4766, %v4767
        %v4769 = vrot.slane %v4768, 2
        %v4770 = vmax.f32 %v4768, %v4769
        %v4771 = vrot.slane %v4770, 1
        %v4772 = vmax.f32 %v4770, %v4771
        %v4773 = vsel %vm2744, %v4764, -inf
        %v4774 = vrot.slane %v4773, 4
        %v4775 = vmax.f32 %v4773, %v4774
        %v4776 = vrot.slane %v4775, 2
        %v4777 = vmax.f32 %v4775, %v4776
        %v4778 = vrot.slane %v4777, 1
        %v4779 = vmax.f32 %v4777, %v4778
        %v4780 = vsub.f32 %v4744, %v4772
        %v4781 = vsub.f32 %v4764, %v4779
        %v4782 = vmul.f32 %v4780, 1.442695
        %v4783 = vpow.pop %v4782
        %v4784 = vmul.f32 %v4781, 1.442695
        %v4785 = vpow.pop %v4784
        %v4786 = vsel %vm2744, %v4783, 0.0
        %v4787 = vrot.slane %v4786, 4
        %v4788 = vadd.f32 %v4786, %v4787
        %v4789 = vrot.slane %v4788, 2
        %v4790 = vadd.f32 %v4788, %v4789
        %v4791 = vrot.slane %v4790, 1
        %v4792 = vadd.f32 %v4790, %v4791
        %v4793 = vsel %vm2744, %v4785, 0.0
        %v4794 = vrot.slane %v4793, 4
        %v4795 = vadd.f32 %v4793, %v4794
        %v4796 = vrot.slane %v4795, 2
        %v4797 = vadd.f32 %v4795, %v4796
        %v4798 = vrot.slane %v4797, 1
        %v4799 = vadd.f32 %v4797, %v4798
        %v4800 = vrcp.pop %v4792
        %v4801 = vmul.f32 %v4792, %v4800
        %v4802 = vsub.f32 1.0, %v4801
        %v4803 = vmul.f32 %v4800, %v4802
        %v4804 = vadd.f32 %v4800, %v4803
        %vm4805 = vweird.f32 %v4792
        %vm4806 = vweird.f32 %v4800
        %vm4807 = vmor %vm4805, %vm4806
        %v4808 = vsel %vm4807, %v4800, %v4804
        %v4809 = vand.u32 2147483647, %v4792
        %vm4810 = vcmp.eq.f32.partialorder %v4809, 8.507059e+37
        %v4811 = vand.u32 %v4792, 2147483648
        %v4812 = vor.u32 1.1754944e-38, %v4811
        %v4813 = vsel %vm4810, %v4812, %v4808
        %v4814 = vmul.f32 1.0, %v4813
        %v4815 = vrcp.pop %v4799
        %v4816 = vmul.f32 %v4799, %v4815
        %v4817 = vsub.f32 1.0, %v4816
        %v4818 = vmul.f32 %v4815, %v4817
        %v4819 = vadd.f32 %v4815, %v4818
        %vm4820 = vweird.f32 %v4799
        %vm4821 = vweird.f32 %v4815
        %vm4822 = vmor %vm4820, %vm4821
        %v4823 = vsel %vm4822, %v4815, %v4819
        %v4824 = vand.u32 2147483647, %v4799
        %vm4825 = vcmp.eq.f32.partialorder %v4824, 8.507059e+37
        %v4826 = vand.u32 %v4799, 2147483648
        %v4827 = vor.u32 1.1754944e-38, %v4826
        %v4828 = vsel %vm4825, %v4827, %v4823
        %v4829 = vmul.f32 1.0, %v4828
        %v4830 = vmul.f32 %v4783, %v4814
        %v4831 = vmul.f32 %v4785, %v4829
        %v4833 = vsel %vm2744, %v4830, 0
        %v4836 = vsel %vm2744, %v4831, 0
        %4838 = vmatpush.msra.mxu0 0.0
        %4839 = vmatpush.msra.mxu0 0.0
        %4840 = vmatpush.msra.mxu0 0.0
        %4841 = vmatpush.msra.mxu0 0.0
        %4842 = vmatpush.msra.mxu0 0.0
        %4843 = vmatpush.msra.mxu0 0.0
        %4844 = vmatpush.msra.mxu0 0.0
        %4845 = vmatpush.msra.mxu0 0.0
        %4846 = vmatpush.msra.mxu0 0.0
        %4847 = vmatpush.msra.mxu0 0.0
        %4848 = vmatpush.msra.mxu0 0.0
        %4849 = vmatpush.msra.mxu0 0.0
        %4850 = vmatpush.msra.mxu0 0.0
        %4851 = vmatpush.msra.mxu0 0.0
        %4852 = vmatpush.msra.mxu0 0.0
        %4853 = vmatpush.msra.mxu0 %v4833
        %4854 = vmatmul.f32.gmra.mxu0 %v2829
        %v4855 = vpop.f32.mrf.mxu0
        %v4856 = vadd.f32 %v2813, %v4855
        %4857 = vmatmul.f32.gmra.mxu0 %v2832
        %v4858 = vpop.f32.mrf.mxu0
        %v4859 = vadd.f32 %v2817, %v4858
        %4860 = vmatmul.f32.gmra.mxu0 %v2835
        %v4861 = vpop.f32.mrf.mxu0
        %v4862 = vadd.f32 %v2821, %v4861
        %4863 = vmatmul.f32.gmra.mxu0 %v2838
        %v4864 = vpop.f32.mrf.mxu0
        %v4865 = vadd.f32 %v2825, %v4864
        %4866 = vdwg.mxu0
        %4867 = vmatpush.msra.mxu0 0.0
        %4868 = vmatpush.msra.mxu0 0.0
        %4869 = vmatpush.msra.mxu0 0.0
        %4870 = vmatpush.msra.mxu0 0.0
        %4871 = vmatpush.msra.mxu0 0.0
        %4872 = vmatpush.msra.mxu0 0.0
        %4873 = vmatpush.msra.mxu0 0.0
        %4874 = vmatpush.msra.mxu0 0.0
        %4875 = vmatpush.msra.mxu0 0.0
        %4876 = vmatpush.msra.mxu0 0.0
        %4877 = vmatpush.msra.mxu0 0.0
        %4878 = vmatpush.msra.mxu0 0.0
        %4879 = vmatpush.msra.mxu0 0.0
        %4880 = vmatpush.msra.mxu0 0.0
        %4881 = vmatpush.msra.mxu0 0.0
        %4882 = vmatpush.msra.mxu0 %v4836
        %4883 = vmatmul.f32.gmra.mxu0 %v2829
        %v4884 = vpop.f32.mrf.mxu0
        %v4885 = vadd.f32 %v2813, %v4884
        %4886 = vmatmul.f32.gmra.mxu0 %v2832
        %v4887 = vpop.f32.mrf.mxu0
        %v4888 = vadd.f32 %v2817, %v4887
        %4889 = vmatmul.f32.gmra.mxu0 %v2835
        %v4890 = vpop.f32.mrf.mxu0
        %v4891 = vadd.f32 %v2821, %v4890
        %4892 = vmatmul.f32.gmra.mxu0 %v2838
        %v4893 = vpop.f32.mrf.mxu0
        %v4894 = vadd.f32 %v2825, %v4893
        %4895 = vdwg.mxu0
        %v4896 = vadd.f32 %v3917, %v4856
        %v4897 = vadd.f32 %v3918, %v4885
        %v4898 = vadd.f32 %v3920, %v4859
        %v4899 = vadd.f32 %v3921, %v4888
        %v4900 = vadd.f32 %v3923, %v4862
        %v4901 = vadd.f32 %v3924, %v4891
        %v4902 = vadd.f32 %v3926, %v4865
        %v4903 = vadd.f32 %v3927, %v4894
        %4904 = vst [vmem:[%s268 + $0x20] sm:$0xff] %v4896
        %4905 = vst [vmem:[%s268 + $0x28] sm:$0xff] %v4897
        %4906 = vst [vmem:[%s268 + $0x60] sm:$0xff] %v4898
        %4907 = vst [vmem:[%s268 + $0x68] sm:$0xff] %v4899
        %4908 = vst [vmem:[%s268 + $0xa0] sm:$0xff] %v4900
        %4909 = vst [vmem:[%s268 + $0xa8] sm:$0xff] %v4901
        %4910 = vst [vmem:[%s268 + $0xe0] sm:$0xff] %v4902
        %4911 = vst [vmem:[%s268 + $0xe8] sm:$0xff] %v4903
        %v4912 = vld [vmem:[#allocation2 + $0x30] sm:$0xff]
        %v4913 = vld [vmem:[#allocation2 + $0x38] sm:$0xff]
        %v4914 = vld [vmem:[#allocation2 + $0x40] sm:$0xff]
        %v4915 = vld [vmem:[#allocation2 + $0x80] sm:$0xff]
        %v4916 = vld [vmem:[#allocation2 + $0x88] sm:$0xff]
        %v4917 = vld [vmem:[#allocation2 + $0x90] sm:$0xff]
        %v4918 = vld [vmem:[#allocation2 + $0xd0] sm:$0xff]
        %v4919 = vld [vmem:[#allocation2 + $0xd8] sm:$0xff]
        %v4920 = vld [vmem:[#allocation2 + $0xe0] sm:$0xff]
        %v4921 = vld [vmem:[#allocation2 + $0x120] sm:$0xff]
        %v4922 = vld [vmem:[#allocation2 + $0x128] sm:$0xff]
        %v4923 = vld [vmem:[#allocation2 + $0x130] sm:$0xff]
        %v4924 = vmul.f32 %v4912, %v1731
        %v4925 = vmul.f32 %v4913, %v1731
        %v4926 = vmul.f32 %v4914, %v1731
        %v4927 = vmul.f32 %v4915, %v1735
        %v4928 = vmul.f32 %v4916, %v1735
        %v4929 = vmul.f32 %v4917, %v1735
        %v4930 = vmul.f32 %v4918, %v1739
        %v4931 = vmul.f32 %v4919, %v1739
        %v4932 = vmul.f32 %v4920, %v1739
        %v4933 = vmul.f32 %v4921, %v1743
        %v4934 = vmul.f32 %v4922, %v1743
        %v4935 = vmul.f32 %v4923, %v1743
        %v4936 = vadd.f32 %v4924, 0.0
        %v4937 = vadd.f32 %v4925, 0.0
        %v4938 = vadd.f32 %v4926, 0.0
        %v4939 = vadd.f32 %v4927, 0.0
        %v4940 = vadd.f32 %v4928, 0.0
        %v4941 = vadd.f32 %v4929, 0.0
        %v4942 = vadd.f32 %v4930, 0.0
        %v4943 = vadd.f32 %v4931, 0.0
        %v4944 = vadd.f32 %v4932, 0.0
        %v4945 = vadd.f32 %v4933, 0.0
        %v4946 = vadd.f32 %v4934, 0.0
        %v4947 = vadd.f32 %v4935, 0.0
        %v4948 = vmul.f32 %v4912, %v1771
        %v4949 = vmul.f32 %v4913, %v1771
        %v4950 = vmul.f32 %v4914, %v1771
        %v4951 = vmul.f32 %v4915, %v1775
        %v4952 = vmul.f32 %v4916, %v1775
        %v4953 = vmul.f32 %v4917, %v1775
        %v4954 = vmul.f32 %v4918, %v1779
        %v4955 = vmul.f32 %v4919, %v1779
        %v4956 = vmul.f32 %v4920, %v1779
        %v4957 = vmul.f32 %v4921, %v1783
        %v4958 = vmul.f32 %v4922, %v1783
        %v4959 = vmul.f32 %v4923, %v1783
        %4972 = vrot.lane.b32.xlu0 %v4948, 96
        %v4973 = vpop.permute.xlu0 %4972
        %4974 = vrot.lane.b32.xlu0 %v4949, 96
        %v4975 = vpop.permute.xlu0 %4974
        %4976 = vrot.lane.b32.xlu0 %v4950, 96
        %v4977 = vpop.permute.xlu0 %4976
        %4978 = vrot.lane.b32.xlu0 %v4951, 96
        %v4979 = vpop.permute.xlu0 %4978
        %4980 = vrot.lane.b32.xlu0 %v4952, 96
        %v4981 = vpop.permute.xlu0 %4980
        %4982 = vrot.lane.b32.xlu0 %v4953, 96
        %v4983 = vpop.permute.xlu0 %4982
        %4984 = vrot.lane.b32.xlu0 %v4954, 96
        %v4985 = vpop.permute.xlu0 %4984
        %4986 = vrot.lane.b32.xlu0 %v4955, 96
        %v4987 = vpop.permute.xlu0 %4986
        %4988 = vrot.lane.b32.xlu0 %v4956, 96
        %v4989 = vpop.permute.xlu0 %4988
        %4990 = vrot.lane.b32.xlu0 %v4957, 96
        %v4991 = vpop.permute.xlu0 %4990
        %4992 = vrot.lane.b32.xlu0 %v4958, 96
        %v4993 = vpop.permute.xlu0 %4992
        %4994 = vrot.lane.b32.xlu0 %v4959, 96
        %v4995 = vpop.permute.xlu0 %4994
        %v4996 = vsel %vm1833, %v4973, %v4975
        %v4997 = vsel %vm1833, %v4975, %v4977
        %v4998 = vsel %vm1833, %v4979, %v4981
        %v4999 = vsel %vm1833, %v4981, %v4983
        %v5000 = vsel %vm1833, %v4985, %v4987
        %v5001 = vsel %vm1833, %v4987, %v4989
        %v5002 = vsel %vm1833, %v4991, %v4993
        %v5003 = vsel %vm1833, %v4993, %v4995
        %v5016 = vadd.f32 %v4936, %v4996
        %v5017 = vadd.f32 %v4937, %v4997
        %v5018 = vadd.f32 %v4938, %v4977
        %v5019 = vadd.f32 %v4939, %v4998
        %v5020 = vadd.f32 %v4940, %v4999
        %v5021 = vadd.f32 %v4941, %v4983
        %v5022 = vadd.f32 %v4942, %v5000
        %v5023 = vadd.f32 %v4943, %v5001
        %v5024 = vadd.f32 %v4944, %v4989
        %v5025 = vadd.f32 %v4945, %v5002
        %v5026 = vadd.f32 %v4946, %v5003
        %v5027 = vadd.f32 %v4947, %v4995
        %v5028 = vld [vmem:[#allocation2 + $0x38] sm:$0xff]
        %v5029 = vld [vmem:[#allocation2 + $0x40] sm:$0xff]
        %v5030 = vld [vmem:[#allocation2 + $0x48] sm:$0xff]
        %v5031 = vld [vmem:[#allocation2 + $0x88] sm:$0xff]
        %v5032 = vld [vmem:[#allocation2 + $0x90] sm:$0xff]
        %v5033 = vld [vmem:[#allocation2 + $0x98] sm:$0xff]
        %v5034 = vld [vmem:[#allocation2 + $0xd8] sm:$0xff]
        %v5035 = vld [vmem:[#allocation2 + $0xe0] sm:$0xff]
        %v5036 = vld [vmem:[#allocation2 + $0xe8] sm:$0xff]
        %v5037 = vld [vmem:[#allocation2 + $0x128] sm:$0xff]
        %v5038 = vld [vmem:[#allocation2 + $0x130] sm:$0xff]
        %v5039 = vld [vmem:[#allocation2 + $0x138] sm:$0xff]
        %v5040 = vmul.f32 %v5028, %v1880
        %v5041 = vmul.f32 %v5029, %v1880
        %v5042 = vmul.f32 %v5030, %v1880
        %v5043 = vmul.f32 %v5031, %v1884
        %v5044 = vmul.f32 %v5032, %v1884
        %v5045 = vmul.f32 %v5033, %v1884
        %v5046 = vmul.f32 %v5034, %v1888
        %v5047 = vmul.f32 %v5035, %v1888
        %v5048 = vmul.f32 %v5036, %v1888
        %v5049 = vmul.f32 %v5037, %v1892
        %v5050 = vmul.f32 %v5038, %v1892
        %v5051 = vmul.f32 %v5039, %v1892
        %5064 = vrot.lane.b32.xlu0 %v5040, 64
        %v5065 = vpop.permute.xlu0 %5064
        %5066 = vrot.lane.b32.xlu0 %v5041, 64
        %v5067 = vpop.permute.xlu0 %5066
        %5068 = vrot.lane.b32.xlu0 %v5042, 64
        %v5069 = vpop.permute.xlu0 %5068
        %5070 = vrot.lane.b32.xlu0 %v5043, 64
        %v5071 = vpop.permute.xlu0 %5070
        %5072 = vrot.lane.b32.xlu0 %v5044, 64
        %v5073 = vpop.permute.xlu0 %5072
        %5074 = vrot.lane.b32.xlu0 %v5045, 64
        %v5075 = vpop.permute.xlu0 %5074
        %5076 = vrot.lane.b32.xlu0 %v5046, 64
        %v5077 = vpop.permute.xlu0 %5076
        %5078 = vrot.lane.b32.xlu0 %v5047, 64
        %v5079 = vpop.permute.xlu0 %5078
        %5080 = vrot.lane.b32.xlu0 %v5048, 64
        %v5081 = vpop.permute.xlu0 %5080
        %5082 = vrot.lane.b32.xlu0 %v5049, 64
        %v5083 = vpop.permute.xlu0 %5082
        %5084 = vrot.lane.b32.xlu0 %v5050, 64
        %v5085 = vpop.permute.xlu0 %5084
        %5086 = vrot.lane.b32.xlu0 %v5051, 64
        %v5087 = vpop.permute.xlu0 %5086
        %v5088 = vsel %vm1942, %v5065, %v5067
        %v5089 = vsel %vm1942, %v5067, %v5069
        %v5090 = vsel %vm1942, %v5071, %v5073
        %v5091 = vsel %vm1942, %v5073, %v5075
        %v5092 = vsel %vm1942, %v5077, %v5079
        %v5093 = vsel %vm1942, %v5079, %v5081
        %v5094 = vsel %vm1942, %v5083, %v5085
        %v5095 = vsel %vm1942, %v5085, %v5087
        %v5108 = vadd.f32 %v5016, %v5065
        %v5109 = vadd.f32 %v5017, %v5088
        %v5110 = vadd.f32 %v5018, %v5089
        %v5111 = vadd.f32 %v5019, %v5071
        %v5112 = vadd.f32 %v5020, %v5090
        %v5113 = vadd.f32 %v5021, %v5091
        %v5114 = vadd.f32 %v5022, %v5077
        %v5115 = vadd.f32 %v5023, %v5092
        %v5116 = vadd.f32 %v5024, %v5093
        %v5117 = vadd.f32 %v5025, %v5083
        %v5118 = vadd.f32 %v5026, %v5094
        %v5119 = vadd.f32 %v5027, %v5095
        %s5120 = scalar_lea.vmem %s3, 12
        %v5121 = vld [vmem:[%s5120] ss:$2 sm:$0x3]
        %v5123 = vperm.slane %v5121, 0
        %v5124 = vperm.slane %v5121, 1
        %5125 = vrot.lane.b32.xlu0 %v5123, 95
        %v5126 = vpop.permute.xlu0 %5125
        %5127 = vrot.lane.b32.xlu0 %v5124, 95
        %v5128 = vpop.permute.xlu0 %5127
        %v5129 = vsel %vm1983, %v5126, %v5128
        %v5133 = vmul.f32 %v5108, %v5126
        %v5134 = vmul.f32 %v5109, %v5129
        %v5135 = vmul.f32 %v5110, %v5128
        %v5136 = vmul.f32 %v5111, %v5126
        %v5137 = vmul.f32 %v5112, %v5129
        %v5138 = vmul.f32 %v5113, %v5128
        %v5139 = vmul.f32 %v5114, %v5126
        %v5140 = vmul.f32 %v5115, %v5129
        %v5141 = vmul.f32 %v5116, %v5128
        %v5142 = vmul.f32 %v5117, %v5126
        %v5143 = vmul.f32 %v5118, %v5129
        %v5144 = vmul.f32 %v5119, %v5128
        %v5145 = vadd.f32 %v5133, 0.0
        %v5146 = vadd.f32 %v5134, 0.0
        %v5147 = vadd.f32 %v5135, 0.0
        %v5148 = vadd.f32 %v5136, 0.0
        %v5149 = vadd.f32 %v5137, 0.0
        %v5150 = vadd.f32 %v5138, 0.0
        %v5151 = vadd.f32 %v5139, 0.0
        %v5152 = vadd.f32 %v5140, 0.0
        %v5153 = vadd.f32 %v5141, 0.0
        %v5154 = vadd.f32 %v5142, 0.0
        %v5155 = vadd.f32 %v5143, 0.0
        %v5156 = vadd.f32 %v5144, 0.0
        %v5157 = vmul.f32 %v4912, %v2014
        %v5158 = vmul.f32 %v4913, %v2014
        %v5159 = vmul.f32 %v4914, %v2014
        %v5160 = vmul.f32 %v4915, %v2018
        %v5161 = vmul.f32 %v4916, %v2018
        %v5162 = vmul.f32 %v4917, %v2018
        %v5163 = vmul.f32 %v4918, %v2022
        %v5164 = vmul.f32 %v4919, %v2022
        %v5165 = vmul.f32 %v4920, %v2022
        %v5166 = vmul.f32 %v4921, %v2026
        %v5167 = vmul.f32 %v4922, %v2026
        %v5168 = vmul.f32 %v4923, %v2026
        %v5169 = vadd.f32 %v5157, 0.0
        %v5170 = vadd.f32 %v5158, 0.0
        %v5171 = vadd.f32 %v5159, 0.0
        %v5172 = vadd.f32 %v5160, 0.0
        %v5173 = vadd.f32 %v5161, 0.0
        %v5174 = vadd.f32 %v5162, 0.0
        %v5175 = vadd.f32 %v5163, 0.0
        %v5176 = vadd.f32 %v5164, 0.0
        %v5177 = vadd.f32 %v5165, 0.0
        %v5178 = vadd.f32 %v5166, 0.0
        %v5179 = vadd.f32 %v5167, 0.0
        %v5180 = vadd.f32 %v5168, 0.0
        %v5181 = vmul.f32 %v4913, %v2054
        %v5182 = vmul.f32 %v4914, %v2054
        %v5183 = vmul.f32 %v4916, %v2058
        %v5184 = vmul.f32 %v4917, %v2058
        %v5185 = vmul.f32 %v4919, %v2062
        %v5186 = vmul.f32 %v4920, %v2062
        %v5187 = vmul.f32 %v4922, %v2066
        %v5188 = vmul.f32 %v4923, %v2066
        %5197 = vrot.lane.b32.xlu0 %v5181, 96
        %v5198 = vpop.permute.xlu0 %5197
        %5199 = vrot.lane.b32.xlu0 %v5182, 96
        %v5200 = vpop.permute.xlu0 %5199
        %5201 = vrot.lane.b32.xlu0 %v5183, 96
        %v5202 = vpop.permute.xlu0 %5201
        %5203 = vrot.lane.b32.xlu0 %v5184, 96
        %v5204 = vpop.permute.xlu0 %5203
        %5205 = vrot.lane.b32.xlu0 %v5185, 96
        %v5206 = vpop.permute.xlu0 %5205
        %5207 = vrot.lane.b32.xlu0 %v5186, 96
        %v5208 = vpop.permute.xlu0 %5207
        %5209 = vrot.lane.b32.xlu0 %v5187, 96
        %v5210 = vpop.permute.xlu0 %5209
        %5211 = vrot.lane.b32.xlu0 %v5188, 96
        %v5212 = vpop.permute.xlu0 %5211
        %v5213 = vsel %vm1833, %v5198, %v5200
        %v5214 = vsel %vm1833, %v5202, %v5204
        %v5215 = vsel %vm1833, %v5206, %v5208
        %v5216 = vsel %vm1833, %v5210, %v5212
        %v5229 = vadd.f32 %v5169, %v5198
        %v5230 = vadd.f32 %v5170, %v5213
        %v5231 = vadd.f32 %v5171, %v5200
        %v5232 = vadd.f32 %v5172, %v5202
        %v5233 = vadd.f32 %v5173, %v5214
        %v5234 = vadd.f32 %v5174, %v5204
        %v5235 = vadd.f32 %v5175, %v5206
        %v5236 = vadd.f32 %v5176, %v5215
        %v5237 = vadd.f32 %v5177, %v5208
        %v5238 = vadd.f32 %v5178, %v5210
        %v5239 = vadd.f32 %v5179, %v5216
        %v5240 = vadd.f32 %v5180, %v5212
        %v5241 = vmul.f32 %v5028, %v2130
        %v5242 = vmul.f32 %v5029, %v2130
        %v5243 = vmul.f32 %v5030, %v2130
        %v5244 = vmul.f32 %v5031, %v2134
        %v5245 = vmul.f32 %v5032, %v2134
        %v5246 = vmul.f32 %v5033, %v2134
        %v5247 = vmul.f32 %v5034, %v2138
        %v5248 = vmul.f32 %v5035, %v2138
        %v5249 = vmul.f32 %v5036, %v2138
        %v5250 = vmul.f32 %v5037, %v2142
        %v5251 = vmul.f32 %v5038, %v2142
        %v5252 = vmul.f32 %v5039, %v2142
        %5265 = vrot.lane.b32.xlu0 %v5241, 64
        %v5266 = vpop.permute.xlu0 %5265
        %5267 = vrot.lane.b32.xlu0 %v5242, 64
        %v5268 = vpop.permute.xlu0 %5267
        %5269 = vrot.lane.b32.xlu0 %v5243, 64
        %v5270 = vpop.permute.xlu0 %5269
        %5271 = vrot.lane.b32.xlu0 %v5244, 64
        %v5272 = vpop.permute.xlu0 %5271
        %5273 = vrot.lane.b32.xlu0 %v5245, 64
        %v5274 = vpop.permute.xlu0 %5273
        %5275 = vrot.lane.b32.xlu0 %v5246, 64
        %v5276 = vpop.permute.xlu0 %5275
        %5277 = vrot.lane.b32.xlu0 %v5247, 64
        %v5278 = vpop.permute.xlu0 %5277
        %5279 = vrot.lane.b32.xlu0 %v5248, 64
        %v5280 = vpop.permute.xlu0 %5279
        %5281 = vrot.lane.b32.xlu0 %v5249, 64
        %v5282 = vpop.permute.xlu0 %5281
        %5283 = vrot.lane.b32.xlu0 %v5250, 64
        %v5284 = vpop.permute.xlu0 %5283
        %5285 = vrot.lane.b32.xlu0 %v5251, 64
        %v5286 = vpop.permute.xlu0 %5285
        %5287 = vrot.lane.b32.xlu0 %v5252, 64
        %v5288 = vpop.permute.xlu0 %5287
        %v5289 = vsel %vm1942, %v5266, %v5268
        %v5290 = vsel %vm1942, %v5268, %v5270
        %v5291 = vsel %vm1942, %v5272, %v5274
        %v5292 = vsel %vm1942, %v5274, %v5276
        %v5293 = vsel %vm1942, %v5278, %v5280
        %v5294 = vsel %vm1942, %v5280, %v5282
        %v5295 = vsel %vm1942, %v5284, %v5286
        %v5296 = vsel %vm1942, %v5286, %v5288
        %v5309 = vadd.f32 %v5229, %v5266
        %v5310 = vadd.f32 %v5230, %v5289
        %v5311 = vadd.f32 %v5231, %v5290
        %v5312 = vadd.f32 %v5232, %v5272
        %v5313 = vadd.f32 %v5233, %v5291
        %v5314 = vadd.f32 %v5234, %v5292
        %v5315 = vadd.f32 %v5235, %v5278
        %v5316 = vadd.f32 %v5236, %v5293
        %v5317 = vadd.f32 %v5237, %v5294
        %v5318 = vadd.f32 %v5238, %v5284
        %v5319 = vadd.f32 %v5239, %v5295
        %v5320 = vadd.f32 %v5240, %v5296
        %5333 = vrot.lane.b32.xlu0 %v5309, 127
        %v5334 = vpop.permute.xlu0 %5333
        %5335 = vrot.lane.b32.xlu0 %v5310, 127
        %v5336 = vpop.permute.xlu0 %5335
        %5337 = vrot.lane.b32.xlu0 %v5311, 127
        %v5338 = vpop.permute.xlu0 %5337
        %5339 = vrot.lane.b32.xlu0 %v5312, 127
        %v5340 = vpop.permute.xlu0 %5339
        %5341 = vrot.lane.b32.xlu0 %v5313, 127
        %v5342 = vpop.permute.xlu0 %5341
        %5343 = vrot.lane.b32.xlu0 %v5314, 127
        %v5344 = vpop.permute.xlu0 %5343
        %5345 = vrot.lane.b32.xlu0 %v5315, 127
        %v5346 = vpop.permute.xlu0 %5345
        %5347 = vrot.lane.b32.xlu0 %v5316, 127
        %v5348 = vpop.permute.xlu0 %5347
        %5349 = vrot.lane.b32.xlu0 %v5317, 127
        %v5350 = vpop.permute.xlu0 %5349
        %5351 = vrot.lane.b32.xlu0 %v5318, 127
        %v5352 = vpop.permute.xlu0 %5351
        %5353 = vrot.lane.b32.xlu0 %v5319, 127
        %v5354 = vpop.permute.xlu0 %5353
        %5355 = vrot.lane.b32.xlu0 %v5320, 127
        %v5356 = vpop.permute.xlu0 %5355
        %v5357 = vsel %vm2260, %v5334, %v5336
        %v5358 = vsel %vm2260, %v5336, %v5338
        %v5359 = vsel %vm2260, %v5340, %v5342
        %v5360 = vsel %vm2260, %v5342, %v5344
        %v5361 = vsel %vm2260, %v5346, %v5348
        %v5362 = vsel %vm2260, %v5348, %v5350
        %v5363 = vsel %vm2260, %v5352, %v5354
        %v5364 = vsel %vm2260, %v5354, %v5356
        %v5377 = vadd.f32 %v5145, %v5357
        %v5378 = vadd.f32 %v5146, %v5358
        %v5379 = vadd.f32 %v5147, %v5338
        %v5380 = vadd.f32 %v5148, %v5359
        %v5381 = vadd.f32 %v5149, %v5360
        %v5382 = vadd.f32 %v5150, %v5344
        %v5383 = vadd.f32 %v5151, %v5361
        %v5384 = vadd.f32 %v5152, %v5362
        %v5385 = vadd.f32 %v5153, %v5350
        %v5386 = vadd.f32 %v5154, %v5363
        %v5387 = vadd.f32 %v5155, %v5364
        %v5388 = vadd.f32 %v5156, %v5356
        %v5389 = vmul.f32 %v4912, %v2295
        %v5390 = vmul.f32 %v4913, %v2295
        %v5391 = vmul.f32 %v4914, %v2295
        %v5392 = vmul.f32 %v4915, %v2299
        %v5393 = vmul.f32 %v4916, %v2299
        %v5394 = vmul.f32 %v4917, %v2299
        %v5395 = vmul.f32 %v4918, %v2303
        %v5396 = vmul.f32 %v4919, %v2303
        %v5397 = vmul.f32 %v4920, %v2303
        %v5398 = vmul.f32 %v4921, %v2307
        %v5399 = vmul.f32 %v4922, %v2307
        %v5400 = vmul.f32 %v4923, %v2307
        %v5401 = vadd.f32 %v5389, 0.0
        %v5402 = vadd.f32 %v5390, 0.0
        %v5403 = vadd.f32 %v5391, 0.0
        %v5404 = vadd.f32 %v5392, 0.0
        %v5405 = vadd.f32 %v5393, 0.0
        %v5406 = vadd.f32 %v5394, 0.0
        %v5407 = vadd.f32 %v5395, 0.0
        %v5408 = vadd.f32 %v5396, 0.0
        %v5409 = vadd.f32 %v5397, 0.0
        %v5410 = vadd.f32 %v5398, 0.0
        %v5411 = vadd.f32 %v5399, 0.0
        %v5412 = vadd.f32 %v5400, 0.0
        %v5413 = vmul.f32 %v5028, %v2335
        %v5414 = vmul.f32 %v5029, %v2335
        %v5415 = vmul.f32 %v5030, %v2335
        %v5416 = vmul.f32 %v5031, %v2339
        %v5417 = vmul.f32 %v5032, %v2339
        %v5418 = vmul.f32 %v5033, %v2339
        %v5419 = vmul.f32 %v5034, %v2343
        %v5420 = vmul.f32 %v5035, %v2343
        %v5421 = vmul.f32 %v5036, %v2343
        %v5422 = vmul.f32 %v5037, %v2347
        %v5423 = vmul.f32 %v5038, %v2347
        %v5424 = vmul.f32 %v5039, %v2347
        %5437 = vrot.lane.b32.xlu0 %v5413, 96
        %v5438 = vpop.permute.xlu0 %5437
        %5439 = vrot.lane.b32.xlu0 %v5414, 96
        %v5440 = vpop.permute.xlu0 %5439
        %5441 = vrot.lane.b32.xlu0 %v5415, 96
        %v5442 = vpop.permute.xlu0 %5441
        %5443 = vrot.lane.b32.xlu0 %v5416, 96
        %v5444 = vpop.permute.xlu0 %5443
        %5445 = vrot.lane.b32.xlu0 %v5417, 96
        %v5446 = vpop.permute.xlu0 %5445
        %5447 = vrot.lane.b32.xlu0 %v5418, 96
        %v5448 = vpop.permute.xlu0 %5447
        %5449 = vrot.lane.b32.xlu0 %v5419, 96
        %v5450 = vpop.permute.xlu0 %5449
        %5451 = vrot.lane.b32.xlu0 %v5420, 96
        %v5452 = vpop.permute.xlu0 %5451
        %5453 = vrot.lane.b32.xlu0 %v5421, 96
        %v5454 = vpop.permute.xlu0 %5453
        %5455 = vrot.lane.b32.xlu0 %v5422, 96
        %v5456 = vpop.permute.xlu0 %5455
        %5457 = vrot.lane.b32.xlu0 %v5423, 96
        %v5458 = vpop.permute.xlu0 %5457
        %5459 = vrot.lane.b32.xlu0 %v5424, 96
        %v5460 = vpop.permute.xlu0 %5459
        %v5461 = vsel %vm1833, %v5438, %v5440
        %v5462 = vsel %vm1833, %v5440, %v5442
        %v5463 = vsel %vm1833, %v5444, %v5446
        %v5464 = vsel %vm1833, %v5446, %v5448
        %v5465 = vsel %vm1833, %v5450, %v5452
        %v5466 = vsel %vm1833, %v5452, %v5454
        %v5467 = vsel %vm1833, %v5456, %v5458
        %v5468 = vsel %vm1833, %v5458, %v5460
        %v5481 = vadd.f32 %v5401, %v5438
        %v5482 = vadd.f32 %v5402, %v5461
        %v5483 = vadd.f32 %v5403, %v5462
        %v5484 = vadd.f32 %v5404, %v5444
        %v5485 = vadd.f32 %v5405, %v5463
        %v5486 = vadd.f32 %v5406, %v5464
        %v5487 = vadd.f32 %v5407, %v5450
        %v5488 = vadd.f32 %v5408, %v5465
        %v5489 = vadd.f32 %v5409, %v5466
        %v5490 = vadd.f32 %v5410, %v5456
        %v5491 = vadd.f32 %v5411, %v5467
        %v5492 = vadd.f32 %v5412, %v5468
        %v5493 = vmul.f32 %v5028, %v2431
        %v5494 = vmul.f32 %v5029, %v2431
        %v5495 = vmul.f32 %v5030, %v2431
        %v5496 = vmul.f32 %v5031, %v2435
        %v5497 = vmul.f32 %v5032, %v2435
        %v5498 = vmul.f32 %v5033, %v2435
        %v5499 = vmul.f32 %v5034, %v2439
        %v5500 = vmul.f32 %v5035, %v2439
        %v5501 = vmul.f32 %v5036, %v2439
        %v5502 = vmul.f32 %v5037, %v2443
        %v5503 = vmul.f32 %v5038, %v2443
        %v5504 = vmul.f32 %v5039, %v2443
        %5517 = vrot.lane.b32.xlu0 %v5493, 64
        %v5518 = vpop.permute.xlu0 %5517
        %5519 = vrot.lane.b32.xlu0 %v5494, 64
        %v5520 = vpop.permute.xlu0 %5519
        %5521 = vrot.lane.b32.xlu0 %v5495, 64
        %v5522 = vpop.permute.xlu0 %5521
        %5523 = vrot.lane.b32.xlu0 %v5496, 64
        %v5524 = vpop.permute.xlu0 %5523
        %5525 = vrot.lane.b32.xlu0 %v5497, 64
        %v5526 = vpop.permute.xlu0 %5525
        %5527 = vrot.lane.b32.xlu0 %v5498, 64
        %v5528 = vpop.permute.xlu0 %5527
        %5529 = vrot.lane.b32.xlu0 %v5499, 64
        %v5530 = vpop.permute.xlu0 %5529
        %5531 = vrot.lane.b32.xlu0 %v5500, 64
        %v5532 = vpop.permute.xlu0 %5531
        %5533 = vrot.lane.b32.xlu0 %v5501, 64
        %v5534 = vpop.permute.xlu0 %5533
        %5535 = vrot.lane.b32.xlu0 %v5502, 64
        %v5536 = vpop.permute.xlu0 %5535
        %5537 = vrot.lane.b32.xlu0 %v5503, 64
        %v5538 = vpop.permute.xlu0 %5537
        %5539 = vrot.lane.b32.xlu0 %v5504, 64
        %v5540 = vpop.permute.xlu0 %5539
        %v5541 = vsel %vm1942, %v5518, %v5520
        %v5542 = vsel %vm1942, %v5520, %v5522
        %v5543 = vsel %vm1942, %v5524, %v5526
        %v5544 = vsel %vm1942, %v5526, %v5528
        %v5545 = vsel %vm1942, %v5530, %v5532
        %v5546 = vsel %vm1942, %v5532, %v5534
        %v5547 = vsel %vm1942, %v5536, %v5538
        %v5548 = vsel %vm1942, %v5538, %v5540
        %v5561 = vadd.f32 %v5481, %v5518
        %v5562 = vadd.f32 %v5482, %v5541
        %v5563 = vadd.f32 %v5483, %v5542
        %v5564 = vadd.f32 %v5484, %v5524
        %v5565 = vadd.f32 %v5485, %v5543
        %v5566 = vadd.f32 %v5486, %v5544
        %v5567 = vadd.f32 %v5487, %v5530
        %v5568 = vadd.f32 %v5488, %v5545
        %v5569 = vadd.f32 %v5489, %v5546
        %v5570 = vadd.f32 %v5490, %v5536
        %v5571 = vadd.f32 %v5491, %v5547
        %v5572 = vadd.f32 %v5492, %v5548
        %s5573 = scalar_lea.vmem %s3, 13
        %v5574 = vld [vmem:[%s5573] ss:$2 sm:$0x3]
        %v5576 = vperm.slane %v5574, 0
        %v5577 = vperm.slane %v5574, 1
        %5578 = vrot.lane.b32.xlu0 %v5576, 97
        %v5579 = vpop.permute.xlu0 %5578
        %5580 = vrot.lane.b32.xlu0 %v5577, 97
        %v5581 = vpop.permute.xlu0 %5580
        %v5582 = vsel %vm2534, %v5579, %v5581
        %v5586 = vmul.f32 %v5561, %v5579
        %v5587 = vmul.f32 %v5562, %v5582
        %v5588 = vmul.f32 %v5563, %v5581
        %v5589 = vmul.f32 %v5564, %v5579
        %v5590 = vmul.f32 %v5565, %v5582
        %v5591 = vmul.f32 %v5566, %v5581
        %v5592 = vmul.f32 %v5567, %v5579
        %v5593 = vmul.f32 %v5568, %v5582
        %v5594 = vmul.f32 %v5569, %v5581
        %v5595 = vmul.f32 %v5570, %v5579
        %v5596 = vmul.f32 %v5571, %v5582
        %v5597 = vmul.f32 %v5572, %v5581
        %5610 = vrot.lane.b32.xlu0 %v5586, 126
        %v5611 = vpop.permute.xlu0 %5610
        %5612 = vrot.lane.b32.xlu0 %v5587, 126
        %v5613 = vpop.permute.xlu0 %5612
        %5614 = vrot.lane.b32.xlu0 %v5588, 126
        %v5615 = vpop.permute.xlu0 %5614
        %5616 = vrot.lane.b32.xlu0 %v5589, 126
        %v5617 = vpop.permute.xlu0 %5616
        %5618 = vrot.lane.b32.xlu0 %v5590, 126
        %v5619 = vpop.permute.xlu0 %5618
        %5620 = vrot.lane.b32.xlu0 %v5591, 126
        %v5621 = vpop.permute.xlu0 %5620
        %5622 = vrot.lane.b32.xlu0 %v5592, 126
        %v5623 = vpop.permute.xlu0 %5622
        %5624 = vrot.lane.b32.xlu0 %v5593, 126
        %v5625 = vpop.permute.xlu0 %5624
        %5626 = vrot.lane.b32.xlu0 %v5594, 126
        %v5627 = vpop.permute.xlu0 %5626
        %5628 = vrot.lane.b32.xlu0 %v5595, 126
        %v5629 = vpop.permute.xlu0 %5628
        %5630 = vrot.lane.b32.xlu0 %v5596, 126
        %v5631 = vpop.permute.xlu0 %5630
        %5632 = vrot.lane.b32.xlu0 %v5597, 126
        %v5633 = vpop.permute.xlu0 %5632
        %v5634 = vsel %vm2587, %v5611, %v5613
        %v5635 = vsel %vm2587, %v5613, %v5615
        %v5636 = vsel %vm2587, %v5617, %v5619
        %v5637 = vsel %vm2587, %v5619, %v5621
        %v5638 = vsel %vm2587, %v5623, %v5625
        %v5639 = vsel %vm2587, %v5625, %v5627
        %v5640 = vsel %vm2587, %v5629, %v5631
        %v5641 = vsel %vm2587, %v5631, %v5633
        %v5654 = vadd.f32 %v5377, %v5634
        %v5655 = vadd.f32 %v5378, %v5635
        %v5656 = vadd.f32 %v5379, %v5615
        %v5657 = vadd.f32 %v5380, %v5636
        %v5658 = vadd.f32 %v5381, %v5637
        %v5659 = vadd.f32 %v5382, %v5621
        %v5660 = vadd.f32 %v5383, %v5638
        %v5661 = vadd.f32 %v5384, %v5639
        %v5662 = vadd.f32 %v5385, %v5627
        %v5663 = vadd.f32 %v5386, %v5640
        %v5664 = vadd.f32 %v5387, %v5641
        %v5665 = vadd.f32 %v5388, %v5633
        %v5666 = vadd.f32 %v5654, %v2622
        %v5667 = vadd.f32 %v5655, %v2622
        %v5668 = vadd.f32 %v5656, %v2622
        %v5669 = vadd.f32 %v5657, %v2626
        %v5670 = vadd.f32 %v5658, %v2626
        %v5671 = vadd.f32 %v5659, %v2626
        %v5672 = vadd.f32 %v5660, %v2630
        %v5673 = vadd.f32 %v5661, %v2630
        %v5674 = vadd.f32 %v5662, %v2630
        %v5675 = vadd.f32 %v5663, %v2634
        %v5676 = vadd.f32 %v5664, %v2634
        %v5677 = vadd.f32 %v5665, %v2634
        %5690 = vrot.lane.b32.xlu0 %v5666, 33
        %v5691 = vpop.permute.xlu0 %5690
        %5692 = vrot.lane.b32.xlu0 %v5667, 33
        %v5693 = vpop.permute.xlu0 %5692
        %5694 = vrot.lane.b32.xlu0 %v5668, 33
        %v5695 = vpop.permute.xlu0 %5694
        %5696 = vrot.lane.b32.xlu0 %v5669, 33
        %v5697 = vpop.permute.xlu0 %5696
        %5698 = vrot.lane.b32.xlu0 %v5670, 33
        %v5699 = vpop.permute.xlu0 %5698
        %5700 = vrot.lane.b32.xlu0 %v5671, 33
        %v5701 = vpop.permute.xlu0 %5700
        %5702 = vrot.lane.b32.xlu0 %v5672, 33
        %v5703 = vpop.permute.xlu0 %5702
        %5704 = vrot.lane.b32.xlu0 %v5673, 33
        %v5705 = vpop.permute.xlu0 %5704
        %5706 = vrot.lane.b32.xlu0 %v5674, 33
        %v5707 = vpop.permute.xlu0 %5706
        %5708 = vrot.lane.b32.xlu0 %v5675, 33
        %v5709 = vpop.permute.xlu0 %5708
        %5710 = vrot.lane.b32.xlu0 %v5676, 33
        %v5711 = vpop.permute.xlu0 %5710
        %5712 = vrot.lane.b32.xlu0 %v5677, 33
        %v5713 = vpop.permute.xlu0 %5712
        %v5714 = vsel %vm2684, %v5691, %v5693
        %v5715 = vsel %vm2684, %v5693, %v5695
        %v5716 = vsel %vm2684, %v5697, %v5699
        %v5717 = vsel %vm2684, %v5699, %v5701
        %v5718 = vsel %vm2684, %v5703, %v5705
        %v5719 = vsel %vm2684, %v5705, %v5707
        %v5720 = vsel %vm2684, %v5709, %v5711
        %v5721 = vsel %vm2684, %v5711, %v5713
        %5730 = vmatpush.msra.mxu0 0.0
        %5731 = vmatpush.msra.mxu0 0.0
        %5732 = vmatpush.msra.mxu0 0.0
        %5733 = vmatpush.msra.mxu0 0.0
        %5734 = vmatpush.msra.mxu0 0.0
        %5735 = vmatpush.msra.mxu0 0.0
        %5736 = vmatpush.msra.mxu0 0.0
        %5737 = vmatpush.msra.mxu0 0.0
        %5738 = vmatpush.msra.mxu0 0.0
        %5739 = vmatpush.msra.mxu0 0.0
        %5740 = vmatpush.msra.mxu0 0.0
        %5741 = vmatpush.msra.mxu0 0.0
        %5742 = vmatpush.msra.mxu0 %v5720
        %5743 = vmatpush.msra.mxu0 %v5718
        %5744 = vmatpush.msra.mxu0 %v5716
        %5745 = vmatpush.msra.mxu0 %v5714
        %5746 = vmatmul.f32.gmra.mxu0 %v2702
        %v5747 = vpop.f32.mrf.mxu0
        %v5748 = vadd.f32 %v1716, %v5747
        %5749 = vdwg.mxu0
        %5750 = vmatpush.msra.mxu0 0.0
        %5751 = vmatpush.msra.mxu0 0.0
        %5752 = vmatpush.msra.mxu0 0.0
        %5753 = vmatpush.msra.mxu0 0.0
        %5754 = vmatpush.msra.mxu0 0.0
        %5755 = vmatpush.msra.mxu0 0.0
        %5756 = vmatpush.msra.mxu0 0.0
        %5757 = vmatpush.msra.mxu0 0.0
        %5758 = vmatpush.msra.mxu0 0.0
        %5759 = vmatpush.msra.mxu0 0.0
        %5760 = vmatpush.msra.mxu0 0.0
        %5761 = vmatpush.msra.mxu0 0.0
        %5762 = vmatpush.msra.mxu0 %v5721
        %5763 = vmatpush.msra.mxu0 %v5719
        %5764 = vmatpush.msra.mxu0 %v5717
        %5765 = vmatpush.msra.mxu0 %v5715
        %5766 = vmatmul.f32.gmra.mxu0 %v2702
        %v5767 = vpop.f32.mrf.mxu0
        %v5768 = vadd.f32 %v1716, %v5767
        %5769 = vdwg.mxu0
        %v5770 = vsel %vm2744, %v5748, -inf
        %v5771 = vrot.slane %v5770, 4
        %v5772 = vmax.f32 %v5770, %v5771
        %v5773 = vrot.slane %v5772, 2
        %v5774 = vmax.f32 %v5772, %v5773
        %v5775 = vrot.slane %v5774, 1
        %v5776 = vmax.f32 %v5774, %v5775
        %v5777 = vsel %vm2744, %v5768, -inf
        %v5778 = vrot.slane %v5777, 4
        %v5779 = vmax.f32 %v5777, %v5778
        %v5780 = vrot.slane %v5779, 2
        %v5781 = vmax.f32 %v5779, %v5780
        %v5782 = vrot.slane %v5781, 1
        %v5783 = vmax.f32 %v5781, %v5782
        %v5784 = vsub.f32 %v5748, %v5776
        %v5785 = vsub.f32 %v5768, %v5783
        %v5786 = vmul.f32 %v5784, 1.442695
        %v5787 = vpow.pop %v5786
        %v5788 = vmul.f32 %v5785, 1.442695
        %v5789 = vpow.pop %v5788
        %v5790 = vsel %vm2744, %v5787, 0.0
        %v5791 = vrot.slane %v5790, 4
        %v5792 = vadd.f32 %v5790, %v5791
        %v5793 = vrot.slane %v5792, 2
        %v5794 = vadd.f32 %v5792, %v5793
        %v5795 = vrot.slane %v5794, 1
        %v5796 = vadd.f32 %v5794, %v5795
        %v5797 = vsel %vm2744, %v5789, 0.0
        %v5798 = vrot.slane %v5797, 4
        %v5799 = vadd.f32 %v5797, %v5798
        %v5800 = vrot.slane %v5799, 2
        %v5801 = vadd.f32 %v5799, %v5800
        %v5802 = vrot.slane %v5801, 1
        %v5803 = vadd.f32 %v5801, %v5802
        %v5804 = vrcp.pop %v5796
        %v5805 = vmul.f32 %v5796, %v5804
        %v5806 = vsub.f32 1.0, %v5805
        %v5807 = vmul.f32 %v5804, %v5806
        %v5808 = vadd.f32 %v5804, %v5807
        %vm5809 = vweird.f32 %v5796
        %vm5810 = vweird.f32 %v5804
        %vm5811 = vmor %vm5809, %vm5810
        %v5812 = vsel %vm5811, %v5804, %v5808
        %v5813 = vand.u32 2147483647, %v5796
        %vm5814 = vcmp.eq.f32.partialorder %v5813, 8.507059e+37
        %v5815 = vand.u32 %v5796, 2147483648
        %v5816 = vor.u32 1.1754944e-38, %v5815
        %v5817 = vsel %vm5814, %v5816, %v5812
        %v5818 = vmul.f32 1.0, %v5817
        %v5819 = vrcp.pop %v5803
        %v5820 = vmul.f32 %v5803, %v5819
        %v5821 = vsub.f32 1.0, %v5820
        %v5822 = vmul.f32 %v5819, %v5821
        %v5823 = vadd.f32 %v5819, %v5822
        %vm5824 = vweird.f32 %v5803
        %vm5825 = vweird.f32 %v5819
        %vm5826 = vmor %vm5824, %vm5825
        %v5827 = vsel %vm5826, %v5819, %v5823
        %v5828 = vand.u32 2147483647, %v5803
        %vm5829 = vcmp.eq.f32.partialorder %v5828, 8.507059e+37
        %v5830 = vand.u32 %v5803, 2147483648
        %v5831 = vor.u32 1.1754944e-38, %v5830
        %v5832 = vsel %vm5829, %v5831, %v5827
        %v5833 = vmul.f32 1.0, %v5832
        %v5834 = vmul.f32 %v5787, %v5818
        %v5835 = vmul.f32 %v5789, %v5833
        %v5837 = vsel %vm2744, %v5834, 0
        %v5840 = vsel %vm2744, %v5835, 0
        %5842 = vmatpush.msra.mxu0 0.0
        %5843 = vmatpush.msra.mxu0 0.0
        %5844 = vmatpush.msra.mxu0 0.0
        %5845 = vmatpush.msra.mxu0 0.0
        %5846 = vmatpush.msra.mxu0 0.0
        %5847 = vmatpush.msra.mxu0 0.0
        %5848 = vmatpush.msra.mxu0 0.0
        %5849 = vmatpush.msra.mxu0 0.0
        %5850 = vmatpush.msra.mxu0 0.0
        %5851 = vmatpush.msra.mxu0 0.0
        %5852 = vmatpush.msra.mxu0 0.0
        %5853 = vmatpush.msra.mxu0 0.0
        %5854 = vmatpush.msra.mxu0 0.0
        %5855 = vmatpush.msra.mxu0 0.0
        %5856 = vmatpush.msra.mxu0 0.0
        %5857 = vmatpush.msra.mxu0 %v5837
        %5858 = vmatmul.f32.gmra.mxu0 %v2829
        %v5859 = vpop.f32.mrf.mxu0
        %v5860 = vadd.f32 %v2813, %v5859
        %5861 = vmatmul.f32.gmra.mxu0 %v2832
        %v5862 = vpop.f32.mrf.mxu0
        %v5863 = vadd.f32 %v2817, %v5862
        %5864 = vmatmul.f32.gmra.mxu0 %v2835
        %v5865 = vpop.f32.mrf.mxu0
        %v5866 = vadd.f32 %v2821, %v5865
        %5867 = vmatmul.f32.gmra.mxu0 %v2838
        %v5868 = vpop.f32.mrf.mxu0
        %v5869 = vadd.f32 %v2825, %v5868
        %5870 = vdwg.mxu0
        %5871 = vmatpush.msra.mxu0 0.0
        %5872 = vmatpush.msra.mxu0 0.0
        %5873 = vmatpush.msra.mxu0 0.0
        %5874 = vmatpush.msra.mxu0 0.0
        %5875 = vmatpush.msra.mxu0 0.0
        %5876 = vmatpush.msra.mxu0 0.0
        %5877 = vmatpush.msra.mxu0 0.0
        %5878 = vmatpush.msra.mxu0 0.0
        %5879 = vmatpush.msra.mxu0 0.0
        %5880 = vmatpush.msra.mxu0 0.0
        %5881 = vmatpush.msra.mxu0 0.0
        %5882 = vmatpush.msra.mxu0 0.0
        %5883 = vmatpush.msra.mxu0 0.0
        %5884 = vmatpush.msra.mxu0 0.0
        %5885 = vmatpush.msra.mxu0 0.0
        %5886 = vmatpush.msra.mxu0 %v5840
        %5887 = vmatmul.f32.gmra.mxu0 %v2829
        %v5888 = vpop.f32.mrf.mxu0
        %v5889 = vadd.f32 %v2813, %v5888
        %5890 = vmatmul.f32.gmra.mxu0 %v2832
        %v5891 = vpop.f32.mrf.mxu0
        %v5892 = vadd.f32 %v2817, %v5891
        %5893 = vmatmul.f32.gmra.mxu0 %v2835
        %v5894 = vpop.f32.mrf.mxu0
        %v5895 = vadd.f32 %v2821, %v5894
        %5896 = vmatmul.f32.gmra.mxu0 %v2838
        %v5897 = vpop.f32.mrf.mxu0
        %v5898 = vadd.f32 %v2825, %v5897
        %5899 = vdwg.mxu0
        %v5900 = vadd.f32 %v4913, %v5860
        %v5901 = vadd.f32 %v4914, %v5889
        %v5902 = vadd.f32 %v4916, %v5863
        %v5903 = vadd.f32 %v4917, %v5892
        %v5904 = vadd.f32 %v4919, %v5866
        %v5905 = vadd.f32 %v4920, %v5895
        %v5906 = vadd.f32 %v4922, %v5869
        %v5907 = vadd.f32 %v4923, %v5898
        %5908 = vst [vmem:[%s268 + $0x30] sm:$0xff] %v5900
        %5909 = vst [vmem:[%s268 + $0x38] sm:$0xff] %v5901
        %5910 = vst [vmem:[%s268 + $0x70] sm:$0xff] %v5902
        %5911 = vst [vmem:[%s268 + $0x78] sm:$0xff] %v5903
        %5912 = vst [vmem:[%s268 + $0xb0] sm:$0xff] %v5904
        %5913 = vst [vmem:[%s268 + $0xb8] sm:$0xff] %v5905
        %5914 = vst [vmem:[%s268 + $0xf0] sm:$0xff] %v5906
        %5915 = vst [vmem:[%s268 + $0xf8] sm:$0xff] %v5907
        %p5916 = scmp.lt.s32.totalorder %s18, 1
        %s5917 = scalar_select %p5916, %s18, 1
        %s5918 = smul.addr %s5917, 32
        %s5919 = smul.addr %s5918, 8
        %s5920 = scalar_lea.vmem %s6, %s5919
        // Predicated region
        $region49: #{my_attention_self_forward.1} parent=43 // pred_check
          %p5921 = pneg %p167
        $region50: #{my_attention_self_forward.1} parent=43 // pred_check_branch
          %5923 = sbr.rel (%p5921) target = $region52
        $region51: #{my_attention_self_forward.1} parent=43 // pred_region
          _
        $region52: #{my_attention_self_forward.1} parent=43 // pred_fallthru
          _
      $region44: #{my_attention_self_forward.1} parent=5 // pred_fallthru
        _
      %p5924 = scmp.le.s32.totalorder 2, %s13
      // Predicated region
      $region53: #{my_attention_self_forward.1} parent=5 // pred_check
        %p5925 = pneg %p5924
      $region54: #{my_attention_self_forward.1} parent=5 // pred_check_branch
        %5927 = sbr.rel (%p5925) target = $region56
      $region55: #{my_attention_self_forward.1} parent=5 // pred_region
        %s5928 = ssub.s32 %s13, 2
        // Predicated region
        $region57: #{my_attention_self_forward.1} parent=55 // pred_check
          %p5929 = pneg %p173
        $region58: #{my_attention_self_forward.1} parent=55 // pred_check_branch
          %5931 = sbr.rel (%p5929) target = $region60
        $region59: #{my_attention_self_forward.1} parent=55 // pred_region
          %p5932 = scmp.lt.s32.totalorder %s19, 1
          %s5933 = scalar_select %p5932, %s19, 1
          %s5934 = smul.addr %s5933, 32
          %s5935 = smul.addr %s5934, 8
          %s5936 = scalar_lea.vmem %s6, %s5935
        $region60: #{my_attention_self_forward.1} parent=55 // pred_fallthru
          _
      $region56: #{my_attention_self_forward.1} parent=5 // pred_fallthru
        _
    $region6: #{my_attention_self_forward.1} parent=1 // loop_footer
      %s17 = sadd.s32 1, %s13
    $region7: #{my_attention_self_forward.1} parent=1 // loop_footer_branch
      %12 = sbr.rel target = $region3
    $region8: #{my_attention_self_forward.1} parent=1 // loop_exit
      _
    %5937 = vsyncpa [#allocation4], 1
    %s5938 = scalar_lea.sflag [#allocation4], 1
    %5939 = vsyncpa %s5938, 1

</llo_original>
